<compile_context>
chip_gen: v7x
topology: tpu7x:2x2x1
jax: 0.10.0
libtpu: 0.0.40
codegen_flags: <defaults>
</compile_context>

<pallas_src>
import functools

import jax
import jax.numpy as jnp
from jax.experimental import pallas as pl
from jax.experimental.pallas import tpu as pltpu

C = 16       # channels after every conv
NCLS = 10    # classes


# ----------------------------------------------------------------------------
# Host-side weight packing (tiny; runs once per call under jit).
# ----------------------------------------------------------------------------
def _conv_row_toeplitz(w, wi):
    """Pack a (3,3,Cin,Cout) HWIO conv weight into 3 per-ky row-Toeplitz matrices.

    Returns T of shape (3, wi*Cin, wo*Cout), wo = wi - 2, with
      T[ky, j_in*Cin + cin, j_out*Cout + cout] = w[ky, j_in - j_out, cin, cout]
    when 0 <= j_in - j_out <= 2, else 0.  Then for an activation slab
    A[(i,b), j_in*Cin+cin] = act[i+ky, j_in, cin] (per sample b),
      conv_out[(i,b), j_out*Cout+cout] = sum_ky (A_ky @ T[ky]).
    """
    kh, kw, cin, cout = w.shape
    wo = wi - 2
    j_in = jnp.arange(wi)[:, None]
    j_out = jnp.arange(wo)[None, :]
    kx = j_in - j_out                                      # (wi, wo)
    valid = (kx >= 0) & (kx < kw)
    t = w[:, jnp.clip(kx, 0, kw - 1)]                      # (3, wi, wo, cin, cout)
    t = jnp.where(valid[None, :, :, None, None], t, 0.0)
    t = jnp.transpose(t, (0, 1, 3, 2, 4))                  # (3, wi, cin, wo, cout)
    return t.reshape(3, wi * cin, wo * cout).astype(jnp.float32)


def _pool_w_select(wi, c):
    """0/1 selection matrices (wi*c, (wi//2)*c) for width max-pool (stride 2, floor)."""
    wo = wi // 2
    j = jnp.arange(wi)[:, None]
    jp = jnp.arange(wo)[None, :]
    eye = jnp.eye(c, dtype=jnp.float32)

    def expand(m):  # (wi, wo) -> (wi*c, wo*c), row (j, cin), col (jp, cout)
        return (m[:, None, :, None] * eye[None, :, None, :]).reshape(wi * c, wo * c)

    se = expand((j == 2 * jp).astype(jnp.float32))         # picks j = 0,2,4,...
    so = expand((j == 2 * jp + 1).astype(jnp.float32))     # picks j = 1,3,5,...
    return se, so


# ----------------------------------------------------------------------------
# In-kernel building blocks (whole-layer ops on (H, TB, W*C) values).
# ----------------------------------------------------------------------------
def _conv3x3_relu(act, t_ref):
    """act: (Hi, TB, Wi*Cin) value; t_ref: (3, Wi*Cin, Wo*Cout) ref.
    Returns (Ho, TB, Wo*Cout) = ReLU(VALID 3x3 cross-correlation)."""
    hi, tb, k = act.shape
    ho = hi - 2
    n = t_ref.shape[-1]
    acc = None
    for ky in range(3):  # 3 whole-layer MXU matmuls, summed
        xk = act[ky:ky + ho].reshape(ho * tb, k)           # tile-aligned collapse
        m = jnp.dot(xk, t_ref[ky], preferred_element_type=jnp.float32)
        acc = m if acc is None else acc + m
    return jnp.maximum(acc, 0.0).reshape(ho, tb, n)


def _maxpool2x2(y, se_ref, so_ref):
    """y: (Ho, TB, Wo*C) -> (Ho//2, TB, (Wo//2)*C); 2x2 stride-2 max pool, floor mode."""
    ho, tb, n = y.shape
    hp = ho // 2
    # H direction: exact elementwise max of adjacent rows (leading-dim reshape only).
    z = y[:2 * hp].reshape(hp, 2, tb, n)
    h = jnp.maximum(z[:, 0], z[:, 1]).reshape(hp * tb, n)
    # W direction: two whole-slab 0/1 selection matmuls (even/odd columns) + max.
    p = jnp.maximum(
        jnp.dot(h, se_ref[...], preferred_element_type=jnp.float32),
        jnp.dot(h, so_ref[...], preferred_element_type=jnp.float32))
    return p.reshape(hp, tb, -1)


def _net_kernel(x_ref, t1_ref, se1_ref, so1_ref, t2_ref, se2_ref, so2_ref,
                t3_ref, t4_ref, wf_ref, bf_ref, o_ref):
    """Whole network for one batch tile of TB samples."""
    x = x_ref[...]                                   # (28, TB, 28)   W in lanes
    y1 = _conv3x3_relu(x, t1_ref)                    # (26, TB, 26*16)
    p1 = _maxpool2x2(y1, se1_ref, so1_ref)           # (13, TB, 13*16)
    y2 = _conv3x3_relu(p1, t2_ref)                   # (11, TB, 11*16)
    p2 = _maxpool2x2(y2, se2_ref, so2_ref)           # ( 5, TB,  5*16)
    y3 = _conv3x3_relu(p2, t3_ref)                   # ( 3, TB,  3*16)
    y4 = _conv3x3_relu(y3, t4_ref)                   # ( 1, TB,    16)

    feat = y4[0]                                     # (TB, 16) == PyTorch flatten order
    h = jnp.dot(feat, wf_ref[...], preferred_element_type=jnp.float32) + bf_ref[...]
    h = jnp.maximum(h, 0.0)                          # Linear + ReLU
    m = jnp.max(h, axis=-1, keepdims=True)           # log_softmax
    s = h - m
    lse = jnp.log(jnp.sum(jnp.exp(s), axis=-1, keepdims=True))
    o_ref[...] = (s - lse).astype(o_ref.dtype)       # one full-block store per step


# ----------------------------------------------------------------------------
# Host-side wrapper.
# ----------------------------------------------------------------------------
def _round_up(n, m):
    return (n + m - 1) // m * m


@functools.partial(jax.jit, static_argnames=("tb",))
def model_forward(x_nchw, params, tb=None):
    B, cin, H, W = x_nchw.shape
    assert cin == 1 and H == 28 and W == 28, "fc1(16,10) implies 1x28x28 input"

    if tb is None:
        tb = min(32, _round_up(B, 8))                # batch tile; multiple of 8
    tb = max(8, _round_up(tb, 8))
    bp = _round_up(B, tb)

    # Layout plumbing (outside the kernel, tiny): (B,1,28,28) -> (28, Bp, 28)
    # so that batch sits in sublanes and W sits in lanes inside the kernel.
    x = x_nchw.reshape(B, H, W)
    if bp != B:
        x = jnp.pad(x, ((0, bp - B), (0, 0), (0, 0)))
    x_hbw = jnp.transpose(x, (1, 0, 2))              # (28, Bp, 28)

    # Row-Toeplitz conv weights and pooling selection matrices (VMEM-resident).
    t1 = _conv_row_toeplitz(params["w1"], 28)        # (3,  28, 416)
    se1, so1 = _pool_w_select(26, C)                 # (416, 208)
    t2 = _conv_row_toeplitz(params["w2"], 13)        # (3, 208, 176)
    se2, so2 = _pool_w_select(11, C)                 # (176,  80)
    t3 = _conv_row_toeplitz(params["w3"], 5)         # (3,  80,  48)
    t4 = _conv_row_toeplitz(params["w4"], 3)         # (3,  48,  16)
    wf = params["wf"].astype(jnp.float32)            # (16, 10)
    bf = params["bf"].reshape(1, NCLS).astype(jnp.float32)

    def full(a):  # whole-array, grid-invariant operand (stays resident in VMEM)
        return pl.BlockSpec(a.shape, lambda g, _nd=a.ndim: (0,) * _nd)

    out = pl.pallas_call(
        _net_kernel,
        out_shape=jax.ShapeDtypeStruct((bp, NCLS), jnp.float32),
        grid=(bp // tb,),
        in_specs=[
            pl.BlockSpec((28, tb, 28), lambda g: (0, g, 0)),   # batch tile of input
            full(t1), full(se1), full(so1),
            full(t2), full(se2), full(so2),
            full(t3), full(t4), full(wf), full(bf),
        ],
        out_specs=pl.BlockSpec((tb, NCLS), lambda g: (g, 0)),
        compiler_params=pltpu.CompilerParams(
            dimension_semantics=("parallel",)),
    )(x_hbw, t1, se1, so1, t2, se2, so2, t3, t4, wf, bf)
    return out[:B]


# ----------------------------------------------------------------------------
# Params + pure-XLA reference (correctness check only).
# ----------------------------------------------------------------------------
def init_params(key):
    ks = jax.random.split(key, 6)

    def conv_w(k, cin, cout):
        return jax.random.normal(k, (3, 3, cin, cout), jnp.float32) / jnp.sqrt(9.0 * cin)

    return dict(
        w1=conv_w(ks[0], 1, 16),
        w2=conv_w(ks[1], 16, 16),
        w3=conv_w(ks[2], 16, 16),
        w4=conv_w(ks[3], 16, 16),
        wf=jax.random.normal(ks[4], (16, 10), jnp.float32) / jnp.sqrt(16.0),
        bf=jax.random.normal(ks[5], (10,), jnp.float32) * 0.01,
    )


def reference_forward(x_nchw, params):
    x = jnp.transpose(x_nchw, (0, 2, 3, 1))

    def block(y, w, pool):
        y = jax.lax.conv_general_dilated(
            y, w, window_strides=(1, 1), padding="VALID",
            dimension_numbers=("NHWC", "HWIO", "NHWC"))
        y = jnp.maximum(y, 0.0)
        if pool:
            y = jax.lax.reduce_window(
                y, -jnp.inf, jax.lax.max,
                window_dimensions=(1, 2, 2, 1), window_strides=(1, 2, 2, 1),
                padding="VALID")
        return y

    x = block(x, params["w1"], True)
    x = block(x, params["w2"], True)
    x = block(x, params["w3"], False)
    x = block(x, params["w4"], False)
    x = x.reshape(x.shape[0], -1)
    h = jnp.maximum(x @ params["wf"] + params["bf"], 0.0)
    return jax.nn.log_softmax(h, axis=-1)


if __name__ == "__main__":
    key = jax.random.PRNGKey(0)
    kx, kp = jax.random.split(key)
    # Module implies 28x28 single-channel input (flatten yields exactly 16 features).
    x = jax.random.normal(kx, (16, 1, 28, 28), jnp.float32)
    params = init_params(kp)

    # tb=8 -> grid=(2,): exercises the batched multi-step grid (both v7x cores usable).
    out = jax.block_until_ready(model_forward(x, params, tb=8))
    ref = jax.block_until_ready(reference_forward(x, params))

    assert out.shape == (16, 10)
    assert bool(jnp.all(jnp.isfinite(out)))
    max_err = float(jnp.max(jnp.abs(out - ref)))
    assert max_err < 5e-2, f"mismatch vs XLA reference: {max_err}"
    print("KERNEL_OK")
</pallas_src>

<mosaic_0001>
module attributes {stable_mosaic.version = 11 : i64} {
  func.func @_net_kernel(%arg0: i32, %arg1: memref<28x8x28xf32, #tpu.memory_space<vmem>>, %arg2: memref<3x28x416xf32, #tpu.memory_space<vmem>>, %arg3: memref<416x208xf32, #tpu.memory_space<vmem>>, %arg4: memref<416x208xf32, #tpu.memory_space<vmem>>, %arg5: memref<3x208x176xf32, #tpu.memory_space<vmem>>, %arg6: memref<176x80xf32, #tpu.memory_space<vmem>>, %arg7: memref<176x80xf32, #tpu.memory_space<vmem>>, %arg8: memref<3x80x48xf32, #tpu.memory_space<vmem>>, %arg9: memref<3x48x16xf32, #tpu.memory_space<vmem>>, %arg10: memref<16x10xf32, #tpu.memory_space<vmem>>, %arg11: memref<1x10xf32, #tpu.memory_space<vmem>>, %arg12: memref<8x10xf32, #tpu.memory_space<vmem>>) attributes {dimension_semantics = [#tpu.dimension_semantics<parallel>], iteration_bounds = array<i64: 2>, scalar_prefetch = 0 : i64, scratch_operands = 0 : i64, tpu.core_type = #tpu.core_type<tc>, window_params = [{transform_indices = @transform_0, window_bounds = array<i64: 28, 8, 28>}, {pipeline_mode = #tpu.pipeline_mode<synchronous>, transform_indices = @transform_1, window_bounds = array<i64: 3, 28, 416>}, {pipeline_mode = #tpu.pipeline_mode<synchronous>, transform_indices = @transform_2, window_bounds = array<i64: 416, 208>}, {pipeline_mode = #tpu.pipeline_mode<synchronous>, transform_indices = @transform_3, window_bounds = array<i64: 416, 208>}, {pipeline_mode = #tpu.pipeline_mode<synchronous>, transform_indices = @transform_4, window_bounds = array<i64: 3, 208, 176>}, {pipeline_mode = #tpu.pipeline_mode<synchronous>, transform_indices = @transform_5, window_bounds = array<i64: 176, 80>}, {pipeline_mode = #tpu.pipeline_mode<synchronous>, transform_indices = @transform_6, window_bounds = array<i64: 176, 80>}, {pipeline_mode = #tpu.pipeline_mode<synchronous>, transform_indices = @transform_7, window_bounds = array<i64: 3, 80, 48>}, {pipeline_mode = #tpu.pipeline_mode<synchronous>, transform_indices = @transform_8, window_bounds = array<i64: 3, 48, 16>}, {pipeline_mode = #tpu.pipeline_mode<synchronous>, transform_indices = @transform_9, window_bounds = array<i64: 16, 10>}, {pipeline_mode = #tpu.pipeline_mode<synchronous>, transform_indices = @transform_10, window_bounds = array<i64: 1, 10>}, {transform_indices = @transform_11, window_bounds = array<i64: 8, 10>}]} {
    %c0 = arith.constant 0 : index
    %c0_0 = arith.constant 0 : index
    %c0_1 = arith.constant 0 : index
    %0 = vector.load %arg1[%c0, %c0_0, %c0_1] : memref<28x8x28xf32, #tpu.memory_space<vmem>>, vector<28x8x28xf32>
    %1 = vector.extract_strided_slice %0 {offsets = [0, 0, 0], sizes = [26, 8, 28], strides = [1, 1, 1]} : vector<28x8x28xf32> to vector<26x8x28xf32>
    %2 = vector.shape_cast %1 : vector<26x8x28xf32> to vector<208x28xf32>
    %c0_2 = arith.constant 0 : index
    %c0_3 = arith.constant 0 : index
    %c0_4 = arith.constant 0 : index
    %3 = vector.load %arg2[%c0_2, %c0_3, %c0_4] : memref<3x28x416xf32, #tpu.memory_space<vmem>>, vector<1x28x416xf32>
    %4 = vector.shape_cast %3 : vector<1x28x416xf32> to vector<28x416xf32>
    %cst = arith.constant dense<0.000000e+00> : vector<208x416xf32>
    %5 = tpu.matmul %2, %4, %cst {dimension_numbers = #tpu.dot_dimension_numbers<[1], [0], [0], [1], [0, 0, 1, 1], [], []>} : vector<208x28xf32>, vector<28x416xf32>, vector<208x416xf32> -> vector<208x416xf32>
    %6 = vector.extract_strided_slice %0 {offsets = [1, 0, 0], sizes = [26, 8, 28], strides = [1, 1, 1]} : vector<28x8x28xf32> to vector<26x8x28xf32>
    %7 = vector.shape_cast %6 : vector<26x8x28xf32> to vector<208x28xf32>
    %c1 = arith.constant 1 : index
    %c0_5 = arith.constant 0 : index
    %c0_6 = arith.constant 0 : index
    %8 = vector.load %arg2[%c1, %c0_5, %c0_6] : memref<3x28x416xf32, #tpu.memory_space<vmem>>, vector<1x28x416xf32>
    %9 = vector.shape_cast %8 : vector<1x28x416xf32> to vector<28x416xf32>
    %cst_7 = arith.constant dense<0.000000e+00> : vector<208x416xf32>
    %10 = tpu.matmul %7, %9, %cst_7 {dimension_numbers = #tpu.dot_dimension_numbers<[1], [0], [0], [1], [0, 0, 1, 1], [], []>} : vector<208x28xf32>, vector<28x416xf32>, vector<208x416xf32> -> vector<208x416xf32>
    %11 = arith.addf %5, %10 : vector<208x416xf32>
    %12 = vector.extract_strided_slice %0 {offsets = [2, 0, 0], sizes = [26, 8, 28], strides = [1, 1, 1]} : vector<28x8x28xf32> to vector<26x8x28xf32>
    %13 = vector.shape_cast %12 : vector<26x8x28xf32> to vector<208x28xf32>
    %c2 = arith.constant 2 : index
    %c0_8 = arith.constant 0 : index
    %c0_9 = arith.constant 0 : index
    %14 = vector.load %arg2[%c2, %c0_8, %c0_9] : memref<3x28x416xf32, #tpu.memory_space<vmem>>, vector<1x28x416xf32>
    %15 = vector.shape_cast %14 : vector<1x28x416xf32> to vector<28x416xf32>
    %cst_10 = arith.constant dense<0.000000e+00> : vector<208x416xf32>
    %16 = tpu.matmul %13, %15, %cst_10 {dimension_numbers = #tpu.dot_dimension_numbers<[1], [0], [0], [1], [0, 0, 1, 1], [], []>} : vector<208x28xf32>, vector<28x416xf32>, vector<208x416xf32> -> vector<208x416xf32>
    %17 = arith.addf %11, %16 : vector<208x416xf32>
    %cst_11 = arith.constant 0.000000e+00 : f32
    %18 = vector.broadcast %cst_11 : f32 to vector<208x416xf32>
    %19 = arith.maximumf %17, %18 : vector<208x416xf32>
    %20 = vector.shape_cast %19 : vector<208x416xf32> to vector<26x8x416xf32>
    %21 = vector.shape_cast %20 : vector<26x8x416xf32> to vector<13x2x8x416xf32>
    %22 = vector.extract_strided_slice %21 {offsets = [0, 0, 0, 0], sizes = [13, 1, 8, 416], strides = [1, 1, 1, 1]} : vector<13x2x8x416xf32> to vector<13x1x8x416xf32>
    %23 = vector.shape_cast %22 : vector<13x1x8x416xf32> to vector<13x8x416xf32>
    %24 = vector.extract_strided_slice %21 {offsets = [0, 1, 0, 0], sizes = [13, 1, 8, 416], strides = [1, 1, 1, 1]} : vector<13x2x8x416xf32> to vector<13x1x8x416xf32>
    %25 = vector.shape_cast %24 : vector<13x1x8x416xf32> to vector<13x8x416xf32>
    %26 = arith.maximumf %23, %25 : vector<13x8x416xf32>
    %27 = vector.shape_cast %26 : vector<13x8x416xf32> to vector<104x416xf32>
    %c0_12 = arith.constant 0 : index
    %c0_13 = arith.constant 0 : index
    %28 = vector.load %arg3[%c0_12, %c0_13] : memref<416x208xf32, #tpu.memory_space<vmem>>, vector<416x208xf32>
    %cst_14 = arith.constant dense<0.000000e+00> : vector<104x208xf32>
    %29 = tpu.matmul %27, %28, %cst_14 {dimension_numbers = #tpu.dot_dimension_numbers<[1], [0], [0], [1], [0, 0, 1, 1], [], []>} : vector<104x416xf32>, vector<416x208xf32>, vector<104x208xf32> -> vector<104x208xf32>
    %c0_15 = arith.constant 0 : index
    %c0_16 = arith.constant 0 : index
    %30 = vector.load %arg4[%c0_15, %c0_16] : memref<416x208xf32, #tpu.memory_space<vmem>>, vector<416x208xf32>
    %cst_17 = arith.constant dense<0.000000e+00> : vector<104x208xf32>
    %31 = tpu.matmul %27, %30, %cst_17 {dimension_numbers = #tpu.dot_dimension_numbers<[1], [0], [0], [1], [0, 0, 1, 1], [], []>} : vector<104x416xf32>, vector<416x208xf32>, vector<104x208xf32> -> vector<104x208xf32>
    %32 = arith.maximumf %29, %31 : vector<104x208xf32>
    %33 = vector.shape_cast %32 : vector<104x208xf32> to vector<13x8x208xf32>
    %34 = vector.extract_strided_slice %33 {offsets = [0, 0, 0], sizes = [11, 8, 208], strides = [1, 1, 1]} : vector<13x8x208xf32> to vector<11x8x208xf32>
    %35 = vector.shape_cast %34 : vector<11x8x208xf32> to vector<88x208xf32>
    %c0_18 = arith.constant 0 : index
    %c0_19 = arith.constant 0 : index
    %c0_20 = arith.constant 0 : index
    %36 = vector.load %arg5[%c0_18, %c0_19, %c0_20] : memref<3x208x176xf32, #tpu.memory_space<vmem>>, vector<1x208x176xf32>
    %37 = vector.shape_cast %36 : vector<1x208x176xf32> to vector<208x176xf32>
    %cst_21 = arith.constant dense<0.000000e+00> : vector<88x176xf32>
    %38 = tpu.matmul %35, %37, %cst_21 {dimension_numbers = #tpu.dot_dimension_numbers<[1], [0], [0], [1], [0, 0, 1, 1], [], []>} : vector<88x208xf32>, vector<208x176xf32>, vector<88x176xf32> -> vector<88x176xf32>
    %39 = vector.extract_strided_slice %33 {offsets = [1, 0, 0], sizes = [11, 8, 208], strides = [1, 1, 1]} : vector<13x8x208xf32> to vector<11x8x208xf32>
    %40 = vector.shape_cast %39 : vector<11x8x208xf32> to vector<88x208xf32>
    %c1_22 = arith.constant 1 : index
    %c0_23 = arith.constant 0 : index
    %c0_24 = arith.constant 0 : index
    %41 = vector.load %arg5[%c1_22, %c0_23, %c0_24] : memref<3x208x176xf32, #tpu.memory_space<vmem>>, vector<1x208x176xf32>
    %42 = vector.shape_cast %41 : vector<1x208x176xf32> to vector<208x176xf32>
    %cst_25 = arith.constant dense<0.000000e+00> : vector<88x176xf32>
    %43 = tpu.matmul %40, %42, %cst_25 {dimension_numbers = #tpu.dot_dimension_numbers<[1], [0], [0], [1], [0, 0, 1, 1], [], []>} : vector<88x208xf32>, vector<208x176xf32>, vector<88x176xf32> -> vector<88x176xf32>
    %44 = arith.addf %38, %43 : vector<88x176xf32>
    %45 = vector.extract_strided_slice %33 {offsets = [2, 0, 0], sizes = [11, 8, 208], strides = [1, 1, 1]} : vector<13x8x208xf32> to vector<11x8x208xf32>
    %46 = vector.shape_cast %45 : vector<11x8x208xf32> to vector<88x208xf32>
    %c2_26 = arith.constant 2 : index
    %c0_27 = arith.constant 0 : index
    %c0_28 = arith.constant 0 : index
    %47 = vector.load %arg5[%c2_26, %c0_27, %c0_28] : memref<3x208x176xf32, #tpu.memory_space<vmem>>, vector<1x208x176xf32>
    %48 = vector.shape_cast %47 : vector<1x208x176xf32> to vector<208x176xf32>
    %cst_29 = arith.constant dense<0.000000e+00> : vector<88x176xf32>
    %49 = tpu.matmul %46, %48, %cst_29 {dimension_numbers = #tpu.dot_dimension_numbers<[1], [0], [0], [1], [0, 0, 1, 1], [], []>} : vector<88x208xf32>, vector<208x176xf32>, vector<88x176xf32> -> vector<88x176xf32>
    %50 = arith.addf %44, %49 : vector<88x176xf32>
    %cst_30 = arith.constant 0.000000e+00 : f32
    %51 = vector.broadcast %cst_30 : f32 to vector<88x176xf32>
    %52 = arith.maximumf %50, %51 : vector<88x176xf32>
    %53 = vector.shape_cast %52 : vector<88x176xf32> to vector<11x8x176xf32>
    %54 = vector.extract_strided_slice %53 {offsets = [0, 0, 0], sizes = [10, 8, 176], strides = [1, 1, 1]} : vector<11x8x176xf32> to vector<10x8x176xf32>
    %55 = vector.shape_cast %54 : vector<10x8x176xf32> to vector<5x2x8x176xf32>
    %56 = vector.extract_strided_slice %55 {offsets = [0, 0, 0, 0], sizes = [5, 1, 8, 176], strides = [1, 1, 1, 1]} : vector<5x2x8x176xf32> to vector<5x1x8x176xf32>
    %57 = vector.shape_cast %56 : vector<5x1x8x176xf32> to vector<5x8x176xf32>
    %58 = vector.extract_strided_slice %55 {offsets = [0, 1, 0, 0], sizes = [5, 1, 8, 176], strides = [1, 1, 1, 1]} : vector<5x2x8x176xf32> to vector<5x1x8x176xf32>
    %59 = vector.shape_cast %58 : vector<5x1x8x176xf32> to vector<5x8x176xf32>
    %60 = arith.maximumf %57, %59 : vector<5x8x176xf32>
    %61 = vector.shape_cast %60 : vector<5x8x176xf32> to vector<40x176xf32>
    %c0_31 = arith.constant 0 : index
    %c0_32 = arith.constant 0 : index
    %62 = vector.load %arg6[%c0_31, %c0_32] : memref<176x80xf32, #tpu.memory_space<vmem>>, vector<176x80xf32>
    %cst_33 = arith.constant dense<0.000000e+00> : vector<40x80xf32>
    %63 = tpu.matmul %61, %62, %cst_33 {dimension_numbers = #tpu.dot_dimension_numbers<[1], [0], [0], [1], [0, 0, 1, 1], [], []>} : vector<40x176xf32>, vector<176x80xf32>, vector<40x80xf32> -> vector<40x80xf32>
    %c0_34 = arith.constant 0 : index
    %c0_35 = arith.constant 0 : index
    %64 = vector.load %arg7[%c0_34, %c0_35] : memref<176x80xf32, #tpu.memory_space<vmem>>, vector<176x80xf32>
    %cst_36 = arith.constant dense<0.000000e+00> : vector<40x80xf32>
    %65 = tpu.matmul %61, %64, %cst_36 {dimension_numbers = #tpu.dot_dimension_numbers<[1], [0], [0], [1], [0, 0, 1, 1], [], []>} : vector<40x176xf32>, vector<176x80xf32>, vector<40x80xf32> -> vector<40x80xf32>
    %66 = arith.maximumf %63, %65 : vector<40x80xf32>
    %67 = vector.shape_cast %66 : vector<40x80xf32> to vector<5x8x80xf32>
    %68 = vector.extract_strided_slice %67 {offsets = [0, 0, 0], sizes = [3, 8, 80], strides = [1, 1, 1]} : vector<5x8x80xf32> to vector<3x8x80xf32>
    %69 = vector.shape_cast %68 : vector<3x8x80xf32> to vector<24x80xf32>
    %c0_37 = arith.constant 0 : index
    %c0_38 = arith.constant 0 : index
    %c0_39 = arith.constant 0 : index
    %70 = vector.load %arg8[%c0_37, %c0_38, %c0_39] : memref<3x80x48xf32, #tpu.memory_space<vmem>>, vector<1x80x48xf32>
    %71 = vector.shape_cast %70 : vector<1x80x48xf32> to vector<80x48xf32>
    %cst_40 = arith.constant dense<0.000000e+00> : vector<24x48xf32>
    %72 = tpu.matmul %69, %71, %cst_40 {dimension_numbers = #tpu.dot_dimension_numbers<[1], [0], [0], [1], [0, 0, 1, 1], [], []>} : vector<24x80xf32>, vector<80x48xf32>, vector<24x48xf32> -> vector<24x48xf32>
    %73 = vector.extract_strided_slice %67 {offsets = [1, 0, 0], sizes = [3, 8, 80], strides = [1, 1, 1]} : vector<5x8x80xf32> to vector<3x8x80xf32>
    %74 = vector.shape_cast %73 : vector<3x8x80xf32> to vector<24x80xf32>
    %c1_41 = arith.constant 1 : index
    %c0_42 = arith.constant 0 : index
    %c0_43 = arith.constant 0 : index
    %75 = vector.load %arg8[%c1_41, %c0_42, %c0_43] : memref<3x80x48xf32, #tpu.memory_space<vmem>>, vector<1x80x48xf32>
    %76 = vector.shape_cast %75 : vector<1x80x48xf32> to vector<80x48xf32>
    %cst_44 = arith.constant dense<0.000000e+00> : vector<24x48xf32>
    %77 = tpu.matmul %74, %76, %cst_44 {dimension_numbers = #tpu.dot_dimension_numbers<[1], [0], [0], [1], [0, 0, 1, 1], [], []>} : vector<24x80xf32>, vector<80x48xf32>, vector<24x48xf32> -> vector<24x48xf32>
    %78 = arith.addf %72, %77 : vector<24x48xf32>
    %79 = vector.extract_strided_slice %67 {offsets = [2, 0, 0], sizes = [3, 8, 80], strides = [1, 1, 1]} : vector<5x8x80xf32> to vector<3x8x80xf32>
    %80 = vector.shape_cast %79 : vector<3x8x80xf32> to vector<24x80xf32>
    %c2_45 = arith.constant 2 : index
    %c0_46 = arith.constant 0 : index
    %c0_47 = arith.constant 0 : index
    %81 = vector.load %arg8[%c2_45, %c0_46, %c0_47] : memref<3x80x48xf32, #tpu.memory_space<vmem>>, vector<1x80x48xf32>
    %82 = vector.shape_cast %81 : vector<1x80x48xf32> to vector<80x48xf32>
    %cst_48 = arith.constant dense<0.000000e+00> : vector<24x48xf32>
    %83 = tpu.matmul %80, %82, %cst_48 {dimension_numbers = #tpu.dot_dimension_numbers<[1], [0], [0], [1], [0, 0, 1, 1], [], []>} : vector<24x80xf32>, vector<80x48xf32>, vector<24x48xf32> -> vector<24x48xf32>
    %84 = arith.addf %78, %83 : vector<24x48xf32>
    %cst_49 = arith.constant 0.000000e+00 : f32
    %85 = vector.broadcast %cst_49 : f32 to vector<24x48xf32>
    %86 = arith.maximumf %84, %85 : vector<24x48xf32>
    %87 = vector.shape_cast %86 : vector<24x48xf32> to vector<3x8x48xf32>
    %88 = vector.extract_strided_slice %87 {offsets = [0, 0, 0], sizes = [1, 8, 48], strides = [1, 1, 1]} : vector<3x8x48xf32> to vector<1x8x48xf32>
    %89 = vector.shape_cast %88 : vector<1x8x48xf32> to vector<8x48xf32>
    %c0_50 = arith.constant 0 : index
    %c0_51 = arith.constant 0 : index
    %c0_52 = arith.constant 0 : index
    %90 = vector.load %arg9[%c0_50, %c0_51, %c0_52] : memref<3x48x16xf32, #tpu.memory_space<vmem>>, vector<1x48x16xf32>
    %91 = vector.shape_cast %90 : vector<1x48x16xf32> to vector<48x16xf32>
    %cst_53 = arith.constant dense<0.000000e+00> : vector<8x16xf32>
    %92 = tpu.matmul %89, %91, %cst_53 {dimension_numbers = #tpu.dot_dimension_numbers<[1], [0], [0], [1], [0, 0, 1, 1], [], []>} : vector<8x48xf32>, vector<48x16xf32>, vector<8x16xf32> -> vector<8x16xf32>
    %93 = vector.extract_strided_slice %87 {offsets = [1, 0, 0], sizes = [1, 8, 48], strides = [1, 1, 1]} : vector<3x8x48xf32> to vector<1x8x48xf32>
    %94 = vector.shape_cast %93 : vector<1x8x48xf32> to vector<8x48xf32>
    %c1_54 = arith.constant 1 : index
    %c0_55 = arith.constant 0 : index
    %c0_56 = arith.constant 0 : index
    %95 = vector.load %arg9[%c1_54, %c0_55, %c0_56] : memref<3x48x16xf32, #tpu.memory_space<vmem>>, vector<1x48x16xf32>
    %96 = vector.shape_cast %95 : vector<1x48x16xf32> to vector<48x16xf32>
    %cst_57 = arith.constant dense<0.000000e+00> : vector<8x16xf32>
    %97 = tpu.matmul %94, %96, %cst_57 {dimension_numbers = #tpu.dot_dimension_numbers<[1], [0], [0], [1], [0, 0, 1, 1], [], []>} : vector<8x48xf32>, vector<48x16xf32>, vector<8x16xf32> -> vector<8x16xf32>
    %98 = arith.addf %92, %97 : vector<8x16xf32>
    %99 = vector.extract_strided_slice %87 {offsets = [2, 0, 0], sizes = [1, 8, 48], strides = [1, 1, 1]} : vector<3x8x48xf32> to vector<1x8x48xf32>
    %100 = vector.shape_cast %99 : vector<1x8x48xf32> to vector<8x48xf32>
    %c2_58 = arith.constant 2 : index
    %c0_59 = arith.constant 0 : index
    %c0_60 = arith.constant 0 : index
    %101 = vector.load %arg9[%c2_58, %c0_59, %c0_60] : memref<3x48x16xf32, #tpu.memory_space<vmem>>, vector<1x48x16xf32>
    %102 = vector.shape_cast %101 : vector<1x48x16xf32> to vector<48x16xf32>
    %cst_61 = arith.constant dense<0.000000e+00> : vector<8x16xf32>
    %103 = tpu.matmul %100, %102, %cst_61 {dimension_numbers = #tpu.dot_dimension_numbers<[1], [0], [0], [1], [0, 0, 1, 1], [], []>} : vector<8x48xf32>, vector<48x16xf32>, vector<8x16xf32> -> vector<8x16xf32>
    %104 = arith.addf %98, %103 : vector<8x16xf32>
    %cst_62 = arith.constant 0.000000e+00 : f32
    %105 = vector.broadcast %cst_62 : f32 to vector<8x16xf32>
    %106 = arith.maximumf %104, %105 : vector<8x16xf32>
    %107 = vector.shape_cast %106 : vector<8x16xf32> to vector<1x8x16xf32>
    %108 = vector.shape_cast %107 : vector<1x8x16xf32> to vector<8x16xf32>
    %c0_63 = arith.constant 0 : index
    %c0_64 = arith.constant 0 : index
    %109 = vector.load %arg10[%c0_63, %c0_64] : memref<16x10xf32, #tpu.memory_space<vmem>>, vector<16x10xf32>
    %cst_65 = arith.constant dense<0.000000e+00> : vector<8x10xf32>
    %110 = tpu.matmul %108, %109, %cst_65 {dimension_numbers = #tpu.dot_dimension_numbers<[1], [0], [0], [1], [0, 0, 1, 1], [], []>} : vector<8x16xf32>, vector<16x10xf32>, vector<8x10xf32> -> vector<8x10xf32>
    %c0_66 = arith.constant 0 : index
    %c0_67 = arith.constant 0 : index
    %111 = vector.load %arg11[%c0_66, %c0_67] : memref<1x10xf32, #tpu.memory_space<vmem>>, vector<1x10xf32>
    %112 = vector.broadcast %111 : vector<1x10xf32> to vector<8x10xf32>
    %113 = arith.addf %110, %112 : vector<8x10xf32>
    %cst_68 = arith.constant 0.000000e+00 : f32
    %114 = vector.broadcast %cst_68 : f32 to vector<8x10xf32>
    %115 = arith.maximumf %113, %114 : vector<8x10xf32>
    %cst_69 = arith.constant dense<0xFF800000> : vector<8xf32>
    %116 = vector.multi_reduction <maximumf>, %115, %cst_69 [1] : vector<8x10xf32> to vector<8xf32>
    %117 = vector.shape_cast %116 : vector<8xf32> to vector<8x1xf32>
    %118 = vector.broadcast %117 : vector<8x1xf32> to vector<8x10xf32>
    %119 = arith.subf %115, %118 : vector<8x10xf32>
    %120 = math.exp %119 : vector<8x10xf32>
    %cst_70 = arith.constant dense<0.000000e+00> : vector<8xf32>
    %121 = vector.multi_reduction <add>, %120, %cst_70 [1] : vector<8x10xf32> to vector<8xf32>
    %122 = vector.shape_cast %121 : vector<8xf32> to vector<8x1xf32>
    %123 = math.log %122 : vector<8x1xf32>
    %124 = vector.broadcast %123 : vector<8x1xf32> to vector<8x10xf32>
    %125 = arith.subf %119, %124 : vector<8x10xf32>
    %c0_71 = arith.constant 0 : index
    %c0_72 = arith.constant 0 : index
    %126 = vector.load %arg12[%c0_71, %c0_72] : memref<8x10xf32, #tpu.memory_space<vmem>>, vector<8x10xf32>
    tpu.vector_store %arg12[%c0_71, %c0_72], %125 {strides = array<i32>} : memref<8x10xf32, #tpu.memory_space<vmem>>, vector<8x10xf32>,
    return
  }
  func.func @transform_0(%arg0: i32) -> (i32, i32, i32) {
    %c0_i32 = arith.constant 0 : i32
    %c0_i32_0 = arith.constant 0 : i32
    %c0_i32_1 = arith.constant 0 : i32
    return %c0_i32, %arg0, %c0_i32_0 : i32, i32, i32
  }
  func.func @transform_1(%arg0: i32) -> (i32, i32, i32) {
    %c0_i32 = arith.constant 0 : i32
    %c0_i32_0 = arith.constant 0 : i32
    %c0_i32_1 = arith.constant 0 : i32
    %c0_i32_2 = arith.constant 0 : i32
    return %c0_i32, %c0_i32_0, %c0_i32_1 : i32, i32, i32
  }
  func.func @transform_2(%arg0: i32) -> (i32, i32) {
    %c0_i32 = arith.constant 0 : i32
    %c0_i32_0 = arith.constant 0 : i32
    %c0_i32_1 = arith.constant 0 : i32
    return %c0_i32, %c0_i32_0 : i32, i32
  }
  func.func @transform_3(%arg0: i32) -> (i32, i32) {
    %c0_i32 = arith.constant 0 : i32
    %c0_i32_0 = arith.constant 0 : i32
    %c0_i32_1 = arith.constant 0 : i32
    return %c0_i32, %c0_i32_0 : i32, i32
  }
  func.func @transform_4(%arg0: i32) -> (i32, i32, i32) {
    %c0_i32 = arith.constant 0 : i32
    %c0_i32_0 = arith.constant 0 : i32
    %c0_i32_1 = arith.constant 0 : i32
    %c0_i32_2 = arith.constant 0 : i32
    return %c0_i32, %c0_i32_0, %c0_i32_1 : i32, i32, i32
  }
  func.func @transform_5(%arg0: i32) -> (i32, i32) {
    %c0_i32 = arith.constant 0 : i32
    %c0_i32_0 = arith.constant 0 : i32
    %c0_i32_1 = arith.constant 0 : i32
    return %c0_i32, %c0_i32_0 : i32, i32
  }
  func.func @transform_6(%arg0: i32) -> (i32, i32) {
    %c0_i32 = arith.constant 0 : i32
    %c0_i32_0 = arith.constant 0 : i32
    %c0_i32_1 = arith.constant 0 : i32
    return %c0_i32, %c0_i32_0 : i32, i32
  }
  func.func @transform_7(%arg0: i32) -> (i32, i32, i32) {
    %c0_i32 = arith.constant 0 : i32
    %c0_i32_0 = arith.constant 0 : i32
    %c0_i32_1 = arith.constant 0 : i32
    %c0_i32_2 = arith.constant 0 : i32
    return %c0_i32, %c0_i32_0, %c0_i32_1 : i32, i32, i32
  }
  func.func @transform_8(%arg0: i32) -> (i32, i32, i32) {
    %c0_i32 = arith.constant 0 : i32
    %c0_i32_0 = arith.constant 0 : i32
    %c0_i32_1 = arith.constant 0 : i32
    %c0_i32_2 = arith.constant 0 : i32
    return %c0_i32, %c0_i32_0, %c0_i32_1 : i32, i32, i32
  }
  func.func @transform_9(%arg0: i32) -> (i32, i32) {
    %c0_i32 = arith.constant 0 : i32
    %c0_i32_0 = arith.constant 0 : i32
    %c0_i32_1 = arith.constant 0 : i32
    return %c0_i32, %c0_i32_0 : i32, i32
  }
  func.func @transform_10(%arg0: i32) -> (i32, i32) {
    %c0_i32 = arith.constant 0 : i32
    %c0_i32_0 = arith.constant 0 : i32
    %c0_i32_1 = arith.constant 0 : i32
    return %c0_i32, %c0_i32_0 : i32, i32
  }
  func.func @transform_11(%arg0: i32) -> (i32, i32) {
    %c0_i32 = arith.constant 0 : i32
    %c0_i32_0 = arith.constant 0 : i32
    return %arg0, %c0_i32 : i32, i32
  }
}

</mosaic_0001>

<llo_original>
// kernel: model_forward.1
$region0: #{model_forward.1}
  #allocation0 [shape = 'u32[]', space=smem, size = 0x4, offset = 0x4, fixed_abs, tag = 'smem constant byte address 0x4 - core index']
  #allocation1 [shape = 'u32[144,128]{1,0:T(1,128)}', space=vmem, size = 0x12000, scoped, tag = 'internal scratch']
  %s0 = inlined_call_operand.vmem [shape: f32[28,16,28], index: 0, kind: input, shape index: {}]
  %s1 = inlined_call_operand.vmem [shape: f32[3,28,416], index: 1, kind: input, shape index: {}]
  %s2 = inlined_call_operand.vmem [shape: f32[416,208], index: 2, kind: input, shape index: {}]
  %s3 = inlined_call_operand.vmem [shape: f32[416,208], index: 3, kind: input, shape index: {}]
  %s4 = inlined_call_operand.vmem [shape: f32[3,208,176], index: 4, kind: input, shape index: {}]
  %s5 = inlined_call_operand.vmem [shape: f32[176,80], index: 5, kind: input, shape index: {}]
  %s6 = inlined_call_operand.vmem [shape: f32[176,80], index: 6, kind: input, shape index: {}]
  %s7 = inlined_call_operand.vmem [shape: f32[3,80,48], index: 7, kind: input, shape index: {}]
  %s8 = inlined_call_operand.vmem [shape: f32[3,48,16], index: 8, kind: input, shape index: {}]
  %s9 = inlined_call_operand.vmem [shape: f32[16,10], index: 9, kind: input, shape index: {}]
  %s10 = inlined_call_operand.vmem [shape: f32[1,10], index: 10, kind: input, shape index: {}]
  %s11 = inlined_call_operand.hbm [shape: f32[16,10], index: 11, kind: output, shape index: {}]
  %s12 = sld [smem:[#allocation0]]
  $region115: #{model_forward.1} parent=0
    _
  %s14 = ssub.s32 1, %s12
  %s15 = scalar_select 0, %s14, %s12
  $region1: #{model_forward.1} parent=0
    #allocation2 [shape = 'u8[229376]{0}', space=vmem, size = 0x38000, scoped, tag = 'input window, operand 0']
    #allocation3 [shape = 'u8[8192]{0}', space=vmem, size = 0x2000, scoped, tag = 'output window, operand 0']
    #allocation4 [shape = 's32[2]{0}', space=sflag, size = 0x8, scoped, tag = 'scoped memory for model_forward.1']
    %16 = vsyncpa [#allocation4], 0
    %s17 = scalar_lea.sflag [#allocation4], 1
    %18 = vsyncpa %s17, 0
    loop: start=0, step=1, limit=4
    $region2: #{model_forward.1} parent=1 // loop_pre_header
      _
    $region3: #{model_forward.1} parent=1 // loop_header
      %s20 = sphi 0, %s24
      %p21 = scmp.ge.s32.totalorder %s20, 4
      %s30 = sphi 0, %s32
      %s33 = sphi 0, %s30
      %s34 = sphi 0, %s33
      %s50 = sphi 0, %s34
      %s54 = sphi 0, %s54
      %s56 = sphi 0, %s54
      %s57 = sphi 0, %s56
      %s71 = sphi 0, %s57
      %s75 = sphi 0, %s75
      %s77 = sphi 0, %s75
      %s78 = sphi 0, %s77
      %s92 = sphi 0, %s78
      %s96 = sphi 0, %s96
      %s98 = sphi 0, %s96
      %s99 = sphi 0, %s98
      %s113 = sphi 0, %s99
      %s117 = sphi 0, %s117
      %s119 = sphi 0, %s117
      %s120 = sphi 0, %s119
      %s134 = sphi 0, %s120
      %s138 = sphi 0, %s138
      %s140 = sphi 0, %s138
      %s141 = sphi 0, %s140
      %s155 = sphi 0, %s141
      %s159 = sphi 0, %s159
      %s161 = sphi 0, %s159
      %s162 = sphi 0, %s161
      %s176 = sphi 0, %s162
      %s180 = sphi 0, %s180
      %s182 = sphi 0, %s180
      %s183 = sphi 0, %s182
      %s197 = sphi 0, %s183
      %s201 = sphi 0, %s201
      %s203 = sphi 0, %s201
      %s204 = sphi 0, %s203
      %s218 = sphi 0, %s204
      %s222 = sphi 0, %s222
      %s224 = sphi 0, %s222
      %s225 = sphi 0, %s224
      %s239 = sphi 0, %s225
      %s243 = sphi 0, %s243
      %s245 = sphi 0, %s243
      %s246 = sphi 0, %s245
      %s260 = sphi 0, %s246
      %s266 = sphi 0, %s268
      %s269 = sphi 0, %s266
      %s270 = sphi 0, %s269
      %s286 = sphi 0, %s270
    $region4: #{model_forward.1} parent=1 // loop_header_branch
      %23 = sbr.rel (%p21) target = $region8
    $region5: #{model_forward.1} parent=1 // loop_body
      %s25 = ssub.s32 %s20, 1
      %s26 = ssub.s32 %s20, 2
      %s27 = sadd.s32 %s20, 1
      %s28 = ssub.s32 %s20, %s27
      %p29 = scmp.eq.s32.totalorder %s28, 0
      %s31 = sadd.s32 %s30, 1
      %s32 = scalar_select %p29, %s30, %s31
      %p35 = pneg %p29
      %p36 = scmp.eq.s32.totalorder %s20, 1
      %p37 = por %p35, %p36
      %p38 = scmp.ne.s32.totalorder %s30, %s33
      %p39 = scmp.eq.s32.totalorder %s20, 0
      %p40 = por %p38, %p39
      %p41 = scmp.ne.s32.totalorder %s30, %s33
      %p42 = scmp.eq.s32.totalorder %s25, 1
      %p43 = por %p41, %p42
      %p44 = scmp.ne.s32.totalorder %s33, %s34
      %p45 = scmp.eq.s32.totalorder %s25, 0
      %p46 = por %p44, %p45
      %p47 = scmp.ne.s32.totalorder %s33, %s34
      %p48 = scmp.eq.s32.totalorder %s26, 1
      %p49 = por %p47, %p48
      %p51 = scmp.ne.s32.totalorder %s34, %s50
      %p52 = scmp.eq.s32.totalorder %s26, 0
      %p53 = por %p51, %p52
      %s55 = sadd.s32 %s54, 1
      %p58 = scmp.eq.s32.totalorder %s20, 1
      %p59 = scmp.ne.s32.totalorder %s54, %s56
      %p60 = scmp.eq.s32.totalorder %s20, 0
      %p61 = por %p59, %p60
      %p62 = scmp.ne.s32.totalorder %s54, %s56
      %p63 = scmp.eq.s32.totalorder %s25, 1
      %p64 = por %p62, %p63
      %p65 = scmp.ne.s32.totalorder %s56, %s57
      %p66 = scmp.eq.s32.totalorder %s25, 0
      %p67 = por %p65, %p66
      %p68 = scmp.ne.s32.totalorder %s56, %s57
      %p69 = scmp.eq.s32.totalorder %s26, 1
      %p70 = por %p68, %p69
      %p72 = scmp.ne.s32.totalorder %s57, %s71
      %p73 = scmp.eq.s32.totalorder %s26, 0
      %p74 = por %p72, %p73
      %s76 = sadd.s32 %s75, 1
      %p79 = scmp.eq.s32.totalorder %s20, 1
      %p80 = scmp.ne.s32.totalorder %s75, %s77
      %p81 = scmp.eq.s32.totalorder %s20, 0
      %p82 = por %p80, %p81
      %p83 = scmp.ne.s32.totalorder %s75, %s77
      %p84 = scmp.eq.s32.totalorder %s25, 1
      %p85 = por %p83, %p84
      %p86 = scmp.ne.s32.totalorder %s77, %s78
      %p87 = scmp.eq.s32.totalorder %s25, 0
      %p88 = por %p86, %p87
      %p89 = scmp.ne.s32.totalorder %s77, %s78
      %p90 = scmp.eq.s32.totalorder %s26, 1
      %p91 = por %p89, %p90
      %p93 = scmp.ne.s32.totalorder %s78, %s92
      %p94 = scmp.eq.s32.totalorder %s26, 0
      %p95 = por %p93, %p94
      %s97 = sadd.s32 %s96, 1
      %p100 = scmp.eq.s32.totalorder %s20, 1
      %p101 = scmp.ne.s32.totalorder %s96, %s98
      %p102 = scmp.eq.s32.totalorder %s20, 0
      %p103 = por %p101, %p102
      %p104 = scmp.ne.s32.totalorder %s96, %s98
      %p105 = scmp.eq.s32.totalorder %s25, 1
      %p106 = por %p104, %p105
      %p107 = scmp.ne.s32.totalorder %s98, %s99
      %p108 = scmp.eq.s32.totalorder %s25, 0
      %p109 = por %p107, %p108
      %p110 = scmp.ne.s32.totalorder %s98, %s99
      %p111 = scmp.eq.s32.totalorder %s26, 1
      %p112 = por %p110, %p111
      %p114 = scmp.ne.s32.totalorder %s99, %s113
      %p115 = scmp.eq.s32.totalorder %s26, 0
      %p116 = por %p114, %p115
      %s118 = sadd.s32 %s117, 1
      %p121 = scmp.eq.s32.totalorder %s20, 1
      %p122 = scmp.ne.s32.totalorder %s117, %s119
      %p123 = scmp.eq.s32.totalorder %s20, 0
      %p124 = por %p122, %p123
      %p125 = scmp.ne.s32.totalorder %s117, %s119
      %p126 = scmp.eq.s32.totalorder %s25, 1
      %p127 = por %p125, %p126
      %p128 = scmp.ne.s32.totalorder %s119, %s120
      %p129 = scmp.eq.s32.totalorder %s25, 0
      %p130 = por %p128, %p129
      %p131 = scmp.ne.s32.totalorder %s119, %s120
      %p132 = scmp.eq.s32.totalorder %s26, 1
      %p133 = por %p131, %p132
      %p135 = scmp.ne.s32.totalorder %s120, %s134
      %p136 = scmp.eq.s32.totalorder %s26, 0
      %p137 = por %p135, %p136
      %s139 = sadd.s32 %s138, 1
      %p142 = scmp.eq.s32.totalorder %s20, 1
      %p143 = scmp.ne.s32.totalorder %s138, %s140
      %p144 = scmp.eq.s32.totalorder %s20, 0
      %p145 = por %p143, %p144
      %p146 = scmp.ne.s32.totalorder %s138, %s140
      %p147 = scmp.eq.s32.totalorder %s25, 1
      %p148 = por %p146, %p147
      %p149 = scmp.ne.s32.totalorder %s140, %s141
      %p150 = scmp.eq.s32.totalorder %s25, 0
      %p151 = por %p149, %p150
      %p152 = scmp.ne.s32.totalorder %s140, %s141
      %p153 = scmp.eq.s32.totalorder %s26, 1
      %p154 = por %p152, %p153
      %p156 = scmp.ne.s32.totalorder %s141, %s155
      %p157 = scmp.eq.s32.totalorder %s26, 0
      %p158 = por %p156, %p157
      %s160 = sadd.s32 %s159, 1
      %p163 = scmp.eq.s32.totalorder %s20, 1
      %p164 = scmp.ne.s32.totalorder %s159, %s161
      %p165 = scmp.eq.s32.totalorder %s20, 0
      %p166 = por %p164, %p165
      %p167 = scmp.ne.s32.totalorder %s159, %s161
      %p168 = scmp.eq.s32.totalorder %s25, 1
      %p169 = por %p167, %p168
      %p170 = scmp.ne.s32.totalorder %s161, %s162
      %p171 = scmp.eq.s32.totalorder %s25, 0
      %p172 = por %p170, %p171
      %p173 = scmp.ne.s32.totalorder %s161, %s162
      %p174 = scmp.eq.s32.totalorder %s26, 1
      %p175 = por %p173, %p174
      %p177 = scmp.ne.s32.totalorder %s162, %s176
      %p178 = scmp.eq.s32.totalorder %s26, 0
      %p179 = por %p177, %p178
      %s181 = sadd.s32 %s180, 1
      %p184 = scmp.eq.s32.totalorder %s20, 1
      %p185 = scmp.ne.s32.totalorder %s180, %s182
      %p186 = scmp.eq.s32.totalorder %s20, 0
      %p187 = por %p185, %p186
      %p188 = scmp.ne.s32.totalorder %s180, %s182
      %p189 = scmp.eq.s32.totalorder %s25, 1
      %p190 = por %p188, %p189
      %p191 = scmp.ne.s32.totalorder %s182, %s183
      %p192 = scmp.eq.s32.totalorder %s25, 0
      %p193 = por %p191, %p192
      %p194 = scmp.ne.s32.totalorder %s182, %s183
      %p195 = scmp.eq.s32.totalorder %s26, 1
      %p196 = por %p194, %p195
      %p198 = scmp.ne.s32.totalorder %s183, %s197
      %p199 = scmp.eq.s32.totalorder %s26, 0
      %p200 = por %p198, %p199
      %s202 = sadd.s32 %s201, 1
      %p205 = scmp.eq.s32.totalorder %s20, 1
      %p206 = scmp.ne.s32.totalorder %s201, %s203
      %p207 = scmp.eq.s32.totalorder %s20, 0
      %p208 = por %p206, %p207
      %p209 = scmp.ne.s32.totalorder %s201, %s203
      %p210 = scmp.eq.s32.totalorder %s25, 1
      %p211 = por %p209, %p210
      %p212 = scmp.ne.s32.totalorder %s203, %s204
      %p213 = scmp.eq.s32.totalorder %s25, 0
      %p214 = por %p212, %p213
      %p215 = scmp.ne.s32.totalorder %s203, %s204
      %p216 = scmp.eq.s32.totalorder %s26, 1
      %p217 = por %p215, %p216
      %p219 = scmp.ne.s32.totalorder %s204, %s218
      %p220 = scmp.eq.s32.totalorder %s26, 0
      %p221 = por %p219, %p220
      %s223 = sadd.s32 %s222, 1
      %p226 = scmp.eq.s32.totalorder %s20, 1
      %p227 = scmp.ne.s32.totalorder %s222, %s224
      %p228 = scmp.eq.s32.totalorder %s20, 0
      %p229 = por %p227, %p228
      %p230 = scmp.ne.s32.totalorder %s222, %s224
      %p231 = scmp.eq.s32.totalorder %s25, 1
      %p232 = por %p230, %p231
      %p233 = scmp.ne.s32.totalorder %s224, %s225
      %p234 = scmp.eq.s32.totalorder %s25, 0
      %p235 = por %p233, %p234
      %p236 = scmp.ne.s32.totalorder %s224, %s225
      %p237 = scmp.eq.s32.totalorder %s26, 1
      %p238 = por %p236, %p237
      %p240 = scmp.ne.s32.totalorder %s225, %s239
      %p241 = scmp.eq.s32.totalorder %s26, 0
      %p242 = por %p240, %p241
      %s244 = sadd.s32 %s243, 1
      %p247 = scmp.eq.s32.totalorder %s20, 1
      %p248 = scmp.ne.s32.totalorder %s243, %s245
      %p249 = scmp.eq.s32.totalorder %s20, 0
      %p250 = por %p248, %p249
      %p251 = scmp.ne.s32.totalorder %s243, %s245
      %p252 = scmp.eq.s32.totalorder %s25, 1
      %p253 = por %p251, %p252
      %p254 = scmp.ne.s32.totalorder %s245, %s246
      %p255 = scmp.eq.s32.totalorder %s25, 0
      %p256 = por %p254, %p255
      %p257 = scmp.ne.s32.totalorder %s245, %s246
      %p258 = scmp.eq.s32.totalorder %s26, 1
      %p259 = por %p257, %p258
      %p261 = scmp.ne.s32.totalorder %s246, %s260
      %p262 = scmp.eq.s32.totalorder %s26, 0
      %p263 = por %p261, %p262
      %s264 = ssub.s32 %s20, %s27
      %p265 = scmp.eq.s32.totalorder %s264, 0
      %s267 = sadd.s32 %s266, 1
      %s268 = scalar_select %p265, %s266, %s267
      %p271 = pneg %p265
      %p272 = scmp.eq.s32.totalorder %s20, 1
      %p273 = por %p271, %p272
      %p274 = scmp.ne.s32.totalorder %s266, %s269
      %p275 = scmp.eq.s32.totalorder %s20, 0
      %p276 = por %p274, %p275
      %p277 = scmp.ne.s32.totalorder %s266, %s269
      %p278 = scmp.eq.s32.totalorder %s25, 1
      %p279 = por %p277, %p278
      %p280 = scmp.ne.s32.totalorder %s269, %s270
      %p281 = scmp.eq.s32.totalorder %s25, 0
      %p282 = por %p280, %p281
      %p283 = scmp.ne.s32.totalorder %s269, %s270
      %p284 = scmp.eq.s32.totalorder %s26, 1
      %p285 = por %p283, %p284
      %p287 = scmp.ne.s32.totalorder %s270, %s286
      %p288 = scmp.eq.s32.totalorder %s26, 0
      %p289 = por %p287, %p288
      %p290 = scmp.le.s32.totalorder 1, %s20
      %p291 = scmp.lt.s32.totalorder %s20, 3
      %p292 = pnand %p290, %p291
      %p293 = pneg %p292
      // Predicated region
      $region9: #{model_forward.1} parent=5 // pred_check
        _
      $region10: #{model_forward.1} parent=5 // pred_check_branch
        %295 = sbr.rel (%p292) target = $region12
      $region11: #{model_forward.1} parent=5 // pred_region
        %s296 = ssub.s32 %s20, 1
        // Predicated region
        $region13: #{model_forward.1} parent=11 // pred_check
          %p297 = pneg %p67
        $region14: #{model_forward.1} parent=11 // pred_check_branch
          %299 = sbr.rel (%p297) target = $region16
        $region15: #{model_forward.1} parent=11 // pred_region
          _
        $region16: #{model_forward.1} parent=11 // pred_fallthru
          _
        // Predicated region
        $region17: #{model_forward.1} parent=11 // pred_check
          %p300 = pneg %p88
        $region18: #{model_forward.1} parent=11 // pred_check_branch
          %302 = sbr.rel (%p300) target = $region20
        $region19: #{model_forward.1} parent=11 // pred_region
          _
        $region20: #{model_forward.1} parent=11 // pred_fallthru
          _
        // Predicated region
        $region21: #{model_forward.1} parent=11 // pred_check
          %p303 = pneg %p109
        $region22: #{model_forward.1} parent=11 // pred_check_branch
          %305 = sbr.rel (%p303) target = $region24
        $region23: #{model_forward.1} parent=11 // pred_region
          _
        $region24: #{model_forward.1} parent=11 // pred_fallthru
          _
        // Predicated region
        $region25: #{model_forward.1} parent=11 // pred_check
          %p306 = pneg %p130
        $region26: #{model_forward.1} parent=11 // pred_check_branch
          %308 = sbr.rel (%p306) target = $region28
        $region27: #{model_forward.1} parent=11 // pred_region
          _
        $region28: #{model_forward.1} parent=11 // pred_fallthru
          _
        // Predicated region
        $region29: #{model_forward.1} parent=11 // pred_check
          %p309 = pneg %p151
        $region30: #{model_forward.1} parent=11 // pred_check_branch
          %311 = sbr.rel (%p309) target = $region32
        $region31: #{model_forward.1} parent=11 // pred_region
          _
        $region32: #{model_forward.1} parent=11 // pred_fallthru
          _
        // Predicated region
        $region33: #{model_forward.1} parent=11 // pred_check
          %p312 = pneg %p172
        $region34: #{model_forward.1} parent=11 // pred_check_branch
          %314 = sbr.rel (%p312) target = $region36
        $region35: #{model_forward.1} parent=11 // pred_region
          _
        $region36: #{model_forward.1} parent=11 // pred_fallthru
          _
        // Predicated region
        $region37: #{model_forward.1} parent=11 // pred_check
          %p315 = pneg %p193
        $region38: #{model_forward.1} parent=11 // pred_check_branch
          %317 = sbr.rel (%p315) target = $region40
        $region39: #{model_forward.1} parent=11 // pred_region
          _
        $region40: #{model_forward.1} parent=11 // pred_fallthru
          _
        // Predicated region
        $region41: #{model_forward.1} parent=11 // pred_check
          %p318 = pneg %p214
        $region42: #{model_forward.1} parent=11 // pred_check_branch
          %320 = sbr.rel (%p318) target = $region44
        $region43: #{model_forward.1} parent=11 // pred_region
          _
        $region44: #{model_forward.1} parent=11 // pred_fallthru
          _
        // Predicated region
        $region45: #{model_forward.1} parent=11 // pred_check
          %p321 = pneg %p235
        $region46: #{model_forward.1} parent=11 // pred_check_branch
          %323 = sbr.rel (%p321) target = $region48
        $region47: #{model_forward.1} parent=11 // pred_region
          _
        $region48: #{model_forward.1} parent=11 // pred_fallthru
          _
        // Predicated region
        $region49: #{model_forward.1} parent=11 // pred_check
          %p324 = pneg %p256
        $region50: #{model_forward.1} parent=11 // pred_check_branch
          %326 = sbr.rel (%p324) target = $region52
        $region51: #{model_forward.1} parent=11 // pred_region
          _
        $region52: #{model_forward.1} parent=11 // pred_fallthru
          _
      $region12: #{model_forward.1} parent=5 // pred_fallthru
        _
      %p327 = scmp.lt.s32.totalorder %s20, 2
      // Predicated region
      $region53: #{model_forward.1} parent=5 // pred_check
        %p328 = pneg %p327
      $region54: #{model_forward.1} parent=5 // pred_check_branch
        %330 = sbr.rel (%p328) target = $region56
      $region55: #{model_forward.1} parent=5 // pred_region
        // Predicated region
        $region57: #{model_forward.1} parent=55 // pred_check
          %p331 = pneg %p40
        $region58: #{model_forward.1} parent=55 // pred_check_branch
          %333 = sbr.rel (%p331) target = $region60
        $region59: #{model_forward.1} parent=55 // pred_region
          %s334 = sand.u32 %s30, 1
          %s335 = sand.u32 %s30, 1
          %s336 = smul.addr %s335, 224
          %s337 = scalar_lea.vmem [#allocation2], %s336
          %s338 = smul.addr %s20, 8
          %s339 = scalar_lea.vmem %s0, %s338
          // Predicated region
          $region61: #{model_forward.1} parent=59 // pred_check
            _
          $region62: #{model_forward.1} parent=59 // pred_check_branch
            %341 = sbr.rel (0) target = $region64
          $region63: #{model_forward.1} parent=59 // pred_region
            // Predicated region
            $region65: #{model_forward.1} parent=63 // pred_check
              _
            $region66: #{model_forward.1} parent=63 // pred_check_branch
              %343 = sbr.rel (0) target = $region68
            $region67: #{model_forward.1} parent=63 // pred_region
              // Predicated region
              $region80: #{model_forward.1} parent=67 // pred_check
                _
              $region81: #{model_forward.1} parent=67 // pred_check_branch
                %412 = sbr.rel (0) target = $region83
              $region82: #{model_forward.1} parent=67 // pred_region
                loop: start=0, step=1, limit=1
                $region84: #{model_forward.1} parent=82 // loop_pre_header
                  _
                $region85: #{model_forward.1} parent=82 // loop_header
                  %s414 = sphi 0, %s418
                  %p415 = scmp.ge.s32.totalorder %s414, 1
                  %s419 = sphi %s339, %s339
                  %s420 = sphi %s337, %s337
                $region86: #{model_forward.1} parent=82 // loop_header_branch
                  %417 = sbr.rel (%p415) target = $region90
                $region87: #{model_forward.1} parent=82 // loop_body
                  %v421 = vld [vmem:[%s419] sm:$0xff]
                  %422 = vst [vmem:[%s420] sm:$0xff] %v421
                  %v423 = vld [vmem:[%s419 + $0x10] sm:$0xff]
                  %424 = vst [vmem:[%s420 + $0x8] sm:$0xff] %v423
                  %v425 = vld [vmem:[%s419 + $0x20] sm:$0xff]
                  %426 = vst [vmem:[%s420 + $0x10] sm:$0xff] %v425
                  %v427 = vld [vmem:[%s419 + $0x30] sm:$0xff]
                  %428 = vst [vmem:[%s420 + $0x18] sm:$0xff] %v427
                  %v429 = vld [vmem:[%s419 + $0x40] sm:$0xff]
                  %430 = vst [vmem:[%s420 + $0x20] sm:$0xff] %v429
                  %v431 = vld [vmem:[%s419 + $0x50] sm:$0xff]
                  %432 = vst [vmem:[%s420 + $0x28] sm:$0xff] %v431
                  %v433 = vld [vmem:[%s419 + $0x60] sm:$0xff]
                  %434 = vst [vmem:[%s420 + $0x30] sm:$0xff] %v433
                  %v435 = vld [vmem:[%s419 + $0x70] sm:$0xff]
                  %436 = vst [vmem:[%s420 + $0x38] sm:$0xff] %v435
                  %v437 = vld [vmem:[%s419 + $0x80] sm:$0xff]
                  %438 = vst [vmem:[%s420 + $0x40] sm:$0xff] %v437
                  %v439 = vld [vmem:[%s419 + $0x90] sm:$0xff]
                  %440 = vst [vmem:[%s420 + $0x48] sm:$0xff] %v439
                  %v441 = vld [vmem:[%s419 + $0xa0] sm:$0xff]
                  %442 = vst [vmem:[%s420 + $0x50] sm:$0xff] %v441
                  %v443 = vld [vmem:[%s419 + $0xb0] sm:$0xff]
                  %444 = vst [vmem:[%s420 + $0x58] sm:$0xff] %v443
                  %v445 = vld [vmem:[%s419 + $0xc0] sm:$0xff]
                  %446 = vst [vmem:[%s420 + $0x60] sm:$0xff] %v445
                  %v447 = vld [vmem:[%s419 + $0xd0] sm:$0xff]
                  %448 = vst [vmem:[%s420 + $0x68] sm:$0xff] %v447
                  %v449 = vld [vmem:[%s419 + $0xe0] sm:$0xff]
                  %450 = vst [vmem:[%s420 + $0x70] sm:$0xff] %v449
                  %v451 = vld [vmem:[%s419 + $0xf0] sm:$0xff]
                  %452 = vst [vmem:[%s420 + $0x78] sm:$0xff] %v451
                  %v453 = vld [vmem:[%s419 + $0x100] sm:$0xff]
                  %454 = vst [vmem:[%s420 + $0x80] sm:$0xff] %v453
                  %v455 = vld [vmem:[%s419 + $0x110] sm:$0xff]
                  %456 = vst [vmem:[%s420 + $0x88] sm:$0xff] %v455
                  %v457 = vld [vmem:[%s419 + $0x120] sm:$0xff]
                  %458 = vst [vmem:[%s420 + $0x90] sm:$0xff] %v457
                  %v459 = vld [vmem:[%s419 + $0x130] sm:$0xff]
                  %460 = vst [vmem:[%s420 + $0x98] sm:$0xff] %v459
                  %v461 = vld [vmem:[%s419 + $0x140] sm:$0xff]
                  %462 = vst [vmem:[%s420 + $0xa0] sm:$0xff] %v461
                  %v463 = vld [vmem:[%s419 + $0x150] sm:$0xff]
                  %464 = vst [vmem:[%s420 + $0xa8] sm:$0xff] %v463
                  %v465 = vld [vmem:[%s419 + $0x160] sm:$0xff]
                  %466 = vst [vmem:[%s420 + $0xb0] sm:$0xff] %v465
                  %v467 = vld [vmem:[%s419 + $0x170] sm:$0xff]
                  %468 = vst [vmem:[%s420 + $0xb8] sm:$0xff] %v467
                  %v469 = vld [vmem:[%s419 + $0x180] sm:$0xff]
                  %470 = vst [vmem:[%s420 + $0xc0] sm:$0xff] %v469
                  %v471 = vld [vmem:[%s419 + $0x190] sm:$0xff]
                  %472 = vst [vmem:[%s420 + $0xc8] sm:$0xff] %v471
                  %v473 = vld [vmem:[%s419 + $0x1a0] sm:$0xff]
                  %474 = vst [vmem:[%s420 + $0xd0] sm:$0xff] %v473
                  %v475 = vld [vmem:[%s419 + $0x1b0] sm:$0xff]
                  %476 = vst [vmem:[%s420 + $0xd8] sm:$0xff] %v475
                $region88: #{model_forward.1} parent=82 // loop_footer
                  %s418 = sadd.s32 1, %s414
                $region89: #{model_forward.1} parent=82 // loop_footer_branch
                  %413 = sbr.rel target = $region85
                $region90: #{model_forward.1} parent=82 // loop_exit
                  _
              $region83: #{model_forward.1} parent=67 // pred_fallthru
                _
              // Predicated region
              $region91: #{model_forward.1} parent=67 // pred_check
                _
              $region92: #{model_forward.1} parent=67 // pred_check_branch
                %478 = sbr.rel target = $region94
              $region93: #{model_forward.1} parent=67 // pred_region
                _
              $region94: #{model_forward.1} parent=67 // pred_fallthru
                _
            $region68: #{model_forward.1} parent=63 // pred_fallthru
              _
            // Predicated region
            $region69: #{model_forward.1} parent=63 // pred_check
              _
            $region70: #{model_forward.1} parent=63 // pred_check_branch
              %345 = sbr.rel target = $region72
            $region71: #{model_forward.1} parent=63 // pred_region
              loop: start=0, step=1, limit=1
              $region73: #{model_forward.1} parent=71 // loop_pre_header
                _
              $region74: #{model_forward.1} parent=71 // loop_header
                %s348 = sphi 0, %s352
                %p349 = scmp.ge.s32.totalorder %s348, 1
                %s353 = sphi %s339, %s339
                %s354 = sphi %s337, %s337
              $region75: #{model_forward.1} parent=71 // loop_header_branch
                %351 = sbr.rel (%p349) target = $region79
              $region76: #{model_forward.1} parent=71 // loop_body
                %v355 = vld [vmem:[%s353] sm:$0xff]
                %356 = vst [vmem:[%s354] sm:$0xff] %v355
                %v357 = vld [vmem:[%s353 + $0x10] sm:$0xff]
                %358 = vst [vmem:[%s354 + $0x8] sm:$0xff] %v357
                %v359 = vld [vmem:[%s353 + $0x20] sm:$0xff]
                %360 = vst [vmem:[%s354 + $0x10] sm:$0xff] %v359
                %v361 = vld [vmem:[%s353 + $0x30] sm:$0xff]
                %362 = vst [vmem:[%s354 + $0x18] sm:$0xff] %v361
                %v363 = vld [vmem:[%s353 + $0x40] sm:$0xff]
                %364 = vst [vmem:[%s354 + $0x20] sm:$0xff] %v363
                %v365 = vld [vmem:[%s353 + $0x50] sm:$0xff]
                %366 = vst [vmem:[%s354 + $0x28] sm:$0xff] %v365
                %v367 = vld [vmem:[%s353 + $0x60] sm:$0xff]
                %368 = vst [vmem:[%s354 + $0x30] sm:$0xff] %v367
                %v369 = vld [vmem:[%s353 + $0x70] sm:$0xff]
                %370 = vst [vmem:[%s354 + $0x38] sm:$0xff] %v369
                %v371 = vld [vmem:[%s353 + $0x80] sm:$0xff]
                %372 = vst [vmem:[%s354 + $0x40] sm:$0xff] %v371
                %v373 = vld [vmem:[%s353 + $0x90] sm:$0xff]
                %374 = vst [vmem:[%s354 + $0x48] sm:$0xff] %v373
                %v375 = vld [vmem:[%s353 + $0xa0] sm:$0xff]
                %376 = vst [vmem:[%s354 + $0x50] sm:$0xff] %v375
                %v377 = vld [vmem:[%s353 + $0xb0] sm:$0xff]
                %378 = vst [vmem:[%s354 + $0x58] sm:$0xff] %v377
                %v379 = vld [vmem:[%s353 + $0xc0] sm:$0xff]
                %380 = vst [vmem:[%s354 + $0x60] sm:$0xff] %v379
                %v381 = vld [vmem:[%s353 + $0xd0] sm:$0xff]
                %382 = vst [vmem:[%s354 + $0x68] sm:$0xff] %v381
                %v383 = vld [vmem:[%s353 + $0xe0] sm:$0xff]
                %384 = vst [vmem:[%s354 + $0x70] sm:$0xff] %v383
                %v385 = vld [vmem:[%s353 + $0xf0] sm:$0xff]
                %386 = vst [vmem:[%s354 + $0x78] sm:$0xff] %v385
                %v387 = vld [vmem:[%s353 + $0x100] sm:$0xff]
                %388 = vst [vmem:[%s354 + $0x80] sm:$0xff] %v387
                %v389 = vld [vmem:[%s353 + $0x110] sm:$0xff]
                %390 = vst [vmem:[%s354 + $0x88] sm:$0xff] %v389
                %v391 = vld [vmem:[%s353 + $0x120] sm:$0xff]
                %392 = vst [vmem:[%s354 + $0x90] sm:$0xff] %v391
                %v393 = vld [vmem:[%s353 + $0x130] sm:$0xff]
                %394 = vst [vmem:[%s354 + $0x98] sm:$0xff] %v393
                %v395 = vld [vmem:[%s353 + $0x140] sm:$0xff]
                %396 = vst [vmem:[%s354 + $0xa0] sm:$0xff] %v395
                %v397 = vld [vmem:[%s353 + $0x150] sm:$0xff]
                %398 = vst [vmem:[%s354 + $0xa8] sm:$0xff] %v397
                %v399 = vld [vmem:[%s353 + $0x160] sm:$0xff]
                %400 = vst [vmem:[%s354 + $0xb0] sm:$0xff] %v399
                %v401 = vld [vmem:[%s353 + $0x170] sm:$0xff]
                %402 = vst [vmem:[%s354 + $0xb8] sm:$0xff] %v401
                %v403 = vld [vmem:[%s353 + $0x180] sm:$0xff]
                %404 = vst [vmem:[%s354 + $0xc0] sm:$0xff] %v403
                %v405 = vld [vmem:[%s353 + $0x190] sm:$0xff]
                %406 = vst [vmem:[%s354 + $0xc8] sm:$0xff] %v405
                %v407 = vld [vmem:[%s353 + $0x1a0] sm:$0xff]
                %408 = vst [vmem:[%s354 + $0xd0] sm:$0xff] %v407
                %v409 = vld [vmem:[%s353 + $0x1b0] sm:$0xff]
                %410 = vst [vmem:[%s354 + $0xd8] sm:$0xff] %v409
              $region77: #{model_forward.1} parent=71 // loop_footer
                %s352 = sadd.s32 1, %s348
              $region78: #{model_forward.1} parent=71 // loop_footer_branch
                %347 = sbr.rel target = $region74
              $region79: #{model_forward.1} parent=71 // loop_exit
                _
            $region72: #{model_forward.1} parent=63 // pred_fallthru
              _
          $region64: #{model_forward.1} parent=59 // pred_fallthru
            _
          %479 = vnop
        $region60: #{model_forward.1} parent=55 // pred_fallthru
          _
      $region56: #{model_forward.1} parent=5 // pred_fallthru
        _
      %p480 = scmp.le.s32.totalorder 1, %s20
      %p481 = scmp.lt.s32.totalorder %s20, 3
      %p482 = pnand %p480, %p481
      %p483 = pneg %p482
      // Predicated region
      $region95: #{model_forward.1} parent=5 // pred_check
        _
      $region96: #{model_forward.1} parent=5 // pred_check_branch
        %485 = sbr.rel (%p482) target = $region98
      $region97: #{model_forward.1} parent=5 // pred_region
        %s486 = ssub.s32 %s20, 1
        %s487 = sand.u32 %s33, 1
        %s488 = sand.u32 %s33, 1
        %s489 = smul.addr %s488, 224
        %s490 = scalar_lea.vmem [#allocation2], %s489
        // Predicated region
        $region99: #{model_forward.1} parent=97 // pred_check
          %p491 = pneg %p46
        $region100: #{model_forward.1} parent=97 // pred_check_branch
          %493 = sbr.rel (%p491) target = $region102
        $region101: #{model_forward.1} parent=97 // pred_region
          _
        $region102: #{model_forward.1} parent=97 // pred_fallthru
          _
        %s494 = sand.u32 %s33, 1
        %s495 = sand.u32 %s33, 1
        %s496 = smul.addr %s495, 224
        %s497 = scalar_lea.vmem [#allocation2], %s496
        %p498 = pneg %p46
        %p499 = pneg %p43
        %p500 = pneg %p67
        %p501 = pneg %p64
        %p502 = pneg %p88
        %p503 = pneg %p85
        %p504 = pneg %p109
        %p505 = pneg %p106
        %p506 = pneg %p130
        %p507 = pneg %p127
        %p508 = pneg %p151
        %p509 = pneg %p148
        %p510 = pneg %p172
        %p511 = pneg %p169
        %p512 = pneg %p193
        %p513 = pneg %p190
        %p514 = pneg %p214
        %p515 = pneg %p211
        %p516 = pneg %p235
        %p517 = pneg %p232
        %p518 = pneg %p256
        %p519 = pneg %p253
        %p520 = pneg %p282
        %p521 = pneg %p279
        %s522 = sand.u32 %s269, 1
        %s523 = scalar_lea.sflag [#allocation4], %s522
        %s524 = sand.u32 %s269, 1
        %s525 = smul.addr %s524, 8
        %s526 = scalar_lea.vmem [#allocation3], %s525
        %v527 = vld [vmem:[%s490] sm:$0xff]
        %v528 = vld [vmem:[%s490 + $0x8] sm:$0xff]
        %v529 = vld [vmem:[%s490 + $0x10] sm:$0xff]
        %v530 = vld [vmem:[%s490 + $0x18] sm:$0xff]
        %v531 = vld [vmem:[%s490 + $0x20] sm:$0xff]
        %v532 = vld [vmem:[%s490 + $0x28] sm:$0xff]
        %v533 = vld [vmem:[%s490 + $0x30] sm:$0xff]
        %v534 = vld [vmem:[%s490 + $0x38] sm:$0xff]
        %v535 = vld [vmem:[%s490 + $0x40] sm:$0xff]
        %v536 = vld [vmem:[%s490 + $0x48] sm:$0xff]
        %v537 = vld [vmem:[%s490 + $0x50] sm:$0xff]
        %v538 = vld [vmem:[%s490 + $0x58] sm:$0xff]
        %v539 = vld [vmem:[%s490 + $0x60] sm:$0xff]
        %v540 = vld [vmem:[%s490 + $0x68] sm:$0xff]
        %v541 = vld [vmem:[%s490 + $0x70] sm:$0xff]
        %v542 = vld [vmem:[%s490 + $0x78] sm:$0xff]
        %v543 = vld [vmem:[%s490 + $0x80] sm:$0xff]
        %v544 = vld [vmem:[%s490 + $0x88] sm:$0xff]
        %v545 = vld [vmem:[%s490 + $0x90] sm:$0xff]
        %v546 = vld [vmem:[%s490 + $0x98] sm:$0xff]
        %v547 = vld [vmem:[%s490 + $0xa0] sm:$0xff]
        %v548 = vld [vmem:[%s490 + $0xa8] sm:$0xff]
        %v549 = vld [vmem:[%s490 + $0xb0] sm:$0xff]
        %v550 = vld [vmem:[%s490 + $0xb8] sm:$0xff]
        %v551 = vld [vmem:[%s490 + $0xc0] sm:$0xff]
        %v552 = vld [vmem:[%s490 + $0xc8] sm:$0xff]
        %v553 = vld [vmem:[%s490 + $0xd0] sm:$0xff]
        %v554 = vld [vmem:[%s490 + $0xd8] sm:$0xff]
        %v555 = vld [vmem:[%s1] sm:$0xff]
        %v556 = vld [vmem:[%s1 + $0x8] sm:$0xff]
        %v557 = vld [vmem:[%s1 + $0x10] sm:$0xff]
        %v558 = vld [vmem:[%s1 + $0x18] sm:$0xff]
        %v559 = vld [vmem:[%s1 + $0x20] sm:$0xff]
        %v560 = vld [vmem:[%s1 + $0x28] sm:$0xff]
        %v561 = vld [vmem:[%s1 + $0x30] sm:$0xff]
        %v562 = vld [vmem:[%s1 + $0x38] sm:$0xff]
        %v563 = vld [vmem:[%s1 + $0x40] sm:$0xff]
        %v564 = vld [vmem:[%s1 + $0x48] sm:$0xff]
        %v565 = vld [vmem:[%s1 + $0x50] sm:$0xff]
        %v566 = vld [vmem:[%s1 + $0x58] sm:$0xff]
        %v567 = vld [vmem:[%s1 + $0x60] sm:$0xf]
        %v568 = vld [vmem:[%s1 + $0x68] sm:$0xf]
        %v569 = vld [vmem:[%s1 + $0x70] sm:$0xf]
        %v570 = vld [vmem:[%s1 + $0x78] sm:$0xf]
        %s571 = scalar_lea.vmem %s1, 128
        %v572 = vld [vmem:[%s571] sm:$0xff]
        %v573 = vld [vmem:[%s571 + $0x8] sm:$0xff]
        %v574 = vld [vmem:[%s571 + $0x10] sm:$0xff]
        %v575 = vld [vmem:[%s571 + $0x18] sm:$0xff]
        %v576 = vld [vmem:[%s571 + $0x20] sm:$0xff]
        %v577 = vld [vmem:[%s571 + $0x28] sm:$0xff]
        %v578 = vld [vmem:[%s571 + $0x30] sm:$0xff]
        %v579 = vld [vmem:[%s571 + $0x38] sm:$0xff]
        %v580 = vld [vmem:[%s571 + $0x40] sm:$0xff]
        %v581 = vld [vmem:[%s571 + $0x48] sm:$0xff]
        %v582 = vld [vmem:[%s571 + $0x50] sm:$0xff]
        %v583 = vld [vmem:[%s571 + $0x58] sm:$0xff]
        %v584 = vld [vmem:[%s571 + $0x60] sm:$0xf]
        %v585 = vld [vmem:[%s571 + $0x68] sm:$0xf]
        %v586 = vld [vmem:[%s571 + $0x70] sm:$0xf]
        %v587 = vld [vmem:[%s571 + $0x78] sm:$0xf]
        %vm588 = vcmask 228352
        %v590 = vsel %vm588, %v528, 0
        %v593 = vsel %vm588, %v529, 0
        %v596 = vsel %vm588, %v530, 0
        %v599 = vsel %vm588, %v531, 0
        %v602 = vsel %vm588, %v532, 0
        %v605 = vsel %vm588, %v533, 0
        %v608 = vsel %vm588, %v534, 0
        %v611 = vsel %vm588, %v535, 0
        %v614 = vsel %vm588, %v536, 0
        %v617 = vsel %vm588, %v537, 0
        %v620 = vsel %vm588, %v538, 0
        %v623 = vsel %vm588, %v539, 0
        %v626 = vsel %vm588, %v540, 0
        %v629 = vsel %vm588, %v541, 0
        %v632 = vsel %vm588, %v542, 0
        %v635 = vsel %vm588, %v543, 0
        %v638 = vsel %vm588, %v544, 0
        %v641 = vsel %vm588, %v545, 0
        %v644 = vsel %vm588, %v546, 0
        %v647 = vsel %vm588, %v547, 0
        %v650 = vsel %vm588, %v548, 0
        %v653 = vsel %vm588, %v549, 0
        %v656 = vsel %vm588, %v550, 0
        %v659 = vsel %vm588, %v551, 0
        %v662 = vsel %vm588, %v552, 0
        %v665 = vsel %vm588, %v553, 0
        %vm667 = vcmask 1043456
        %v669 = vsel %vm667, %v584, 0
        %v672 = vsel %vm667, %v585, 0
        %v675 = vsel %vm667, %v586, 0
        %v678 = vsel %vm667, %v587, 0
        %680 = vmatprep.subr.mxu0 %v573
        %681 = vmatpush1.msra.mxu0 %v572
        %682 = vmatprep.subr.mxu0 %v577
        %683 = vmatpush1.msra.mxu0 %v576
        %684 = vmatprep.subr.mxu0 %v581
        %685 = vmatpush1.msra.mxu0 %v580
        %686 = vmatprep.subr.mxu0 %v672
        %687 = vmatpush1.msra.mxu0 %v669
        %688 = vmatprep.subr.mxu0 0.0
        %689 = vmatpush1.msra.mxu0 0.0
        %690 = vmatprep.subr.mxu0 0.0
        %691 = vmatpush1.msra.mxu0 0.0
        %692 = vmatprep.subr.mxu0 0.0
        %693 = vmatpush1.msra.mxu0 0.0
        %694 = vmatprep.subr.mxu0 0.0
        %695 = vmatpush1.msra.mxu0 0.0
        %696 = vmatprep.subr.mxu0 0.0
        %697 = vmatpush1.msra.mxu0 0.0
        %698 = vmatprep.subr.mxu0 0.0
        %699 = vmatpush1.msra.mxu0 0.0
        %700 = vmatprep.subr.mxu0 0.0
        %701 = vmatpush1.msra.mxu0 0.0
        %702 = vmatprep.subr.mxu0 0.0
        %703 = vmatpush1.msra.mxu0 0.0
        %704 = vmatprep.subr.mxu0 0.0
        %705 = vmatpush1.msra.mxu0 0.0
        %706 = vmatprep.subr.mxu0 0.0
        %707 = vmatpush1.msra.mxu0 0.0
        %708 = vmatprep.subr.mxu0 0.0
        %709 = vmatpush1.msra.mxu0 0.0
        %710 = vmatprep.subr.mxu0 0.0
        %711 = vmatpush1.msra.mxu0 0.0
        %712 = vmatprep.subr.mxu0 0.0
        %713 = vmatpush1.msra.mxu0 0.0
        %714 = vmatprep.subr.mxu0 0.0
        %715 = vmatpush1.msra.mxu0 0.0
        %716 = vmatprep.subr.mxu0 0.0
        %717 = vmatpush1.msra.mxu0 0.0
        %718 = vmatprep.subr.mxu0 0.0
        %719 = vmatpush1.msra.mxu0 0.0
        %720 = vmatprep.subr.mxu0 0.0
        %721 = vmatpush1.msra.mxu0 0.0
        %722 = vmatprep.subr.mxu0 0.0
        %723 = vmatpush1.msra.mxu0 0.0
        %724 = vmatprep.subr.mxu0 0.0
        %725 = vmatpush1.msra.mxu0 0.0
        %726 = vmatprep.subr.mxu0 0.0
        %727 = vmatpush1.msra.mxu0 0.0
        %728 = vmatprep.subr.mxu0 0.0
        %729 = vmatpush1.msra.mxu0 0.0
        %730 = vmatprep.subr.mxu0 0.0
        %731 = vmatpush1.msra.mxu0 0.0
        %732 = vmatprep.subr.mxu0 0.0
        %733 = vmatpush1.msra.mxu0 0.0
        %734 = vmatprep.subr.mxu0 0.0
        %735 = vmatpush1.msra.mxu0 0.0
        %736 = vmatprep.subr.mxu0 0.0
        %737 = vmatpush1.msra.mxu0 0.0
        %738 = vmatprep.subr.mxu0 0.0
        %739 = vmatpush1.msra.mxu0 0.0
        %740 = vmatprep.subr.mxu0 0.0
        %741 = vmatpush1.msra.mxu0 0.0
        %742 = vmatprep.subr.mxu0 0.0
        %743 = vmatpush1.msra.mxu0 0.0
        %744 = vmatprep.mubr.f32.mxu0 0.0
        %745 = vmatmul.mubr.f32.gmra.mrb[0].mxu0 %v590
        %v746 = vpop.f32.mrb[0].mxu0
        %v747 = vadd.f32 0.0, %v746
        %v748 = vpop.f32.mrb[0].mxu0
        %v749 = vadd.f32 0.0, %v748
        %750 = vmatprep.mubr.f32.mxu0 0.0
        %751 = vmatmul.mubr.f32.gmra.mrb[0].mxu0 %v593
        %v752 = vpop.f32.mrb[0].mxu0
        %v753 = vadd.f32 0.0, %v752
        %v754 = vpop.f32.mrb[0].mxu0
        %v755 = vadd.f32 0.0, %v754
        %756 = vmatprep.mubr.f32.mxu0 0.0
        %757 = vmatmul.mubr.f32.gmra.mrb[0].mxu0 %v596
        %v758 = vpop.f32.mrb[0].mxu0
        %v759 = vadd.f32 0.0, %v758
        %v760 = vpop.f32.mrb[0].mxu0
        %v761 = vadd.f32 0.0, %v760
        %762 = vmatprep.mubr.f32.mxu0 0.0
        %763 = vmatmul.mubr.f32.gmra.mrb[0].mxu0 %v599
        %v764 = vpop.f32.mrb[0].mxu0
        %v765 = vadd.f32 0.0, %v764
        %v766 = vpop.f32.mrb[0].mxu0
        %v767 = vadd.f32 0.0, %v766
        %768 = vmatprep.mubr.f32.mxu0 0.0
        %769 = vmatmul.mubr.f32.gmra.mrb[0].mxu0 %v602
        %v770 = vpop.f32.mrb[0].mxu0
        %v771 = vadd.f32 0.0, %v770
        %v772 = vpop.f32.mrb[0].mxu0
        %v773 = vadd.f32 0.0, %v772
        %774 = vmatprep.mubr.f32.mxu0 0.0
        %775 = vmatmul.mubr.f32.gmra.mrb[0].mxu0 %v605
        %v776 = vpop.f32.mrb[0].mxu0
        %v777 = vadd.f32 0.0, %v776
        %v778 = vpop.f32.mrb[0].mxu0
        %v779 = vadd.f32 0.0, %v778
        %780 = vmatprep.mubr.f32.mxu0 0.0
        %781 = vmatmul.mubr.f32.gmra.mrb[0].mxu0 %v608
        %v782 = vpop.f32.mrb[0].mxu0
        %v783 = vadd.f32 0.0, %v782
        %v784 = vpop.f32.mrb[0].mxu0
        %v785 = vadd.f32 0.0, %v784
        %786 = vmatprep.mubr.f32.mxu0 0.0
        %787 = vmatmul.mubr.f32.gmra.mrb[0].mxu0 %v611
        %v788 = vpop.f32.mrb[0].mxu0
        %v789 = vadd.f32 0.0, %v788
        %v790 = vpop.f32.mrb[0].mxu0
        %v791 = vadd.f32 0.0, %v790
        %792 = vmatprep.mubr.f32.mxu0 0.0
        %793 = vmatmul.mubr.f32.gmra.mrb[0].mxu0 %v614
        %v794 = vpop.f32.mrb[0].mxu0
        %v795 = vadd.f32 0.0, %v794
        %v796 = vpop.f32.mrb[0].mxu0
        %v797 = vadd.f32 0.0, %v796
        %798 = vmatprep.mubr.f32.mxu0 0.0
        %799 = vmatmul.mubr.f32.gmra.mrb[0].mxu0 %v617
        %v800 = vpop.f32.mrb[0].mxu0
        %v801 = vadd.f32 0.0, %v800
        %v802 = vpop.f32.mrb[0].mxu0
        %v803 = vadd.f32 0.0, %v802
        %804 = vmatprep.mubr.f32.mxu0 0.0
        %805 = vmatmul.mubr.f32.gmra.mrb[0].mxu0 %v620
        %v806 = vpop.f32.mrb[0].mxu0
        %v807 = vadd.f32 0.0, %v806
        %v808 = vpop.f32.mrb[0].mxu0
        %v809 = vadd.f32 0.0, %v808
        %810 = vmatprep.mubr.f32.mxu0 0.0
        %811 = vmatmul.mubr.f32.gmra.mrb[0].mxu0 %v623
        %v812 = vpop.f32.mrb[0].mxu0
        %v813 = vadd.f32 0.0, %v812
        %v814 = vpop.f32.mrb[0].mxu0
        %v815 = vadd.f32 0.0, %v814
        %816 = vmatprep.mubr.f32.mxu0 0.0
        %817 = vmatmul.mubr.f32.gmra.mrb[0].mxu0 %v626
        %v818 = vpop.f32.mrb[0].mxu0
        %v819 = vadd.f32 0.0, %v818
        %v820 = vpop.f32.mrb[0].mxu0
        %v821 = vadd.f32 0.0, %v820
        %822 = vmatprep.mubr.f32.mxu0 0.0
        %823 = vmatmul.mubr.f32.gmra.mrb[0].mxu0 %v629
        %v824 = vpop.f32.mrb[0].mxu0
        %v825 = vadd.f32 0.0, %v824
        %v826 = vpop.f32.mrb[0].mxu0
        %v827 = vadd.f32 0.0, %v826
        %828 = vmatprep.mubr.f32.mxu0 0.0
        %829 = vmatmul.mubr.f32.gmra.mrb[0].mxu0 %v632
        %v830 = vpop.f32.mrb[0].mxu0
        %v831 = vadd.f32 0.0, %v830
        %v832 = vpop.f32.mrb[0].mxu0
        %v833 = vadd.f32 0.0, %v832
        %834 = vmatprep.mubr.f32.mxu0 0.0
        %835 = vmatmul.mubr.f32.gmra.mrb[0].mxu0 %v635
        %v836 = vpop.f32.mrb[0].mxu0
        %v837 = vadd.f32 0.0, %v836
        %v838 = vpop.f32.mrb[0].mxu0
        %v839 = vadd.f32 0.0, %v838
        %840 = vmatprep.mubr.f32.mxu0 0.0
        %841 = vmatmul.mubr.f32.gmra.mrb[0].mxu0 %v638
        %v842 = vpop.f32.mrb[0].mxu0
        %v843 = vadd.f32 0.0, %v842
        %v844 = vpop.f32.mrb[0].mxu0
        %v845 = vadd.f32 0.0, %v844
        %846 = vmatprep.mubr.f32.mxu0 0.0
        %847 = vmatmul.mubr.f32.gmra.mrb[0].mxu0 %v641
        %v848 = vpop.f32.mrb[0].mxu0
        %v849 = vadd.f32 0.0, %v848
        %v850 = vpop.f32.mrb[0].mxu0
        %v851 = vadd.f32 0.0, %v850
        %852 = vmatprep.mubr.f32.mxu0 0.0
        %853 = vmatmul.mubr.f32.gmra.mrb[0].mxu0 %v644
        %v854 = vpop.f32.mrb[0].mxu0
        %v855 = vadd.f32 0.0, %v854
        %v856 = vpop.f32.mrb[0].mxu0
        %v857 = vadd.f32 0.0, %v856
        %858 = vmatprep.mubr.f32.mxu0 0.0
        %859 = vmatmul.mubr.f32.gmra.mrb[0].mxu0 %v647
        %v860 = vpop.f32.mrb[0].mxu0
        %v861 = vadd.f32 0.0, %v860
        %v862 = vpop.f32.mrb[0].mxu0
        %v863 = vadd.f32 0.0, %v862
        %864 = vmatprep.mubr.f32.mxu0 0.0
        %865 = vmatmul.mubr.f32.gmra.mrb[0].mxu0 %v650
        %v866 = vpop.f32.mrb[0].mxu0
        %v867 = vadd.f32 0.0, %v866
        %v868 = vpop.f32.mrb[0].mxu0
        %v869 = vadd.f32 0.0, %v868
        %870 = vmatprep.mubr.f32.mxu0 0.0
        %871 = vmatmul.mubr.f32.gmra.mrb[0].mxu0 %v653
        %v872 = vpop.f32.mrb[0].mxu0
        %v873 = vadd.f32 0.0, %v872
        %v874 = vpop.f32.mrb[0].mxu0
        %v875 = vadd.f32 0.0, %v874
        %876 = vmatprep.mubr.f32.mxu0 0.0
        %877 = vmatmul.mubr.f32.gmra.mrb[0].mxu0 %v656
        %v878 = vpop.f32.mrb[0].mxu0
        %v879 = vadd.f32 0.0, %v878
        %v880 = vpop.f32.mrb[0].mxu0
        %v881 = vadd.f32 0.0, %v880
        %882 = vmatprep.mubr.f32.mxu0 0.0
        %883 = vmatmul.mubr.f32.gmra.mrb[0].mxu0 %v659
        %v884 = vpop.f32.mrb[0].mxu0
        %v885 = vadd.f32 0.0, %v884
        %v886 = vpop.f32.mrb[0].mxu0
        %v887 = vadd.f32 0.0, %v886
        %888 = vmatprep.mubr.f32.mxu0 0.0
        %889 = vmatmul.mubr.f32.gmra.mrb[0].mxu0 %v662
        %v890 = vpop.f32.mrb[0].mxu0
        %v891 = vadd.f32 0.0, %v890
        %v892 = vpop.f32.mrb[0].mxu0
        %v893 = vadd.f32 0.0, %v892
        %894 = vmatprep.mubr.f32.mxu0 0.0
        %895 = vmatmul.mubr.f32.gmra.mrb[0].mxu0 %v665
        %v896 = vpop.f32.mrb[0].mxu0
        %v897 = vadd.f32 0.0, %v896
        %v898 = vpop.f32.mrb[0].mxu0
        %v899 = vadd.f32 0.0, %v898
        %900 = vdwg.mxu0
        %901 = vmatprep.subr.mxu0 %v575
        %902 = vmatpush1.msra.mxu0 %v574
        %903 = vmatprep.subr.mxu0 %v579
        %904 = vmatpush1.msra.mxu0 %v578
        %905 = vmatprep.subr.mxu0 %v583
        %906 = vmatpush1.msra.mxu0 %v582
        %907 = vmatprep.subr.mxu0 %v678
        %908 = vmatpush1.msra.mxu0 %v675
        %909 = vmatprep.subr.mxu0 0.0
        %910 = vmatpush1.msra.mxu0 0.0
        %911 = vmatprep.subr.mxu0 0.0
        %912 = vmatpush1.msra.mxu0 0.0
        %913 = vmatprep.subr.mxu0 0.0
        %914 = vmatpush1.msra.mxu0 0.0
        %915 = vmatprep.subr.mxu0 0.0
        %916 = vmatpush1.msra.mxu0 0.0
        %917 = vmatprep.subr.mxu0 0.0
        %918 = vmatpush1.msra.mxu0 0.0
        %919 = vmatprep.subr.mxu0 0.0
        %920 = vmatpush1.msra.mxu0 0.0
        %921 = vmatprep.subr.mxu0 0.0
        %922 = vmatpush1.msra.mxu0 0.0
        %923 = vmatprep.subr.mxu0 0.0
        %924 = vmatpush1.msra.mxu0 0.0
        %925 = vmatprep.subr.mxu0 0.0
        %926 = vmatpush1.msra.mxu0 0.0
        %927 = vmatprep.subr.mxu0 0.0
        %928 = vmatpush1.msra.mxu0 0.0
        %929 = vmatprep.subr.mxu0 0.0
        %930 = vmatpush1.msra.mxu0 0.0
        %931 = vmatprep.subr.mxu0 0.0
        %932 = vmatpush1.msra.mxu0 0.0
        %933 = vmatprep.subr.mxu0 0.0
        %934 = vmatpush1.msra.mxu0 0.0
        %935 = vmatprep.subr.mxu0 0.0
        %936 = vmatpush1.msra.mxu0 0.0
        %937 = vmatprep.subr.mxu0 0.0
        %938 = vmatpush1.msra.mxu0 0.0
        %939 = vmatprep.subr.mxu0 0.0
        %940 = vmatpush1.msra.mxu0 0.0
        %941 = vmatprep.subr.mxu0 0.0
        %942 = vmatpush1.msra.mxu0 0.0
        %943 = vmatprep.subr.mxu0 0.0
        %944 = vmatpush1.msra.mxu0 0.0
        %945 = vmatprep.subr.mxu0 0.0
        %946 = vmatpush1.msra.mxu0 0.0
        %947 = vmatprep.subr.mxu0 0.0
        %948 = vmatpush1.msra.mxu0 0.0
        %949 = vmatprep.subr.mxu0 0.0
        %950 = vmatpush1.msra.mxu0 0.0
        %951 = vmatprep.subr.mxu0 0.0
        %952 = vmatpush1.msra.mxu0 0.0
        %953 = vmatprep.subr.mxu0 0.0
        %954 = vmatpush1.msra.mxu0 0.0
        %955 = vmatprep.subr.mxu0 0.0
        %956 = vmatpush1.msra.mxu0 0.0
        %957 = vmatprep.subr.mxu0 0.0
        %958 = vmatpush1.msra.mxu0 0.0
        %959 = vmatprep.subr.mxu0 0.0
        %960 = vmatpush1.msra.mxu0 0.0
        %961 = vmatprep.subr.mxu0 0.0
        %962 = vmatpush1.msra.mxu0 0.0
        %963 = vmatprep.subr.mxu0 0.0
        %964 = vmatpush1.msra.mxu0 0.0
        %965 = vmatprep.mubr.f32.mxu0 0.0
        %966 = vmatmul.mubr.f32.gmra.mrb[0].mxu0 %v590
        %v967 = vpop.f32.mrb[0].mxu0
        %v968 = vadd.f32 0.0, %v967
        %v969 = vpop.f32.mrb[0].mxu0
        %v970 = vadd.f32 0.0, %v969
        %971 = vmatprep.mubr.f32.mxu0 0.0
        %972 = vmatmul.mubr.f32.gmra.mrb[0].mxu0 %v593
        %v973 = vpop.f32.mrb[0].mxu0
        %v974 = vadd.f32 0.0, %v973
        %v975 = vpop.f32.mrb[0].mxu0
        %v976 = vadd.f32 0.0, %v975
        %977 = vmatprep.mubr.f32.mxu0 0.0
        %978 = vmatmul.mubr.f32.gmra.mrb[0].mxu0 %v596
        %v979 = vpop.f32.mrb[0].mxu0
        %v980 = vadd.f32 0.0, %v979
        %v981 = vpop.f32.mrb[0].mxu0
        %v982 = vadd.f32 0.0, %v981
        %983 = vmatprep.mubr.f32.mxu0 0.0
        %984 = vmatmul.mubr.f32.gmra.mrb[0].mxu0 %v599
        %v985 = vpop.f32.mrb[0].mxu0
        %v986 = vadd.f32 0.0, %v985
        %v987 = vpop.f32.mrb[0].mxu0
        %v988 = vadd.f32 0.0, %v987
        %989 = vmatprep.mubr.f32.mxu0 0.0
        %990 = vmatmul.mubr.f32.gmra.mrb[0].mxu0 %v602
        %v991 = vpop.f32.mrb[0].mxu0
        %v992 = vadd.f32 0.0, %v991
        %v993 = vpop.f32.mrb[0].mxu0
        %v994 = vadd.f32 0.0, %v993
        %995 = vmatprep.mubr.f32.mxu0 0.0
        %996 = vmatmul.mubr.f32.gmra.mrb[0].mxu0 %v605
        %v997 = vpop.f32.mrb[0].mxu0
        %v998 = vadd.f32 0.0, %v997
        %v999 = vpop.f32.mrb[0].mxu0
        %v1000 = vadd.f32 0.0, %v999
        %1001 = vmatprep.mubr.f32.mxu0 0.0
        %1002 = vmatmul.mubr.f32.gmra.mrb[0].mxu0 %v608
        %v1003 = vpop.f32.mrb[0].mxu0
        %v1004 = vadd.f32 0.0, %v1003
        %v1005 = vpop.f32.mrb[0].mxu0
        %v1006 = vadd.f32 0.0, %v1005
        %1007 = vmatprep.mubr.f32.mxu0 0.0
        %1008 = vmatmul.mubr.f32.gmra.mrb[0].mxu0 %v611
        %v1009 = vpop.f32.mrb[0].mxu0
        %v1010 = vadd.f32 0.0, %v1009
        %v1011 = vpop.f32.mrb[0].mxu0
        %v1012 = vadd.f32 0.0, %v1011
        %1013 = vmatprep.mubr.f32.mxu0 0.0
        %1014 = vmatmul.mubr.f32.gmra.mrb[0].mxu0 %v614
        %v1015 = vpop.f32.mrb[0].mxu0
        %v1016 = vadd.f32 0.0, %v1015
        %v1017 = vpop.f32.mrb[0].mxu0
        %v1018 = vadd.f32 0.0, %v1017
        %1019 = vmatprep.mubr.f32.mxu0 0.0
        %1020 = vmatmul.mubr.f32.gmra.mrb[0].mxu0 %v617
        %v1021 = vpop.f32.mrb[0].mxu0
        %v1022 = vadd.f32 0.0, %v1021
        %v1023 = vpop.f32.mrb[0].mxu0
        %v1024 = vadd.f32 0.0, %v1023
        %1025 = vmatprep.mubr.f32.mxu0 0.0
        %1026 = vmatmul.mubr.f32.gmra.mrb[0].mxu0 %v620
        %v1027 = vpop.f32.mrb[0].mxu0
        %v1028 = vadd.f32 0.0, %v1027
        %v1029 = vpop.f32.mrb[0].mxu0
        %v1030 = vadd.f32 0.0, %v1029
        %1031 = vmatprep.mubr.f32.mxu0 0.0
        %1032 = vmatmul.mubr.f32.gmra.mrb[0].mxu0 %v623
        %v1033 = vpop.f32.mrb[0].mxu0
        %v1034 = vadd.f32 0.0, %v1033
        %v1035 = vpop.f32.mrb[0].mxu0
        %v1036 = vadd.f32 0.0, %v1035
        %1037 = vmatprep.mubr.f32.mxu0 0.0
        %1038 = vmatmul.mubr.f32.gmra.mrb[0].mxu0 %v626
        %v1039 = vpop.f32.mrb[0].mxu0
        %v1040 = vadd.f32 0.0, %v1039
        %v1041 = vpop.f32.mrb[0].mxu0
        %v1042 = vadd.f32 0.0, %v1041
        %1043 = vmatprep.mubr.f32.mxu0 0.0
        %1044 = vmatmul.mubr.f32.gmra.mrb[0].mxu0 %v629
        %v1045 = vpop.f32.mrb[0].mxu0
        %v1046 = vadd.f32 0.0, %v1045
        %v1047 = vpop.f32.mrb[0].mxu0
        %v1048 = vadd.f32 0.0, %v1047
        %1049 = vmatprep.mubr.f32.mxu0 0.0
        %1050 = vmatmul.mubr.f32.gmra.mrb[0].mxu0 %v632
        %v1051 = vpop.f32.mrb[0].mxu0
        %v1052 = vadd.f32 0.0, %v1051
        %v1053 = vpop.f32.mrb[0].mxu0
        %v1054 = vadd.f32 0.0, %v1053
        %1055 = vmatprep.mubr.f32.mxu0 0.0
        %1056 = vmatmul.mubr.f32.gmra.mrb[0].mxu0 %v635
        %v1057 = vpop.f32.mrb[0].mxu0
        %v1058 = vadd.f32 0.0, %v1057
        %v1059 = vpop.f32.mrb[0].mxu0
        %v1060 = vadd.f32 0.0, %v1059
        %1061 = vmatprep.mubr.f32.mxu0 0.0
        %1062 = vmatmul.mubr.f32.gmra.mrb[0].mxu0 %v638
        %v1063 = vpop.f32.mrb[0].mxu0
        %v1064 = vadd.f32 0.0, %v1063
        %v1065 = vpop.f32.mrb[0].mxu0
        %v1066 = vadd.f32 0.0, %v1065
        %1067 = vmatprep.mubr.f32.mxu0 0.0
        %1068 = vmatmul.mubr.f32.gmra.mrb[0].mxu0 %v641
        %v1069 = vpop.f32.mrb[0].mxu0
        %v1070 = vadd.f32 0.0, %v1069
        %v1071 = vpop.f32.mrb[0].mxu0
        %v1072 = vadd.f32 0.0, %v1071
        %1073 = vmatprep.mubr.f32.mxu0 0.0
        %1074 = vmatmul.mubr.f32.gmra.mrb[0].mxu0 %v644
        %v1075 = vpop.f32.mrb[0].mxu0
        %v1076 = vadd.f32 0.0, %v1075
        %v1077 = vpop.f32.mrb[0].mxu0
        %v1078 = vadd.f32 0.0, %v1077
        %1079 = vmatprep.mubr.f32.mxu0 0.0
        %1080 = vmatmul.mubr.f32.gmra.mrb[0].mxu0 %v647
        %v1081 = vpop.f32.mrb[0].mxu0
        %v1082 = vadd.f32 0.0, %v1081
        %v1083 = vpop.f32.mrb[0].mxu0
        %v1084 = vadd.f32 0.0, %v1083
        %1085 = vmatprep.mubr.f32.mxu0 0.0
        %1086 = vmatmul.mubr.f32.gmra.mrb[0].mxu0 %v650
        %v1087 = vpop.f32.mrb[0].mxu0
        %v1088 = vadd.f32 0.0, %v1087
        %v1089 = vpop.f32.mrb[0].mxu0
        %v1090 = vadd.f32 0.0, %v1089
        %1091 = vmatprep.mubr.f32.mxu0 0.0
        %1092 = vmatmul.mubr.f32.gmra.mrb[0].mxu0 %v653
        %v1093 = vpop.f32.mrb[0].mxu0
        %v1094 = vadd.f32 0.0, %v1093
        %v1095 = vpop.f32.mrb[0].mxu0
        %v1096 = vadd.f32 0.0, %v1095
        %1097 = vmatprep.mubr.f32.mxu0 0.0
        %1098 = vmatmul.mubr.f32.gmra.mrb[0].mxu0 %v656
        %v1099 = vpop.f32.mrb[0].mxu0
        %v1100 = vadd.f32 0.0, %v1099
        %v1101 = vpop.f32.mrb[0].mxu0
        %v1102 = vadd.f32 0.0, %v1101
        %1103 = vmatprep.mubr.f32.mxu0 0.0
        %1104 = vmatmul.mubr.f32.gmra.mrb[0].mxu0 %v659
        %v1105 = vpop.f32.mrb[0].mxu0
        %v1106 = vadd.f32 0.0, %v1105
        %v1107 = vpop.f32.mrb[0].mxu0
        %v1108 = vadd.f32 0.0, %v1107
        %1109 = vmatprep.mubr.f32.mxu0 0.0
        %1110 = vmatmul.mubr.f32.gmra.mrb[0].mxu0 %v662
        %v1111 = vpop.f32.mrb[0].mxu0
        %v1112 = vadd.f32 0.0, %v1111
        %v1113 = vpop.f32.mrb[0].mxu0
        %v1114 = vadd.f32 0.0, %v1113
        %1115 = vmatprep.mubr.f32.mxu0 0.0
        %1116 = vmatmul.mubr.f32.gmra.mrb[0].mxu0 %v665
        %v1117 = vpop.f32.mrb[0].mxu0
        %v1118 = vadd.f32 0.0, %v1117
        %v1119 = vpop.f32.mrb[0].mxu0
        %v1120 = vadd.f32 0.0, %v1119
        %1121 = vdwg.mxu0
        %v1123 = vsel %vm588, %v527, 0
        %v1126 = vsel %vm667, %v567, 0
        %v1129 = vsel %vm667, %v568, 0
        %v1132 = vsel %vm667, %v569, 0
        %v1135 = vsel %vm667, %v570, 0
        %1137 = vmatprep.subr.mxu0 %v556
        %1138 = vmatpush1.msra.mxu0 %v555
        %1139 = vmatprep.subr.mxu0 %v560
        %1140 = vmatpush1.msra.mxu0 %v559
        %1141 = vmatprep.subr.mxu0 %v564
        %1142 = vmatpush1.msra.mxu0 %v563
        %1143 = vmatprep.subr.mxu0 %v1129
        %1144 = vmatpush1.msra.mxu0 %v1126
        %1145 = vmatprep.subr.mxu0 0.0
        %1146 = vmatpush1.msra.mxu0 0.0
        %1147 = vmatprep.subr.mxu0 0.0
        %1148 = vmatpush1.msra.mxu0 0.0
        %1149 = vmatprep.subr.mxu0 0.0
        %1150 = vmatpush1.msra.mxu0 0.0
        %1151 = vmatprep.subr.mxu0 0.0
        %1152 = vmatpush1.msra.mxu0 0.0
        %1153 = vmatprep.subr.mxu0 0.0
        %1154 = vmatpush1.msra.mxu0 0.0
        %1155 = vmatprep.subr.mxu0 0.0
        %1156 = vmatpush1.msra.mxu0 0.0
        %1157 = vmatprep.subr.mxu0 0.0
        %1158 = vmatpush1.msra.mxu0 0.0
        %1159 = vmatprep.subr.mxu0 0.0
        %1160 = vmatpush1.msra.mxu0 0.0
        %1161 = vmatprep.subr.mxu0 0.0
        %1162 = vmatpush1.msra.mxu0 0.0
        %1163 = vmatprep.subr.mxu0 0.0
        %1164 = vmatpush1.msra.mxu0 0.0
        %1165 = vmatprep.subr.mxu0 0.0
        %1166 = vmatpush1.msra.mxu0 0.0
        %1167 = vmatprep.subr.mxu0 0.0
        %1168 = vmatpush1.msra.mxu0 0.0
        %1169 = vmatprep.subr.mxu0 0.0
        %1170 = vmatpush1.msra.mxu0 0.0
        %1171 = vmatprep.subr.mxu0 0.0
        %1172 = vmatpush1.msra.mxu0 0.0
        %1173 = vmatprep.subr.mxu0 0.0
        %1174 = vmatpush1.msra.mxu0 0.0
        %1175 = vmatprep.subr.mxu0 0.0
        %1176 = vmatpush1.msra.mxu0 0.0
        %1177 = vmatprep.subr.mxu0 0.0
        %1178 = vmatpush1.msra.mxu0 0.0
        %1179 = vmatprep.subr.mxu0 0.0
        %1180 = vmatpush1.msra.mxu0 0.0
        %1181 = vmatprep.subr.mxu0 0.0
        %1182 = vmatpush1.msra.mxu0 0.0
        %1183 = vmatprep.subr.mxu0 0.0
        %1184 = vmatpush1.msra.mxu0 0.0
        %1185 = vmatprep.subr.mxu0 0.0
        %1186 = vmatpush1.msra.mxu0 0.0
        %1187 = vmatprep.subr.mxu0 0.0
        %1188 = vmatpush1.msra.mxu0 0.0
        %1189 = vmatprep.subr.mxu0 0.0
        %1190 = vmatpush1.msra.mxu0 0.0
        %1191 = vmatprep.subr.mxu0 0.0
        %1192 = vmatpush1.msra.mxu0 0.0
        %1193 = vmatprep.subr.mxu0 0.0
        %1194 = vmatpush1.msra.mxu0 0.0
        %1195 = vmatprep.subr.mxu0 0.0
        %1196 = vmatpush1.msra.mxu0 0.0
        %1197 = vmatprep.subr.mxu0 0.0
        %1198 = vmatpush1.msra.mxu0 0.0
        %1199 = vmatprep.subr.mxu0 0.0
        %1200 = vmatpush1.msra.mxu0 0.0
        %1201 = vmatprep.mubr.f32.mxu0 0.0
        %1202 = vmatmul.mubr.f32.gmra.mrb[0].mxu0 %v1123
        %v1203 = vpop.f32.mrb[0].mxu0
        %v1204 = vadd.f32 %v747, %v1203
        %v1205 = vpop.f32.mrb[0].mxu0
        %v1206 = vadd.f32 %v749, %v1205
        %1207 = vmatprep.mubr.f32.mxu0 0.0
        %1208 = vmatmul.mubr.f32.gmra.mrb[0].mxu0 %v590
        %v1209 = vpop.f32.mrb[0].mxu0
        %v1210 = vadd.f32 %v753, %v1209
        %v1211 = vpop.f32.mrb[0].mxu0
        %v1212 = vadd.f32 %v755, %v1211
        %1213 = vmatprep.mubr.f32.mxu0 0.0
        %1214 = vmatmul.mubr.f32.gmra.mrb[0].mxu0 %v593
        %v1215 = vpop.f32.mrb[0].mxu0
        %v1216 = vadd.f32 %v759, %v1215
        %v1217 = vpop.f32.mrb[0].mxu0
        %v1218 = vadd.f32 %v761, %v1217
        %1219 = vmatprep.mubr.f32.mxu0 0.0
        %1220 = vmatmul.mubr.f32.gmra.mrb[0].mxu0 %v596
        %v1221 = vpop.f32.mrb[0].mxu0
        %v1222 = vadd.f32 %v765, %v1221
        %v1223 = vpop.f32.mrb[0].mxu0
        %v1224 = vadd.f32 %v767, %v1223
        %1225 = vmatprep.mubr.f32.mxu0 0.0
        %1226 = vmatmul.mubr.f32.gmra.mrb[0].mxu0 %v599
        %v1227 = vpop.f32.mrb[0].mxu0
        %v1228 = vadd.f32 %v771, %v1227
        %v1229 = vpop.f32.mrb[0].mxu0
        %v1230 = vadd.f32 %v773, %v1229
        %1231 = vmatprep.mubr.f32.mxu0 0.0
        %1232 = vmatmul.mubr.f32.gmra.mrb[0].mxu0 %v602
        %v1233 = vpop.f32.mrb[0].mxu0
        %v1234 = vadd.f32 %v777, %v1233
        %v1235 = vpop.f32.mrb[0].mxu0
        %v1236 = vadd.f32 %v779, %v1235
        %1237 = vmatprep.mubr.f32.mxu0 0.0
        %1238 = vmatmul.mubr.f32.gmra.mrb[0].mxu0 %v605
        %v1239 = vpop.f32.mrb[0].mxu0
        %v1240 = vadd.f32 %v783, %v1239
        %v1241 = vpop.f32.mrb[0].mxu0
        %v1242 = vadd.f32 %v785, %v1241
        %1243 = vmatprep.mubr.f32.mxu0 0.0
        %1244 = vmatmul.mubr.f32.gmra.mrb[0].mxu0 %v608
        %v1245 = vpop.f32.mrb[0].mxu0
        %v1246 = vadd.f32 %v789, %v1245
        %v1247 = vpop.f32.mrb[0].mxu0
        %v1248 = vadd.f32 %v791, %v1247
        %1249 = vmatprep.mubr.f32.mxu0 0.0
        %1250 = vmatmul.mubr.f32.gmra.mrb[0].mxu0 %v611
        %v1251 = vpop.f32.mrb[0].mxu0
        %v1252 = vadd.f32 %v795, %v1251
        %v1253 = vpop.f32.mrb[0].mxu0
        %v1254 = vadd.f32 %v797, %v1253
        %1255 = vmatprep.mubr.f32.mxu0 0.0
        %1256 = vmatmul.mubr.f32.gmra.mrb[0].mxu0 %v614
        %v1257 = vpop.f32.mrb[0].mxu0
        %v1258 = vadd.f32 %v801, %v1257
        %v1259 = vpop.f32.mrb[0].mxu0
        %v1260 = vadd.f32 %v803, %v1259
        %1261 = vmatprep.mubr.f32.mxu0 0.0
        %1262 = vmatmul.mubr.f32.gmra.mrb[0].mxu0 %v617
        %v1263 = vpop.f32.mrb[0].mxu0
        %v1264 = vadd.f32 %v807, %v1263
        %v1265 = vpop.f32.mrb[0].mxu0
        %v1266 = vadd.f32 %v809, %v1265
        %1267 = vmatprep.mubr.f32.mxu0 0.0
        %1268 = vmatmul.mubr.f32.gmra.mrb[0].mxu0 %v620
        %v1269 = vpop.f32.mrb[0].mxu0
        %v1270 = vadd.f32 %v813, %v1269
        %v1271 = vpop.f32.mrb[0].mxu0
        %v1272 = vadd.f32 %v815, %v1271
        %1273 = vmatprep.mubr.f32.mxu0 0.0
        %1274 = vmatmul.mubr.f32.gmra.mrb[0].mxu0 %v623
        %v1275 = vpop.f32.mrb[0].mxu0
        %v1276 = vadd.f32 %v819, %v1275
        %v1277 = vpop.f32.mrb[0].mxu0
        %v1278 = vadd.f32 %v821, %v1277
        %1279 = vmatprep.mubr.f32.mxu0 0.0
        %1280 = vmatmul.mubr.f32.gmra.mrb[0].mxu0 %v626
        %v1281 = vpop.f32.mrb[0].mxu0
        %v1282 = vadd.f32 %v825, %v1281
        %v1283 = vpop.f32.mrb[0].mxu0
        %v1284 = vadd.f32 %v827, %v1283
        %1285 = vmatprep.mubr.f32.mxu0 0.0
        %1286 = vmatmul.mubr.f32.gmra.mrb[0].mxu0 %v629
        %v1287 = vpop.f32.mrb[0].mxu0
        %v1288 = vadd.f32 %v831, %v1287
        %v1289 = vpop.f32.mrb[0].mxu0
        %v1290 = vadd.f32 %v833, %v1289
        %1291 = vmatprep.mubr.f32.mxu0 0.0
        %1292 = vmatmul.mubr.f32.gmra.mrb[0].mxu0 %v632
        %v1293 = vpop.f32.mrb[0].mxu0
        %v1294 = vadd.f32 %v837, %v1293
        %v1295 = vpop.f32.mrb[0].mxu0
        %v1296 = vadd.f32 %v839, %v1295
        %1297 = vmatprep.mubr.f32.mxu0 0.0
        %1298 = vmatmul.mubr.f32.gmra.mrb[0].mxu0 %v635
        %v1299 = vpop.f32.mrb[0].mxu0
        %v1300 = vadd.f32 %v843, %v1299
        %v1301 = vpop.f32.mrb[0].mxu0
        %v1302 = vadd.f32 %v845, %v1301
        %1303 = vmatprep.mubr.f32.mxu0 0.0
        %1304 = vmatmul.mubr.f32.gmra.mrb[0].mxu0 %v638
        %v1305 = vpop.f32.mrb[0].mxu0
        %v1306 = vadd.f32 %v849, %v1305
        %v1307 = vpop.f32.mrb[0].mxu0
        %v1308 = vadd.f32 %v851, %v1307
        %1309 = vmatprep.mubr.f32.mxu0 0.0
        %1310 = vmatmul.mubr.f32.gmra.mrb[0].mxu0 %v641
        %v1311 = vpop.f32.mrb[0].mxu0
        %v1312 = vadd.f32 %v855, %v1311
        %v1313 = vpop.f32.mrb[0].mxu0
        %v1314 = vadd.f32 %v857, %v1313
        %1315 = vmatprep.mubr.f32.mxu0 0.0
        %1316 = vmatmul.mubr.f32.gmra.mrb[0].mxu0 %v644
        %v1317 = vpop.f32.mrb[0].mxu0
        %v1318 = vadd.f32 %v861, %v1317
        %v1319 = vpop.f32.mrb[0].mxu0
        %v1320 = vadd.f32 %v863, %v1319
        %1321 = vmatprep.mubr.f32.mxu0 0.0
        %1322 = vmatmul.mubr.f32.gmra.mrb[0].mxu0 %v647
        %v1323 = vpop.f32.mrb[0].mxu0
        %v1324 = vadd.f32 %v867, %v1323
        %v1325 = vpop.f32.mrb[0].mxu0
        %v1326 = vadd.f32 %v869, %v1325
        %1327 = vmatprep.mubr.f32.mxu0 0.0
        %1328 = vmatmul.mubr.f32.gmra.mrb[0].mxu0 %v650
        %v1329 = vpop.f32.mrb[0].mxu0
        %v1330 = vadd.f32 %v873, %v1329
        %v1331 = vpop.f32.mrb[0].mxu0
        %v1332 = vadd.f32 %v875, %v1331
        %1333 = vmatprep.mubr.f32.mxu0 0.0
        %1334 = vmatmul.mubr.f32.gmra.mrb[0].mxu0 %v653
        %v1335 = vpop.f32.mrb[0].mxu0
        %v1336 = vadd.f32 %v879, %v1335
        %v1337 = vpop.f32.mrb[0].mxu0
        %v1338 = vadd.f32 %v881, %v1337
        %1339 = vmatprep.mubr.f32.mxu0 0.0
        %1340 = vmatmul.mubr.f32.gmra.mrb[0].mxu0 %v656
        %v1341 = vpop.f32.mrb[0].mxu0
        %v1342 = vadd.f32 %v885, %v1341
        %v1343 = vpop.f32.mrb[0].mxu0
        %v1344 = vadd.f32 %v887, %v1343
        %1345 = vmatprep.mubr.f32.mxu0 0.0
        %1346 = vmatmul.mubr.f32.gmra.mrb[0].mxu0 %v659
        %v1347 = vpop.f32.mrb[0].mxu0
        %v1348 = vadd.f32 %v891, %v1347
        %v1349 = vpop.f32.mrb[0].mxu0
        %v1350 = vadd.f32 %v893, %v1349
        %1351 = vmatprep.mubr.f32.mxu0 0.0
        %1352 = vmatmul.mubr.f32.gmra.mrb[0].mxu0 %v662
        %v1353 = vpop.f32.mrb[0].mxu0
        %v1354 = vadd.f32 %v897, %v1353
        %v1355 = vpop.f32.mrb[0].mxu0
        %v1356 = vadd.f32 %v899, %v1355
        %1357 = vdwg.mxu0
        %1358 = vmatprep.subr.mxu0 %v558
        %1359 = vmatpush1.msra.mxu0 %v557
        %1360 = vmatprep.subr.mxu0 %v562
        %1361 = vmatpush1.msra.mxu0 %v561
        %1362 = vmatprep.subr.mxu0 %v566
        %1363 = vmatpush1.msra.mxu0 %v565
        %1364 = vmatprep.subr.mxu0 %v1135
        %1365 = vmatpush1.msra.mxu0 %v1132
        %1366 = vmatprep.subr.mxu0 0.0
        %1367 = vmatpush1.msra.mxu0 0.0
        %1368 = vmatprep.subr.mxu0 0.0
        %1369 = vmatpush1.msra.mxu0 0.0
        %1370 = vmatprep.subr.mxu0 0.0
        %1371 = vmatpush1.msra.mxu0 0.0
        %1372 = vmatprep.subr.mxu0 0.0
        %1373 = vmatpush1.msra.mxu0 0.0
        %1374 = vmatprep.subr.mxu0 0.0
        %1375 = vmatpush1.msra.mxu0 0.0
        %1376 = vmatprep.subr.mxu0 0.0
        %1377 = vmatpush1.msra.mxu0 0.0
        %1378 = vmatprep.subr.mxu0 0.0
        %1379 = vmatpush1.msra.mxu0 0.0
        %1380 = vmatprep.subr.mxu0 0.0
        %1381 = vmatpush1.msra.mxu0 0.0
        %1382 = vmatprep.subr.mxu0 0.0
        %1383 = vmatpush1.msra.mxu0 0.0
        %1384 = vmatprep.subr.mxu0 0.0
        %1385 = vmatpush1.msra.mxu0 0.0
        %1386 = vmatprep.subr.mxu0 0.0
        %1387 = vmatpush1.msra.mxu0 0.0
        %1388 = vmatprep.subr.mxu0 0.0
        %1389 = vmatpush1.msra.mxu0 0.0
        %1390 = vmatprep.subr.mxu0 0.0
        %1391 = vmatpush1.msra.mxu0 0.0
        %1392 = vmatprep.subr.mxu0 0.0
        %1393 = vmatpush1.msra.mxu0 0.0
        %1394 = vmatprep.subr.mxu0 0.0
        %1395 = vmatpush1.msra.mxu0 0.0
        %1396 = vmatprep.subr.mxu0 0.0
        %1397 = vmatpush1.msra.mxu0 0.0
        %1398 = vmatprep.subr.mxu0 0.0
        %1399 = vmatpush1.msra.mxu0 0.0
        %1400 = vmatprep.subr.mxu0 0.0
        %1401 = vmatpush1.msra.mxu0 0.0
        %1402 = vmatprep.subr.mxu0 0.0
        %1403 = vmatpush1.msra.mxu0 0.0
        %1404 = vmatprep.subr.mxu0 0.0
        %1405 = vmatpush1.msra.mxu0 0.0
        %1406 = vmatprep.subr.mxu0 0.0
        %1407 = vmatpush1.msra.mxu0 0.0
        %1408 = vmatprep.subr.mxu0 0.0
        %1409 = vmatpush1.msra.mxu0 0.0
        %1410 = vmatprep.subr.mxu0 0.0
        %1411 = vmatpush1.msra.mxu0 0.0
        %1412 = vmatprep.subr.mxu0 0.0
        %1413 = vmatpush1.msra.mxu0 0.0
        %1414 = vmatprep.subr.mxu0 0.0
        %1415 = vmatpush1.msra.mxu0 0.0
        %1416 = vmatprep.subr.mxu0 0.0
        %1417 = vmatpush1.msra.mxu0 0.0
        %1418 = vmatprep.subr.mxu0 0.0
        %1419 = vmatpush1.msra.mxu0 0.0
        %1420 = vmatprep.subr.mxu0 0.0
        %1421 = vmatpush1.msra.mxu0 0.0
        %1422 = vmatprep.mubr.f32.mxu0 0.0
        %1423 = vmatmul.mubr.f32.gmra.mrb[0].mxu0 %v1123
        %v1424 = vpop.f32.mrb[0].mxu0
        %v1425 = vadd.f32 %v968, %v1424
        %v1426 = vpop.f32.mrb[0].mxu0
        %v1427 = vadd.f32 %v970, %v1426
        %1428 = vmatprep.mubr.f32.mxu0 0.0
        %1429 = vmatmul.mubr.f32.gmra.mrb[0].mxu0 %v590
        %v1430 = vpop.f32.mrb[0].mxu0
        %v1431 = vadd.f32 %v974, %v1430
        %v1432 = vpop.f32.mrb[0].mxu0
        %v1433 = vadd.f32 %v976, %v1432
        %1434 = vmatprep.mubr.f32.mxu0 0.0
        %1435 = vmatmul.mubr.f32.gmra.mrb[0].mxu0 %v593
        %v1436 = vpop.f32.mrb[0].mxu0
        %v1437 = vadd.f32 %v980, %v1436
        %v1438 = vpop.f32.mrb[0].mxu0
        %v1439 = vadd.f32 %v982, %v1438
        %1440 = vmatprep.mubr.f32.mxu0 0.0
        %1441 = vmatmul.mubr.f32.gmra.mrb[0].mxu0 %v596
        %v1442 = vpop.f32.mrb[0].mxu0
        %v1443 = vadd.f32 %v986, %v1442
        %v1444 = vpop.f32.mrb[0].mxu0
        %v1445 = vadd.f32 %v988, %v1444
        %1446 = vmatprep.mubr.f32.mxu0 0.0
        %1447 = vmatmul.mubr.f32.gmra.mrb[0].mxu0 %v599
        %v1448 = vpop.f32.mrb[0].mxu0
        %v1449 = vadd.f32 %v992, %v1448
        %v1450 = vpop.f32.mrb[0].mxu0
        %v1451 = vadd.f32 %v994, %v1450
        %1452 = vmatprep.mubr.f32.mxu0 0.0
        %1453 = vmatmul.mubr.f32.gmra.mrb[0].mxu0 %v602
        %v1454 = vpop.f32.mrb[0].mxu0
        %v1455 = vadd.f32 %v998, %v1454
        %v1456 = vpop.f32.mrb[0].mxu0
        %v1457 = vadd.f32 %v1000, %v1456
        %1458 = vmatprep.mubr.f32.mxu0 0.0
        %1459 = vmatmul.mubr.f32.gmra.mrb[0].mxu0 %v605
        %v1460 = vpop.f32.mrb[0].mxu0
        %v1461 = vadd.f32 %v1004, %v1460
        %v1462 = vpop.f32.mrb[0].mxu0
        %v1463 = vadd.f32 %v1006, %v1462
        %1464 = vmatprep.mubr.f32.mxu0 0.0
        %1465 = vmatmul.mubr.f32.gmra.mrb[0].mxu0 %v608
        %v1466 = vpop.f32.mrb[0].mxu0
        %v1467 = vadd.f32 %v1010, %v1466
        %v1468 = vpop.f32.mrb[0].mxu0
        %v1469 = vadd.f32 %v1012, %v1468
        %1470 = vmatprep.mubr.f32.mxu0 0.0
        %1471 = vmatmul.mubr.f32.gmra.mrb[0].mxu0 %v611
        %v1472 = vpop.f32.mrb[0].mxu0
        %v1473 = vadd.f32 %v1016, %v1472
        %v1474 = vpop.f32.mrb[0].mxu0
        %v1475 = vadd.f32 %v1018, %v1474
        %1476 = vmatprep.mubr.f32.mxu0 0.0
        %1477 = vmatmul.mubr.f32.gmra.mrb[0].mxu0 %v614
        %v1478 = vpop.f32.mrb[0].mxu0
        %v1479 = vadd.f32 %v1022, %v1478
        %v1480 = vpop.f32.mrb[0].mxu0
        %v1481 = vadd.f32 %v1024, %v1480
        %1482 = vmatprep.mubr.f32.mxu0 0.0
        %1483 = vmatmul.mubr.f32.gmra.mrb[0].mxu0 %v617
        %v1484 = vpop.f32.mrb[0].mxu0
        %v1485 = vadd.f32 %v1028, %v1484
        %v1486 = vpop.f32.mrb[0].mxu0
        %v1487 = vadd.f32 %v1030, %v1486
        %1488 = vmatprep.mubr.f32.mxu0 0.0
        %1489 = vmatmul.mubr.f32.gmra.mrb[0].mxu0 %v620
        %v1490 = vpop.f32.mrb[0].mxu0
        %v1491 = vadd.f32 %v1034, %v1490
        %v1492 = vpop.f32.mrb[0].mxu0
        %v1493 = vadd.f32 %v1036, %v1492
        %1494 = vmatprep.mubr.f32.mxu0 0.0
        %1495 = vmatmul.mubr.f32.gmra.mrb[0].mxu0 %v623
        %v1496 = vpop.f32.mrb[0].mxu0
        %v1497 = vadd.f32 %v1040, %v1496
        %v1498 = vpop.f32.mrb[0].mxu0
        %v1499 = vadd.f32 %v1042, %v1498
        %1500 = vmatprep.mubr.f32.mxu0 0.0
        %1501 = vmatmul.mubr.f32.gmra.mrb[0].mxu0 %v626
        %v1502 = vpop.f32.mrb[0].mxu0
        %v1503 = vadd.f32 %v1046, %v1502
        %v1504 = vpop.f32.mrb[0].mxu0
        %v1505 = vadd.f32 %v1048, %v1504
        %1506 = vmatprep.mubr.f32.mxu0 0.0
        %1507 = vmatmul.mubr.f32.gmra.mrb[0].mxu0 %v629
        %v1508 = vpop.f32.mrb[0].mxu0
        %v1509 = vadd.f32 %v1052, %v1508
        %v1510 = vpop.f32.mrb[0].mxu0
        %v1511 = vadd.f32 %v1054, %v1510
        %1512 = vmatprep.mubr.f32.mxu0 0.0
        %1513 = vmatmul.mubr.f32.gmra.mrb[0].mxu0 %v632
        %v1514 = vpop.f32.mrb[0].mxu0
        %v1515 = vadd.f32 %v1058, %v1514
        %v1516 = vpop.f32.mrb[0].mxu0
        %v1517 = vadd.f32 %v1060, %v1516
        %1518 = vmatprep.mubr.f32.mxu0 0.0
        %1519 = vmatmul.mubr.f32.gmra.mrb[0].mxu0 %v635
        %v1520 = vpop.f32.mrb[0].mxu0
        %v1521 = vadd.f32 %v1064, %v1520
        %v1522 = vpop.f32.mrb[0].mxu0
        %v1523 = vadd.f32 %v1066, %v1522
        %1524 = vmatprep.mubr.f32.mxu0 0.0
        %1525 = vmatmul.mubr.f32.gmra.mrb[0].mxu0 %v638
        %v1526 = vpop.f32.mrb[0].mxu0
        %v1527 = vadd.f32 %v1070, %v1526
        %v1528 = vpop.f32.mrb[0].mxu0
        %v1529 = vadd.f32 %v1072, %v1528
        %1530 = vmatprep.mubr.f32.mxu0 0.0
        %1531 = vmatmul.mubr.f32.gmra.mrb[0].mxu0 %v641
        %v1532 = vpop.f32.mrb[0].mxu0
        %v1533 = vadd.f32 %v1076, %v1532
        %v1534 = vpop.f32.mrb[0].mxu0
        %v1535 = vadd.f32 %v1078, %v1534
        %1536 = vmatprep.mubr.f32.mxu0 0.0
        %1537 = vmatmul.mubr.f32.gmra.mrb[0].mxu0 %v644
        %v1538 = vpop.f32.mrb[0].mxu0
        %v1539 = vadd.f32 %v1082, %v1538
        %v1540 = vpop.f32.mrb[0].mxu0
        %v1541 = vadd.f32 %v1084, %v1540
        %1542 = vmatprep.mubr.f32.mxu0 0.0
        %1543 = vmatmul.mubr.f32.gmra.mrb[0].mxu0 %v647
        %v1544 = vpop.f32.mrb[0].mxu0
        %v1545 = vadd.f32 %v1088, %v1544
        %v1546 = vpop.f32.mrb[0].mxu0
        %v1547 = vadd.f32 %v1090, %v1546
        %1548 = vmatprep.mubr.f32.mxu0 0.0
        %1549 = vmatmul.mubr.f32.gmra.mrb[0].mxu0 %v650
        %v1550 = vpop.f32.mrb[0].mxu0
        %v1551 = vadd.f32 %v1094, %v1550
        %v1552 = vpop.f32.mrb[0].mxu0
        %v1553 = vadd.f32 %v1096, %v1552
        %1554 = vmatprep.mubr.f32.mxu0 0.0
        %1555 = vmatmul.mubr.f32.gmra.mrb[0].mxu0 %v653
        %v1556 = vpop.f32.mrb[0].mxu0
        %v1557 = vadd.f32 %v1100, %v1556
        %v1558 = vpop.f32.mrb[0].mxu0
        %v1559 = vadd.f32 %v1102, %v1558
        %1560 = vmatprep.mubr.f32.mxu0 0.0
        %1561 = vmatmul.mubr.f32.gmra.mrb[0].mxu0 %v656
        %v1562 = vpop.f32.mrb[0].mxu0
        %v1563 = vadd.f32 %v1106, %v1562
        %v1564 = vpop.f32.mrb[0].mxu0
        %v1565 = vadd.f32 %v1108, %v1564
        %1566 = vmatprep.mubr.f32.mxu0 0.0
        %1567 = vmatmul.mubr.f32.gmra.mrb[0].mxu0 %v659
        %v1568 = vpop.f32.mrb[0].mxu0
        %v1569 = vadd.f32 %v1112, %v1568
        %v1570 = vpop.f32.mrb[0].mxu0
        %v1571 = vadd.f32 %v1114, %v1570
        %1572 = vmatprep.mubr.f32.mxu0 0.0
        %1573 = vmatmul.mubr.f32.gmra.mrb[0].mxu0 %v662
        %v1574 = vpop.f32.mrb[0].mxu0
        %v1575 = vadd.f32 %v1118, %v1574
        %v1576 = vpop.f32.mrb[0].mxu0
        %v1577 = vadd.f32 %v1120, %v1576
        %1578 = vdwg.mxu0
        %s1579 = scalar_lea.vmem %s1, 256
        %v1580 = vld [vmem:[%s1579] sm:$0xff]
        %v1581 = vld [vmem:[%s1579 + $0x8] sm:$0xff]
        %v1582 = vld [vmem:[%s1579 + $0x10] sm:$0xff]
        %v1583 = vld [vmem:[%s1579 + $0x18] sm:$0xff]
        %v1584 = vld [vmem:[%s1579 + $0x20] sm:$0xff]
        %v1585 = vld [vmem:[%s1579 + $0x28] sm:$0xff]
        %v1586 = vld [vmem:[%s1579 + $0x30] sm:$0xff]
        %v1587 = vld [vmem:[%s1579 + $0x38] sm:$0xff]
        %v1588 = vld [vmem:[%s1579 + $0x40] sm:$0xff]
        %v1589 = vld [vmem:[%s1579 + $0x48] sm:$0xff]
        %v1590 = vld [vmem:[%s1579 + $0x50] sm:$0xff]
        %v1591 = vld [vmem:[%s1579 + $0x58] sm:$0xff]
        %v1592 = vld [vmem:[%s1579 + $0x60] sm:$0xf]
        %v1593 = vld [vmem:[%s1579 + $0x68] sm:$0xf]
        %v1594 = vld [vmem:[%s1579 + $0x70] sm:$0xf]
        %v1595 = vld [vmem:[%s1579 + $0x78] sm:$0xf]
        %v1597 = vsel %vm588, %v554, 0
        %v1600 = vsel %vm667, %v1592, 0
        %v1603 = vsel %vm667, %v1593, 0
        %v1606 = vsel %vm667, %v1594, 0
        %v1609 = vsel %vm667, %v1595, 0
        %1611 = vmatprep.subr.mxu0 %v1581
        %1612 = vmatpush1.msra.mxu0 %v1580
        %1613 = vmatprep.subr.mxu0 %v1585
        %1614 = vmatpush1.msra.mxu0 %v1584
        %1615 = vmatprep.subr.mxu0 %v1589
        %1616 = vmatpush1.msra.mxu0 %v1588
        %1617 = vmatprep.subr.mxu0 %v1603
        %1618 = vmatpush1.msra.mxu0 %v1600
        %1619 = vmatprep.subr.mxu0 0.0
        %1620 = vmatpush1.msra.mxu0 0.0
        %1621 = vmatprep.subr.mxu0 0.0
        %1622 = vmatpush1.msra.mxu0 0.0
        %1623 = vmatprep.subr.mxu0 0.0
        %1624 = vmatpush1.msra.mxu0 0.0
        %1625 = vmatprep.subr.mxu0 0.0
        %1626 = vmatpush1.msra.mxu0 0.0
        %1627 = vmatprep.subr.mxu0 0.0
        %1628 = vmatpush1.msra.mxu0 0.0
        %1629 = vmatprep.subr.mxu0 0.0
        %1630 = vmatpush1.msra.mxu0 0.0
        %1631 = vmatprep.subr.mxu0 0.0
        %1632 = vmatpush1.msra.mxu0 0.0
        %1633 = vmatprep.subr.mxu0 0.0
        %1634 = vmatpush1.msra.mxu0 0.0
        %1635 = vmatprep.subr.mxu0 0.0
        %1636 = vmatpush1.msra.mxu0 0.0
        %1637 = vmatprep.subr.mxu0 0.0
        %1638 = vmatpush1.msra.mxu0 0.0
        %1639 = vmatprep.subr.mxu0 0.0
        %1640 = vmatpush1.msra.mxu0 0.0
        %1641 = vmatprep.subr.mxu0 0.0
        %1642 = vmatpush1.msra.mxu0 0.0
        %1643 = vmatprep.subr.mxu0 0.0
        %1644 = vmatpush1.msra.mxu0 0.0
        %1645 = vmatprep.subr.mxu0 0.0
        %1646 = vmatpush1.msra.mxu0 0.0
        %1647 = vmatprep.subr.mxu0 0.0
        %1648 = vmatpush1.msra.mxu0 0.0
        %1649 = vmatprep.subr.mxu0 0.0
        %1650 = vmatpush1.msra.mxu0 0.0
        %1651 = vmatprep.subr.mxu0 0.0
        %1652 = vmatpush1.msra.mxu0 0.0
        %1653 = vmatprep.subr.mxu0 0.0
        %1654 = vmatpush1.msra.mxu0 0.0
        %1655 = vmatprep.subr.mxu0 0.0
        %1656 = vmatpush1.msra.mxu0 0.0
        %1657 = vmatprep.subr.mxu0 0.0
        %1658 = vmatpush1.msra.mxu0 0.0
        %1659 = vmatprep.subr.mxu0 0.0
        %1660 = vmatpush1.msra.mxu0 0.0
        %1661 = vmatprep.subr.mxu0 0.0
        %1662 = vmatpush1.msra.mxu0 0.0
        %1663 = vmatprep.subr.mxu0 0.0
        %1664 = vmatpush1.msra.mxu0 0.0
        %1665 = vmatprep.subr.mxu0 0.0
        %1666 = vmatpush1.msra.mxu0 0.0
        %1667 = vmatprep.subr.mxu0 0.0
        %1668 = vmatpush1.msra.mxu0 0.0
        %1669 = vmatprep.subr.mxu0 0.0
        %1670 = vmatpush1.msra.mxu0 0.0
        %1671 = vmatprep.subr.mxu0 0.0
        %1672 = vmatpush1.msra.mxu0 0.0
        %1673 = vmatprep.subr.mxu0 0.0
        %1674 = vmatpush1.msra.mxu0 0.0
        %1675 = vmatprep.mubr.f32.mxu0 0.0
        %1676 = vmatmul.mubr.f32.gmra.mrb[0].mxu0 %v593
        %v1677 = vpop.f32.mrb[0].mxu0
        %v1678 = vadd.f32 0.0, %v1677
        %v1679 = vpop.f32.mrb[0].mxu0
        %v1680 = vadd.f32 0.0, %v1679
        %1681 = vmatprep.mubr.f32.mxu0 0.0
        %1682 = vmatmul.mubr.f32.gmra.mrb[0].mxu0 %v596
        %v1683 = vpop.f32.mrb[0].mxu0
        %v1684 = vadd.f32 0.0, %v1683
        %v1685 = vpop.f32.mrb[0].mxu0
        %v1686 = vadd.f32 0.0, %v1685
        %1687 = vmatprep.mubr.f32.mxu0 0.0
        %1688 = vmatmul.mubr.f32.gmra.mrb[0].mxu0 %v599
        %v1689 = vpop.f32.mrb[0].mxu0
        %v1690 = vadd.f32 0.0, %v1689
        %v1691 = vpop.f32.mrb[0].mxu0
        %v1692 = vadd.f32 0.0, %v1691
        %1693 = vmatprep.mubr.f32.mxu0 0.0
        %1694 = vmatmul.mubr.f32.gmra.mrb[0].mxu0 %v602
        %v1695 = vpop.f32.mrb[0].mxu0
        %v1696 = vadd.f32 0.0, %v1695
        %v1697 = vpop.f32.mrb[0].mxu0
        %v1698 = vadd.f32 0.0, %v1697
        %1699 = vmatprep.mubr.f32.mxu0 0.0
        %1700 = vmatmul.mubr.f32.gmra.mrb[0].mxu0 %v605
        %v1701 = vpop.f32.mrb[0].mxu0
        %v1702 = vadd.f32 0.0, %v1701
        %v1703 = vpop.f32.mrb[0].mxu0
        %v1704 = vadd.f32 0.0, %v1703
        %1705 = vmatprep.mubr.f32.mxu0 0.0
        %1706 = vmatmul.mubr.f32.gmra.mrb[0].mxu0 %v608
        %v1707 = vpop.f32.mrb[0].mxu0
        %v1708 = vadd.f32 0.0, %v1707
        %v1709 = vpop.f32.mrb[0].mxu0
        %v1710 = vadd.f32 0.0, %v1709
        %1711 = vmatprep.mubr.f32.mxu0 0.0
        %1712 = vmatmul.mubr.f32.gmra.mrb[0].mxu0 %v611
        %v1713 = vpop.f32.mrb[0].mxu0
        %v1714 = vadd.f32 0.0, %v1713
        %v1715 = vpop.f32.mrb[0].mxu0
        %v1716 = vadd.f32 0.0, %v1715
        %1717 = vmatprep.mubr.f32.mxu0 0.0
        %1718 = vmatmul.mubr.f32.gmra.mrb[0].mxu0 %v614
        %v1719 = vpop.f32.mrb[0].mxu0
        %v1720 = vadd.f32 0.0, %v1719
        %v1721 = vpop.f32.mrb[0].mxu0
        %v1722 = vadd.f32 0.0, %v1721
        %1723 = vmatprep.mubr.f32.mxu0 0.0
        %1724 = vmatmul.mubr.f32.gmra.mrb[0].mxu0 %v617
        %v1725 = vpop.f32.mrb[0].mxu0
        %v1726 = vadd.f32 0.0, %v1725
        %v1727 = vpop.f32.mrb[0].mxu0
        %v1728 = vadd.f32 0.0, %v1727
        %1729 = vmatprep.mubr.f32.mxu0 0.0
        %1730 = vmatmul.mubr.f32.gmra.mrb[0].mxu0 %v620
        %v1731 = vpop.f32.mrb[0].mxu0
        %v1732 = vadd.f32 0.0, %v1731
        %v1733 = vpop.f32.mrb[0].mxu0
        %v1734 = vadd.f32 0.0, %v1733
        %1735 = vmatprep.mubr.f32.mxu0 0.0
        %1736 = vmatmul.mubr.f32.gmra.mrb[0].mxu0 %v623
        %v1737 = vpop.f32.mrb[0].mxu0
        %v1738 = vadd.f32 0.0, %v1737
        %v1739 = vpop.f32.mrb[0].mxu0
        %v1740 = vadd.f32 0.0, %v1739
        %1741 = vmatprep.mubr.f32.mxu0 0.0
        %1742 = vmatmul.mubr.f32.gmra.mrb[0].mxu0 %v626
        %v1743 = vpop.f32.mrb[0].mxu0
        %v1744 = vadd.f32 0.0, %v1743
        %v1745 = vpop.f32.mrb[0].mxu0
        %v1746 = vadd.f32 0.0, %v1745
        %1747 = vmatprep.mubr.f32.mxu0 0.0
        %1748 = vmatmul.mubr.f32.gmra.mrb[0].mxu0 %v629
        %v1749 = vpop.f32.mrb[0].mxu0
        %v1750 = vadd.f32 0.0, %v1749
        %v1751 = vpop.f32.mrb[0].mxu0
        %v1752 = vadd.f32 0.0, %v1751
        %1753 = vmatprep.mubr.f32.mxu0 0.0
        %1754 = vmatmul.mubr.f32.gmra.mrb[0].mxu0 %v632
        %v1755 = vpop.f32.mrb[0].mxu0
        %v1756 = vadd.f32 0.0, %v1755
        %v1757 = vpop.f32.mrb[0].mxu0
        %v1758 = vadd.f32 0.0, %v1757
        %1759 = vmatprep.mubr.f32.mxu0 0.0
        %1760 = vmatmul.mubr.f32.gmra.mrb[0].mxu0 %v635
        %v1761 = vpop.f32.mrb[0].mxu0
        %v1762 = vadd.f32 0.0, %v1761
        %v1763 = vpop.f32.mrb[0].mxu0
        %v1764 = vadd.f32 0.0, %v1763
        %1765 = vmatprep.mubr.f32.mxu0 0.0
        %1766 = vmatmul.mubr.f32.gmra.mrb[0].mxu0 %v638
        %v1767 = vpop.f32.mrb[0].mxu0
        %v1768 = vadd.f32 0.0, %v1767
        %v1769 = vpop.f32.mrb[0].mxu0
        %v1770 = vadd.f32 0.0, %v1769
        %1771 = vmatprep.mubr.f32.mxu0 0.0
        %1772 = vmatmul.mubr.f32.gmra.mrb[0].mxu0 %v641
        %v1773 = vpop.f32.mrb[0].mxu0
        %v1774 = vadd.f32 0.0, %v1773
        %v1775 = vpop.f32.mrb[0].mxu0
        %v1776 = vadd.f32 0.0, %v1775
        %1777 = vmatprep.mubr.f32.mxu0 0.0
        %1778 = vmatmul.mubr.f32.gmra.mrb[0].mxu0 %v644
        %v1779 = vpop.f32.mrb[0].mxu0
        %v1780 = vadd.f32 0.0, %v1779
        %v1781 = vpop.f32.mrb[0].mxu0
        %v1782 = vadd.f32 0.0, %v1781
        %1783 = vmatprep.mubr.f32.mxu0 0.0
        %1784 = vmatmul.mubr.f32.gmra.mrb[0].mxu0 %v647
        %v1785 = vpop.f32.mrb[0].mxu0
        %v1786 = vadd.f32 0.0, %v1785
        %v1787 = vpop.f32.mrb[0].mxu0
        %v1788 = vadd.f32 0.0, %v1787
        %1789 = vmatprep.mubr.f32.mxu0 0.0
        %1790 = vmatmul.mubr.f32.gmra.mrb[0].mxu0 %v650
        %v1791 = vpop.f32.mrb[0].mxu0
        %v1792 = vadd.f32 0.0, %v1791
        %v1793 = vpop.f32.mrb[0].mxu0
        %v1794 = vadd.f32 0.0, %v1793
        %1795 = vmatprep.mubr.f32.mxu0 0.0
        %1796 = vmatmul.mubr.f32.gmra.mrb[0].mxu0 %v653
        %v1797 = vpop.f32.mrb[0].mxu0
        %v1798 = vadd.f32 0.0, %v1797
        %v1799 = vpop.f32.mrb[0].mxu0
        %v1800 = vadd.f32 0.0, %v1799
        %1801 = vmatprep.mubr.f32.mxu0 0.0
        %1802 = vmatmul.mubr.f32.gmra.mrb[0].mxu0 %v656
        %v1803 = vpop.f32.mrb[0].mxu0
        %v1804 = vadd.f32 0.0, %v1803
        %v1805 = vpop.f32.mrb[0].mxu0
        %v1806 = vadd.f32 0.0, %v1805
        %1807 = vmatprep.mubr.f32.mxu0 0.0
        %1808 = vmatmul.mubr.f32.gmra.mrb[0].mxu0 %v659
        %v1809 = vpop.f32.mrb[0].mxu0
        %v1810 = vadd.f32 0.0, %v1809
        %v1811 = vpop.f32.mrb[0].mxu0
        %v1812 = vadd.f32 0.0, %v1811
        %1813 = vmatprep.mubr.f32.mxu0 0.0
        %1814 = vmatmul.mubr.f32.gmra.mrb[0].mxu0 %v662
        %v1815 = vpop.f32.mrb[0].mxu0
        %v1816 = vadd.f32 0.0, %v1815
        %v1817 = vpop.f32.mrb[0].mxu0
        %v1818 = vadd.f32 0.0, %v1817
        %1819 = vmatprep.mubr.f32.mxu0 0.0
        %1820 = vmatmul.mubr.f32.gmra.mrb[0].mxu0 %v665
        %v1821 = vpop.f32.mrb[0].mxu0
        %v1822 = vadd.f32 0.0, %v1821
        %v1823 = vpop.f32.mrb[0].mxu0
        %v1824 = vadd.f32 0.0, %v1823
        %1825 = vmatprep.mubr.f32.mxu0 0.0
        %1826 = vmatmul.mubr.f32.gmra.mrb[0].mxu0 %v1597
        %v1827 = vpop.f32.mrb[0].mxu0
        %v1828 = vadd.f32 0.0, %v1827
        %v1829 = vpop.f32.mrb[0].mxu0
        %v1830 = vadd.f32 0.0, %v1829
        %1831 = vdwg.mxu0
        %1832 = vmatprep.subr.mxu0 %v1583
        %1833 = vmatpush1.msra.mxu0 %v1582
        %1834 = vmatprep.subr.mxu0 %v1587
        %1835 = vmatpush1.msra.mxu0 %v1586
        %1836 = vmatprep.subr.mxu0 %v1591
        %1837 = vmatpush1.msra.mxu0 %v1590
        %1838 = vmatprep.subr.mxu0 %v1609
        %1839 = vmatpush1.msra.mxu0 %v1606
        %1840 = vmatprep.subr.mxu0 0.0
        %1841 = vmatpush1.msra.mxu0 0.0
        %1842 = vmatprep.subr.mxu0 0.0
        %1843 = vmatpush1.msra.mxu0 0.0
        %1844 = vmatprep.subr.mxu0 0.0
        %1845 = vmatpush1.msra.mxu0 0.0
        %1846 = vmatprep.subr.mxu0 0.0
        %1847 = vmatpush1.msra.mxu0 0.0
        %1848 = vmatprep.subr.mxu0 0.0
        %1849 = vmatpush1.msra.mxu0 0.0
        %1850 = vmatprep.subr.mxu0 0.0
        %1851 = vmatpush1.msra.mxu0 0.0
        %1852 = vmatprep.subr.mxu0 0.0
        %1853 = vmatpush1.msra.mxu0 0.0
        %1854 = vmatprep.subr.mxu0 0.0
        %1855 = vmatpush1.msra.mxu0 0.0
        %1856 = vmatprep.subr.mxu0 0.0
        %1857 = vmatpush1.msra.mxu0 0.0
        %1858 = vmatprep.subr.mxu0 0.0
        %1859 = vmatpush1.msra.mxu0 0.0
        %1860 = vmatprep.subr.mxu0 0.0
        %1861 = vmatpush1.msra.mxu0 0.0
        %1862 = vmatprep.subr.mxu0 0.0
        %1863 = vmatpush1.msra.mxu0 0.0
        %1864 = vmatprep.subr.mxu0 0.0
        %1865 = vmatpush1.msra.mxu0 0.0
        %1866 = vmatprep.subr.mxu0 0.0
        %1867 = vmatpush1.msra.mxu0 0.0
        %1868 = vmatprep.subr.mxu0 0.0
        %1869 = vmatpush1.msra.mxu0 0.0
        %1870 = vmatprep.subr.mxu0 0.0
        %1871 = vmatpush1.msra.mxu0 0.0
        %1872 = vmatprep.subr.mxu0 0.0
        %1873 = vmatpush1.msra.mxu0 0.0
        %1874 = vmatprep.subr.mxu0 0.0
        %1875 = vmatpush1.msra.mxu0 0.0
        %1876 = vmatprep.subr.mxu0 0.0
        %1877 = vmatpush1.msra.mxu0 0.0
        %1878 = vmatprep.subr.mxu0 0.0
        %1879 = vmatpush1.msra.mxu0 0.0
        %1880 = vmatprep.subr.mxu0 0.0
        %1881 = vmatpush1.msra.mxu0 0.0
        %1882 = vmatprep.subr.mxu0 0.0
        %1883 = vmatpush1.msra.mxu0 0.0
        %1884 = vmatprep.subr.mxu0 0.0
        %1885 = vmatpush1.msra.mxu0 0.0
        %1886 = vmatprep.subr.mxu0 0.0
        %1887 = vmatpush1.msra.mxu0 0.0
        %1888 = vmatprep.subr.mxu0 0.0
        %1889 = vmatpush1.msra.mxu0 0.0
        %1890 = vmatprep.subr.mxu0 0.0
        %1891 = vmatpush1.msra.mxu0 0.0
        %1892 = vmatprep.subr.mxu0 0.0
        %1893 = vmatpush1.msra.mxu0 0.0
        %1894 = vmatprep.subr.mxu0 0.0
        %1895 = vmatpush1.msra.mxu0 0.0
        %1896 = vmatprep.mubr.f32.mxu0 0.0
        %1897 = vmatmul.mubr.f32.gmra.mrb[0].mxu0 %v593
        %v1898 = vpop.f32.mrb[0].mxu0
        %v1899 = vadd.f32 0.0, %v1898
        %v1900 = vpop.f32.mrb[0].mxu0
        %v1901 = vadd.f32 0.0, %v1900
        %1902 = vmatprep.mubr.f32.mxu0 0.0
        %1903 = vmatmul.mubr.f32.gmra.mrb[0].mxu0 %v596
        %v1904 = vpop.f32.mrb[0].mxu0
        %v1905 = vadd.f32 0.0, %v1904
        %v1906 = vpop.f32.mrb[0].mxu0
        %v1907 = vadd.f32 0.0, %v1906
        %1908 = vmatprep.mubr.f32.mxu0 0.0
        %1909 = vmatmul.mubr.f32.gmra.mrb[0].mxu0 %v599
        %v1910 = vpop.f32.mrb[0].mxu0
        %v1911 = vadd.f32 0.0, %v1910
        %v1912 = vpop.f32.mrb[0].mxu0
        %v1913 = vadd.f32 0.0, %v1912
        %1914 = vmatprep.mubr.f32.mxu0 0.0
        %1915 = vmatmul.mubr.f32.gmra.mrb[0].mxu0 %v602
        %v1916 = vpop.f32.mrb[0].mxu0
        %v1917 = vadd.f32 0.0, %v1916
        %v1918 = vpop.f32.mrb[0].mxu0
        %v1919 = vadd.f32 0.0, %v1918
        %1920 = vmatprep.mubr.f32.mxu0 0.0
        %1921 = vmatmul.mubr.f32.gmra.mrb[0].mxu0 %v605
        %v1922 = vpop.f32.mrb[0].mxu0
        %v1923 = vadd.f32 0.0, %v1922
        %v1924 = vpop.f32.mrb[0].mxu0
        %v1925 = vadd.f32 0.0, %v1924
        %1926 = vmatprep.mubr.f32.mxu0 0.0
        %1927 = vmatmul.mubr.f32.gmra.mrb[0].mxu0 %v608
        %v1928 = vpop.f32.mrb[0].mxu0
        %v1929 = vadd.f32 0.0, %v1928
        %v1930 = vpop.f32.mrb[0].mxu0
        %v1931 = vadd.f32 0.0, %v1930
        %1932 = vmatprep.mubr.f32.mxu0 0.0
        %1933 = vmatmul.mubr.f32.gmra.mrb[0].mxu0 %v611
        %v1934 = vpop.f32.mrb[0].mxu0
        %v1935 = vadd.f32 0.0, %v1934
        %v1936 = vpop.f32.mrb[0].mxu0
        %v1937 = vadd.f32 0.0, %v1936
        %1938 = vmatprep.mubr.f32.mxu0 0.0
        %1939 = vmatmul.mubr.f32.gmra.mrb[0].mxu0 %v614
        %v1940 = vpop.f32.mrb[0].mxu0
        %v1941 = vadd.f32 0.0, %v1940
        %v1942 = vpop.f32.mrb[0].mxu0
        %v1943 = vadd.f32 0.0, %v1942
        %1944 = vmatprep.mubr.f32.mxu0 0.0
        %1945 = vmatmul.mubr.f32.gmra.mrb[0].mxu0 %v617
        %v1946 = vpop.f32.mrb[0].mxu0
        %v1947 = vadd.f32 0.0, %v1946
        %v1948 = vpop.f32.mrb[0].mxu0
        %v1949 = vadd.f32 0.0, %v1948
        %1950 = vmatprep.mubr.f32.mxu0 0.0
        %1951 = vmatmul.mubr.f32.gmra.mrb[0].mxu0 %v620
        %v1952 = vpop.f32.mrb[0].mxu0
        %v1953 = vadd.f32 0.0, %v1952
        %v1954 = vpop.f32.mrb[0].mxu0
        %v1955 = vadd.f32 0.0, %v1954
        %1956 = vmatprep.mubr.f32.mxu0 0.0
        %1957 = vmatmul.mubr.f32.gmra.mrb[0].mxu0 %v623
        %v1958 = vpop.f32.mrb[0].mxu0
        %v1959 = vadd.f32 0.0, %v1958
        %v1960 = vpop.f32.mrb[0].mxu0
        %v1961 = vadd.f32 0.0, %v1960
        %1962 = vmatprep.mubr.f32.mxu0 0.0
        %1963 = vmatmul.mubr.f32.gmra.mrb[0].mxu0 %v626
        %v1964 = vpop.f32.mrb[0].mxu0
        %v1965 = vadd.f32 0.0, %v1964
        %v1966 = vpop.f32.mrb[0].mxu0
        %v1967 = vadd.f32 0.0, %v1966
        %1968 = vmatprep.mubr.f32.mxu0 0.0
        %1969 = vmatmul.mubr.f32.gmra.mrb[0].mxu0 %v629
        %v1970 = vpop.f32.mrb[0].mxu0
        %v1971 = vadd.f32 0.0, %v1970
        %v1972 = vpop.f32.mrb[0].mxu0
        %v1973 = vadd.f32 0.0, %v1972
        %1974 = vmatprep.mubr.f32.mxu0 0.0
        %1975 = vmatmul.mubr.f32.gmra.mrb[0].mxu0 %v632
        %v1976 = vpop.f32.mrb[0].mxu0
        %v1977 = vadd.f32 0.0, %v1976
        %v1978 = vpop.f32.mrb[0].mxu0
        %v1979 = vadd.f32 0.0, %v1978
        %1980 = vmatprep.mubr.f32.mxu0 0.0
        %1981 = vmatmul.mubr.f32.gmra.mrb[0].mxu0 %v635
        %v1982 = vpop.f32.mrb[0].mxu0
        %v1983 = vadd.f32 0.0, %v1982
        %v1984 = vpop.f32.mrb[0].mxu0
        %v1985 = vadd.f32 0.0, %v1984
        %1986 = vmatprep.mubr.f32.mxu0 0.0
        %1987 = vmatmul.mubr.f32.gmra.mrb[0].mxu0 %v638
        %v1988 = vpop.f32.mrb[0].mxu0
        %v1989 = vadd.f32 0.0, %v1988
        %v1990 = vpop.f32.mrb[0].mxu0
        %v1991 = vadd.f32 0.0, %v1990
        %1992 = vmatprep.mubr.f32.mxu0 0.0
        %1993 = vmatmul.mubr.f32.gmra.mrb[0].mxu0 %v641
        %v1994 = vpop.f32.mrb[0].mxu0
        %v1995 = vadd.f32 0.0, %v1994
        %v1996 = vpop.f32.mrb[0].mxu0
        %v1997 = vadd.f32 0.0, %v1996
        %1998 = vmatprep.mubr.f32.mxu0 0.0
        %1999 = vmatmul.mubr.f32.gmra.mrb[0].mxu0 %v644
        %v2000 = vpop.f32.mrb[0].mxu0
        %v2001 = vadd.f32 0.0, %v2000
        %v2002 = vpop.f32.mrb[0].mxu0
        %v2003 = vadd.f32 0.0, %v2002
        %2004 = vmatprep.mubr.f32.mxu0 0.0
        %2005 = vmatmul.mubr.f32.gmra.mrb[0].mxu0 %v647
        %v2006 = vpop.f32.mrb[0].mxu0
        %v2007 = vadd.f32 0.0, %v2006
        %v2008 = vpop.f32.mrb[0].mxu0
        %v2009 = vadd.f32 0.0, %v2008
        %2010 = vmatprep.mubr.f32.mxu0 0.0
        %2011 = vmatmul.mubr.f32.gmra.mrb[0].mxu0 %v650
        %v2012 = vpop.f32.mrb[0].mxu0
        %v2013 = vadd.f32 0.0, %v2012
        %v2014 = vpop.f32.mrb[0].mxu0
        %v2015 = vadd.f32 0.0, %v2014
        %2016 = vmatprep.mubr.f32.mxu0 0.0
        %2017 = vmatmul.mubr.f32.gmra.mrb[0].mxu0 %v653
        %v2018 = vpop.f32.mrb[0].mxu0
        %v2019 = vadd.f32 0.0, %v2018
        %v2020 = vpop.f32.mrb[0].mxu0
        %v2021 = vadd.f32 0.0, %v2020
        %2022 = vmatprep.mubr.f32.mxu0 0.0
        %2023 = vmatmul.mubr.f32.gmra.mrb[0].mxu0 %v656
        %v2024 = vpop.f32.mrb[0].mxu0
        %v2025 = vadd.f32 0.0, %v2024
        %v2026 = vpop.f32.mrb[0].mxu0
        %v2027 = vadd.f32 0.0, %v2026
        %2028 = vmatprep.mubr.f32.mxu0 0.0
        %2029 = vmatmul.mubr.f32.gmra.mrb[0].mxu0 %v659
        %v2030 = vpop.f32.mrb[0].mxu0
        %v2031 = vadd.f32 0.0, %v2030
        %v2032 = vpop.f32.mrb[0].mxu0
        %v2033 = vadd.f32 0.0, %v2032
        %2034 = vmatprep.mubr.f32.mxu0 0.0
        %2035 = vmatmul.mubr.f32.gmra.mrb[0].mxu0 %v662
        %v2036 = vpop.f32.mrb[0].mxu0
        %v2037 = vadd.f32 0.0, %v2036
        %v2038 = vpop.f32.mrb[0].mxu0
        %v2039 = vadd.f32 0.0, %v2038
        %2040 = vmatprep.mubr.f32.mxu0 0.0
        %2041 = vmatmul.mubr.f32.gmra.mrb[0].mxu0 %v665
        %v2042 = vpop.f32.mrb[0].mxu0
        %v2043 = vadd.f32 0.0, %v2042
        %v2044 = vpop.f32.mrb[0].mxu0
        %v2045 = vadd.f32 0.0, %v2044
        %2046 = vmatprep.mubr.f32.mxu0 0.0
        %2047 = vmatmul.mubr.f32.gmra.mrb[0].mxu0 %v1597
        %v2048 = vpop.f32.mrb[0].mxu0
        %v2049 = vadd.f32 0.0, %v2048
        %v2050 = vpop.f32.mrb[0].mxu0
        %v2051 = vadd.f32 0.0, %v2050
        %2052 = vdwg.mxu0
        %v2053 = vadd.f32 %v1204, %v1678
        %v2054 = vadd.f32 %v1206, %v1680
        %v2055 = vadd.f32 %v1425, %v1899
        %v2056 = vadd.f32 %v1427, %v1901
        %v2057 = vadd.f32 %v1210, %v1684
        %v2058 = vadd.f32 %v1212, %v1686
        %v2059 = vadd.f32 %v1431, %v1905
        %v2060 = vadd.f32 %v1433, %v1907
        %v2061 = vadd.f32 %v1216, %v1690
        %v2062 = vadd.f32 %v1218, %v1692
        %v2063 = vadd.f32 %v1437, %v1911
        %v2064 = vadd.f32 %v1439, %v1913
        %v2065 = vadd.f32 %v1222, %v1696
        %v2066 = vadd.f32 %v1224, %v1698
        %v2067 = vadd.f32 %v1443, %v1917
        %v2068 = vadd.f32 %v1445, %v1919
        %v2069 = vadd.f32 %v1228, %v1702
        %v2070 = vadd.f32 %v1230, %v1704
        %v2071 = vadd.f32 %v1449, %v1923
        %v2072 = vadd.f32 %v1451, %v1925
        %v2073 = vadd.f32 %v1234, %v1708
        %v2074 = vadd.f32 %v1236, %v1710
        %v2075 = vadd.f32 %v1455, %v1929
        %v2076 = vadd.f32 %v1457, %v1931
        %v2077 = vadd.f32 %v1240, %v1714
        %v2078 = vadd.f32 %v1242, %v1716
        %v2079 = vadd.f32 %v1461, %v1935
        %v2080 = vadd.f32 %v1463, %v1937
        %v2081 = vadd.f32 %v1246, %v1720
        %v2082 = vadd.f32 %v1248, %v1722
        %v2083 = vadd.f32 %v1467, %v1941
        %v2084 = vadd.f32 %v1469, %v1943
        %v2085 = vadd.f32 %v1252, %v1726
        %v2086 = vadd.f32 %v1254, %v1728
        %v2087 = vadd.f32 %v1473, %v1947
        %v2088 = vadd.f32 %v1475, %v1949
        %v2089 = vadd.f32 %v1258, %v1732
        %v2090 = vadd.f32 %v1260, %v1734
        %v2091 = vadd.f32 %v1479, %v1953
        %v2092 = vadd.f32 %v1481, %v1955
        %v2093 = vadd.f32 %v1264, %v1738
        %v2094 = vadd.f32 %v1266, %v1740
        %v2095 = vadd.f32 %v1485, %v1959
        %v2096 = vadd.f32 %v1487, %v1961
        %v2097 = vadd.f32 %v1270, %v1744
        %v2098 = vadd.f32 %v1272, %v1746
        %v2099 = vadd.f32 %v1491, %v1965
        %v2100 = vadd.f32 %v1493, %v1967
        %v2101 = vadd.f32 %v1276, %v1750
        %v2102 = vadd.f32 %v1278, %v1752
        %v2103 = vadd.f32 %v1497, %v1971
        %v2104 = vadd.f32 %v1499, %v1973
        %v2105 = vadd.f32 %v1282, %v1756
        %v2106 = vadd.f32 %v1284, %v1758
        %v2107 = vadd.f32 %v1503, %v1977
        %v2108 = vadd.f32 %v1505, %v1979
        %v2109 = vadd.f32 %v1288, %v1762
        %v2110 = vadd.f32 %v1290, %v1764
        %v2111 = vadd.f32 %v1509, %v1983
        %v2112 = vadd.f32 %v1511, %v1985
        %v2113 = vadd.f32 %v1294, %v1768
        %v2114 = vadd.f32 %v1296, %v1770
        %v2115 = vadd.f32 %v1515, %v1989
        %v2116 = vadd.f32 %v1517, %v1991
        %v2117 = vadd.f32 %v1300, %v1774
        %v2118 = vadd.f32 %v1302, %v1776
        %v2119 = vadd.f32 %v1521, %v1995
        %v2120 = vadd.f32 %v1523, %v1997
        %v2121 = vadd.f32 %v1306, %v1780
        %v2122 = vadd.f32 %v1308, %v1782
        %v2123 = vadd.f32 %v1527, %v2001
        %v2124 = vadd.f32 %v1529, %v2003
        %v2125 = vadd.f32 %v1312, %v1786
        %v2126 = vadd.f32 %v1314, %v1788
        %v2127 = vadd.f32 %v1533, %v2007
        %v2128 = vadd.f32 %v1535, %v2009
        %v2129 = vadd.f32 %v1318, %v1792
        %v2130 = vadd.f32 %v1320, %v1794
        %v2131 = vadd.f32 %v1539, %v2013
        %v2132 = vadd.f32 %v1541, %v2015
        %v2133 = vadd.f32 %v1324, %v1798
        %v2134 = vadd.f32 %v1326, %v1800
        %v2135 = vadd.f32 %v1545, %v2019
        %v2136 = vadd.f32 %v1547, %v2021
        %v2137 = vadd.f32 %v1330, %v1804
        %v2138 = vadd.f32 %v1332, %v1806
        %v2139 = vadd.f32 %v1551, %v2025
        %v2140 = vadd.f32 %v1553, %v2027
        %v2141 = vadd.f32 %v1336, %v1810
        %v2142 = vadd.f32 %v1338, %v1812
        %v2143 = vadd.f32 %v1557, %v2031
        %v2144 = vadd.f32 %v1559, %v2033
        %v2145 = vadd.f32 %v1342, %v1816
        %v2146 = vadd.f32 %v1344, %v1818
        %v2147 = vadd.f32 %v1563, %v2037
        %v2148 = vadd.f32 %v1565, %v2039
        %v2149 = vadd.f32 %v1348, %v1822
        %v2150 = vadd.f32 %v1350, %v1824
        %v2151 = vadd.f32 %v1569, %v2043
        %v2152 = vadd.f32 %v1571, %v2045
        %v2153 = vadd.f32 %v1354, %v1828
        %v2154 = vadd.f32 %v1356, %v1830
        %v2155 = vadd.f32 %v1575, %v2049
        %v2156 = vadd.f32 %v1577, %v2051
        %v2157 = vmax.f32 %v2053, 0.0
        %v2158 = vmax.f32 %v2054, 0.0
        %v2159 = vmax.f32 %v2055, 0.0
        %v2160 = vmax.f32 %v2056, 0.0
        %v2161 = vmax.f32 %v2057, 0.0
        %v2162 = vmax.f32 %v2058, 0.0
        %v2163 = vmax.f32 %v2059, 0.0
        %v2164 = vmax.f32 %v2060, 0.0
        %v2165 = vmax.f32 %v2061, 0.0
        %v2166 = vmax.f32 %v2062, 0.0
        %v2167 = vmax.f32 %v2063, 0.0
        %v2168 = vmax.f32 %v2064, 0.0
        %v2169 = vmax.f32 %v2065, 0.0
        %v2170 = vmax.f32 %v2066, 0.0
        %v2171 = vmax.f32 %v2067, 0.0
        %v2172 = vmax.f32 %v2068, 0.0
        %v2173 = vmax.f32 %v2069, 0.0
        %v2174 = vmax.f32 %v2070, 0.0
        %v2175 = vmax.f32 %v2071, 0.0
        %v2176 = vmax.f32 %v2072, 0.0
        %v2177 = vmax.f32 %v2073, 0.0
        %v2178 = vmax.f32 %v2074, 0.0
        %v2179 = vmax.f32 %v2075, 0.0
        %v2180 = vmax.f32 %v2076, 0.0
        %v2181 = vmax.f32 %v2077, 0.0
        %v2182 = vmax.f32 %v2078, 0.0
        %v2183 = vmax.f32 %v2079, 0.0
        %v2184 = vmax.f32 %v2080, 0.0
        %v2185 = vmax.f32 %v2081, 0.0
        %v2186 = vmax.f32 %v2082, 0.0
        %v2187 = vmax.f32 %v2083, 0.0
        %v2188 = vmax.f32 %v2084, 0.0
        %v2189 = vmax.f32 %v2085, 0.0
        %v2190 = vmax.f32 %v2086, 0.0
        %v2191 = vmax.f32 %v2087, 0.0
        %v2192 = vmax.f32 %v2088, 0.0
        %v2193 = vmax.f32 %v2089, 0.0
        %v2194 = vmax.f32 %v2090, 0.0
        %v2195 = vmax.f32 %v2091, 0.0
        %v2196 = vmax.f32 %v2092, 0.0
        %v2197 = vmax.f32 %v2093, 0.0
        %v2198 = vmax.f32 %v2094, 0.0
        %v2199 = vmax.f32 %v2095, 0.0
        %v2200 = vmax.f32 %v2096, 0.0
        %v2201 = vmax.f32 %v2097, 0.0
        %v2202 = vmax.f32 %v2098, 0.0
        %v2203 = vmax.f32 %v2099, 0.0
        %v2204 = vmax.f32 %v2100, 0.0
        %v2205 = vmax.f32 %v2101, 0.0
        %v2206 = vmax.f32 %v2102, 0.0
        %v2207 = vmax.f32 %v2103, 0.0
        %v2208 = vmax.f32 %v2104, 0.0
        %v2209 = vmax.f32 %v2105, 0.0
        %v2210 = vmax.f32 %v2106, 0.0
        %v2211 = vmax.f32 %v2107, 0.0
        %v2212 = vmax.f32 %v2108, 0.0
        %v2213 = vmax.f32 %v2109, 0.0
        %v2214 = vmax.f32 %v2110, 0.0
        %v2215 = vmax.f32 %v2111, 0.0
        %v2216 = vmax.f32 %v2112, 0.0
        %v2217 = vmax.f32 %v2113, 0.0
        %v2218 = vmax.f32 %v2114, 0.0
        %v2219 = vmax.f32 %v2115, 0.0
        %v2220 = vmax.f32 %v2116, 0.0
        %v2221 = vmax.f32 %v2117, 0.0
        %v2222 = vmax.f32 %v2118, 0.0
        %v2223 = vmax.f32 %v2119, 0.0
        %v2224 = vmax.f32 %v2120, 0.0
        %v2225 = vmax.f32 %v2121, 0.0
        %v2226 = vmax.f32 %v2122, 0.0
        %v2227 = vmax.f32 %v2123, 0.0
        %v2228 = vmax.f32 %v2124, 0.0
        %v2229 = vmax.f32 %v2125, 0.0
        %v2230 = vmax.f32 %v2126, 0.0
        %v2231 = vmax.f32 %v2127, 0.0
        %v2232 = vmax.f32 %v2128, 0.0
        %v2233 = vmax.f32 %v2129, 0.0
        %v2234 = vmax.f32 %v2130, 0.0
        %v2235 = vmax.f32 %v2131, 0.0
        %v2236 = vmax.f32 %v2132, 0.0
        %v2237 = vmax.f32 %v2133, 0.0
        %v2238 = vmax.f32 %v2134, 0.0
        %v2239 = vmax.f32 %v2135, 0.0
        %v2240 = vmax.f32 %v2136, 0.0
        %v2241 = vmax.f32 %v2137, 0.0
        %v2242 = vmax.f32 %v2138, 0.0
        %v2243 = vmax.f32 %v2139, 0.0
        %v2244 = vmax.f32 %v2140, 0.0
        %v2245 = vmax.f32 %v2141, 0.0
        %v2246 = vmax.f32 %v2142, 0.0
        %v2247 = vmax.f32 %v2143, 0.0
        %v2248 = vmax.f32 %v2144, 0.0
        %v2249 = vmax.f32 %v2145, 0.0
        %v2250 = vmax.f32 %v2146, 0.0
        %v2251 = vmax.f32 %v2147, 0.0
        %v2252 = vmax.f32 %v2148, 0.0
        %v2253 = vmax.f32 %v2149, 0.0
        %v2254 = vmax.f32 %v2150, 0.0
        %v2255 = vmax.f32 %v2151, 0.0
        %v2256 = vmax.f32 %v2152, 0.0
        %v2257 = vmax.f32 %v2153, 0.0
        %v2258 = vmax.f32 %v2154, 0.0
        %v2259 = vmax.f32 %v2155, 0.0
        %v2260 = vmax.f32 %v2156, 0.0
        %v2261 = vmax.f32 %v2157, %v2161
        %v2262 = vmax.f32 %v2158, %v2162
        %v2263 = vmax.f32 %v2159, %v2163
        %v2264 = vmax.f32 %v2160, %v2164
        %v2265 = vmax.f32 %v2165, %v2169
        %v2266 = vmax.f32 %v2166, %v2170
        %v2267 = vmax.f32 %v2167, %v2171
        %v2268 = vmax.f32 %v2168, %v2172
        %v2269 = vmax.f32 %v2173, %v2177
        %v2270 = vmax.f32 %v2174, %v2178
        %v2271 = vmax.f32 %v2175, %v2179
        %v2272 = vmax.f32 %v2176, %v2180
        %v2273 = vmax.f32 %v2181, %v2185
        %v2274 = vmax.f32 %v2182, %v2186
        %v2275 = vmax.f32 %v2183, %v2187
        %v2276 = vmax.f32 %v2184, %v2188
        %v2277 = vmax.f32 %v2189, %v2193
        %v2278 = vmax.f32 %v2190, %v2194
        %v2279 = vmax.f32 %v2191, %v2195
        %v2280 = vmax.f32 %v2192, %v2196
        %v2281 = vmax.f32 %v2197, %v2201
        %v2282 = vmax.f32 %v2198, %v2202
        %v2283 = vmax.f32 %v2199, %v2203
        %v2284 = vmax.f32 %v2200, %v2204
        %v2285 = vmax.f32 %v2205, %v2209
        %v2286 = vmax.f32 %v2206, %v2210
        %v2287 = vmax.f32 %v2207, %v2211
        %v2288 = vmax.f32 %v2208, %v2212
        %v2289 = vmax.f32 %v2213, %v2217
        %v2290 = vmax.f32 %v2214, %v2218
        %v2291 = vmax.f32 %v2215, %v2219
        %v2292 = vmax.f32 %v2216, %v2220
        %v2293 = vmax.f32 %v2221, %v2225
        %v2294 = vmax.f32 %v2222, %v2226
        %v2295 = vmax.f32 %v2223, %v2227
        %v2296 = vmax.f32 %v2224, %v2228
        %v2297 = vmax.f32 %v2229, %v2233
        %v2298 = vmax.f32 %v2230, %v2234
        %v2299 = vmax.f32 %v2231, %v2235
        %v2300 = vmax.f32 %v2232, %v2236
        %v2301 = vmax.f32 %v2237, %v2241
        %v2302 = vmax.f32 %v2238, %v2242
        %v2303 = vmax.f32 %v2239, %v2243
        %v2304 = vmax.f32 %v2240, %v2244
        %v2305 = vmax.f32 %v2245, %v2249
        %v2306 = vmax.f32 %v2246, %v2250
        %v2307 = vmax.f32 %v2247, %v2251
        %v2308 = vmax.f32 %v2248, %v2252
        %v2309 = vmax.f32 %v2253, %v2257
        %v2310 = vmax.f32 %v2254, %v2258
        %v2311 = vmax.f32 %v2255, %v2259
        %v2312 = vmax.f32 %v2256, %v2260
        %v2313 = vld [vmem:[%s2] sm:$0xff]
        %v2314 = vld [vmem:[%s2 + $0x8] sm:$0xff]
        %v2315 = vld [vmem:[%s2 + $0x10] sm:$0xff]
        %v2316 = vld [vmem:[%s2 + $0x18] sm:$0xff]
        %v2317 = vld [vmem:[%s2 + $0x20] sm:$0xff]
        %v2318 = vld [vmem:[%s2 + $0x28] sm:$0xff]
        %v2319 = vld [vmem:[%s2 + $0x30] sm:$0xff]
        %v2320 = vld [vmem:[%s2 + $0x38] sm:$0xff]
        %v2321 = vld [vmem:[%s2 + $0x40] sm:$0xff]
        %v2322 = vld [vmem:[%s2 + $0x48] sm:$0xff]
        %v2323 = vld [vmem:[%s2 + $0x50] sm:$0xff]
        %v2324 = vld [vmem:[%s2 + $0x58] sm:$0xff]
        %v2325 = vld [vmem:[%s2 + $0x60] sm:$0xff]
        %v2326 = vld [vmem:[%s2 + $0x68] sm:$0xff]
        %v2327 = vld [vmem:[%s2 + $0x70] sm:$0xff]
        %v2328 = vld [vmem:[%s2 + $0x78] sm:$0xff]
        %v2329 = vld [vmem:[%s2 + $0x80] sm:$0xff]
        %v2330 = vld [vmem:[%s2 + $0x88] sm:$0xff]
        %v2331 = vld [vmem:[%s2 + $0x90] sm:$0xff]
        %v2332 = vld [vmem:[%s2 + $0x98] sm:$0xff]
        %v2333 = vld [vmem:[%s2 + $0xa0] sm:$0xff]
        %v2334 = vld [vmem:[%s2 + $0xa8] sm:$0xff]
        %v2335 = vld [vmem:[%s2 + $0xb0] sm:$0xff]
        %v2336 = vld [vmem:[%s2 + $0xb8] sm:$0xff]
        %v2337 = vld [vmem:[%s2 + $0xc0] sm:$0xff]
        %v2338 = vld [vmem:[%s2 + $0xc8] sm:$0xff]
        %v2339 = vld [vmem:[%s2 + $0xd0] sm:$0xff]
        %v2340 = vld [vmem:[%s2 + $0xd8] sm:$0xff]
        %v2341 = vld [vmem:[%s2 + $0xe0] sm:$0xff]
        %v2342 = vld [vmem:[%s2 + $0xe8] sm:$0xff]
        %v2343 = vld [vmem:[%s2 + $0xf0] sm:$0xff]
        %v2344 = vld [vmem:[%s2 + $0xf8] sm:$0xff]
        %v2345 = vld [vmem:[%s2 + $0x100] sm:$0xff]
        %v2346 = vld [vmem:[%s2 + $0x108] sm:$0xff]
        %v2347 = vld [vmem:[%s2 + $0x110] sm:$0xff]
        %v2348 = vld [vmem:[%s2 + $0x118] sm:$0xff]
        %v2349 = vld [vmem:[%s2 + $0x120] sm:$0xff]
        %v2350 = vld [vmem:[%s2 + $0x128] sm:$0xff]
        %v2351 = vld [vmem:[%s2 + $0x130] sm:$0xff]
        %v2352 = vld [vmem:[%s2 + $0x138] sm:$0xff]
        %v2353 = vld [vmem:[%s2 + $0x140] sm:$0xff]
        %v2354 = vld [vmem:[%s2 + $0x148] sm:$0xff]
        %v2355 = vld [vmem:[%s2 + $0x150] sm:$0xff]
        %v2356 = vld [vmem:[%s2 + $0x158] sm:$0xff]
        %v2357 = vld [vmem:[%s2 + $0x160] sm:$0xff]
        %v2358 = vld [vmem:[%s2 + $0x168] sm:$0xff]
        %v2359 = vld [vmem:[%s2 + $0x170] sm:$0xff]
        %v2360 = vld [vmem:[%s2 + $0x178] sm:$0xff]
        %v2361 = vld [vmem:[%s2 + $0x180] sm:$0xff]
        %v2362 = vld [vmem:[%s2 + $0x188] sm:$0xff]
        %v2363 = vld [vmem:[%s2 + $0x190] sm:$0xff]
        %v2364 = vld [vmem:[%s2 + $0x198] sm:$0xff]
        %v2365 = vld [vmem:[%s2 + $0x1a0] sm:$0xff]
        %v2366 = vld [vmem:[%s2 + $0x1a8] sm:$0xff]
        %v2367 = vld [vmem:[%s2 + $0x1b0] sm:$0xff]
        %v2368 = vld [vmem:[%s2 + $0x1b8] sm:$0xff]
        %v2369 = vld [vmem:[%s2 + $0x1c0] sm:$0xff]
        %v2370 = vld [vmem:[%s2 + $0x1c8] sm:$0xff]
        %v2371 = vld [vmem:[%s2 + $0x1d0] sm:$0xff]
        %v2372 = vld [vmem:[%s2 + $0x1d8] sm:$0xff]
        %v2373 = vld [vmem:[%s2 + $0x1e0] sm:$0xff]
        %v2374 = vld [vmem:[%s2 + $0x1e8] sm:$0xff]
        %v2375 = vld [vmem:[%s2 + $0x1f0] sm:$0xff]
        %v2376 = vld [vmem:[%s2 + $0x1f8] sm:$0xff]
        %v2377 = vld [vmem:[%s2 + $0x200] sm:$0xff]
        %v2378 = vld [vmem:[%s2 + $0x208] sm:$0xff]
        %v2379 = vld [vmem:[%s2 + $0x210] sm:$0xff]
        %v2380 = vld [vmem:[%s2 + $0x218] sm:$0xff]
        %v2381 = vld [vmem:[%s2 + $0x220] sm:$0xff]
        %v2382 = vld [vmem:[%s2 + $0x228] sm:$0xff]
        %v2383 = vld [vmem:[%s2 + $0x230] sm:$0xff]
        %v2384 = vld [vmem:[%s2 + $0x238] sm:$0xff]
        %v2385 = vld [vmem:[%s2 + $0x240] sm:$0xff]
        %v2386 = vld [vmem:[%s2 + $0x248] sm:$0xff]
        %v2387 = vld [vmem:[%s2 + $0x250] sm:$0xff]
        %v2388 = vld [vmem:[%s2 + $0x258] sm:$0xff]
        %v2389 = vld [vmem:[%s2 + $0x260] sm:$0xff]
        %v2390 = vld [vmem:[%s2 + $0x268] sm:$0xff]
        %v2391 = vld [vmem:[%s2 + $0x270] sm:$0xff]
        %v2392 = vld [vmem:[%s2 + $0x278] sm:$0xff]
        %v2393 = vld [vmem:[%s2 + $0x280] sm:$0xff]
        %v2394 = vld [vmem:[%s2 + $0x288] sm:$0xff]
        %v2395 = vld [vmem:[%s2 + $0x290] sm:$0xff]
        %v2396 = vld [vmem:[%s2 + $0x298] sm:$0xff]
        %v2397 = vld [vmem:[%s2 + $0x2a0] sm:$0xff]
        %v2398 = vld [vmem:[%s2 + $0x2a8] sm:$0xff]
        %v2399 = vld [vmem:[%s2 + $0x2b0] sm:$0xff]
        %v2400 = vld [vmem:[%s2 + $0x2b8] sm:$0xff]
        %v2401 = vld [vmem:[%s2 + $0x2c0] sm:$0xff]
        %v2402 = vld [vmem:[%s2 + $0x2c8] sm:$0xff]
        %v2403 = vld [vmem:[%s2 + $0x2d0] sm:$0xff]
        %v2404 = vld [vmem:[%s2 + $0x2d8] sm:$0xff]
        %v2405 = vld [vmem:[%s2 + $0x2e0] sm:$0xff]
        %v2406 = vld [vmem:[%s2 + $0x2e8] sm:$0xff]
        %v2407 = vld [vmem:[%s2 + $0x2f0] sm:$0xff]
        %v2408 = vld [vmem:[%s2 + $0x2f8] sm:$0xff]
        %v2409 = vld [vmem:[%s2 + $0x300] sm:$0xff]
        %v2410 = vld [vmem:[%s2 + $0x308] sm:$0xff]
        %v2411 = vld [vmem:[%s2 + $0x310] sm:$0xff]
        %v2412 = vld [vmem:[%s2 + $0x318] sm:$0xff]
        %v2413 = vld [vmem:[%s2 + $0x320] sm:$0xff]
        %v2414 = vld [vmem:[%s2 + $0x328] sm:$0xff]
        %v2415 = vld [vmem:[%s2 + $0x330] sm:$0xff]
        %v2416 = vld [vmem:[%s2 + $0x338] sm:$0xff]
        %vm2417 = vcmask 261120
        %v2419 = vsel %vm2417, %v2264, 0
        %v2422 = vsel %vm2417, %v2268, 0
        %v2425 = vsel %vm2417, %v2272, 0
        %v2428 = vsel %vm2417, %v2276, 0
        %v2431 = vsel %vm2417, %v2280, 0
        %v2434 = vsel %vm2417, %v2284, 0
        %v2437 = vsel %vm2417, %v2288, 0
        %v2440 = vsel %vm2417, %v2292, 0
        %v2443 = vsel %vm2417, %v2296, 0
        %v2446 = vsel %vm2417, %v2300, 0
        %v2449 = vsel %vm2417, %v2304, 0
        %v2452 = vsel %vm2417, %v2308, 0
        %v2455 = vsel %vm2417, %v2312, 0
        %2457 = vmatprep.subr.mxu0 %v2314
        %2458 = vmatpush1.msra.mxu0 %v2313
        %2459 = vmatprep.subr.mxu0 %v2316
        %2460 = vmatpush1.msra.mxu0 %v2315
        %2461 = vmatprep.subr.mxu0 %v2318
        %2462 = vmatpush1.msra.mxu0 %v2317
        %2463 = vmatprep.subr.mxu0 %v2320
        %2464 = vmatpush1.msra.mxu0 %v2319
        %2465 = vmatprep.subr.mxu0 %v2322
        %2466 = vmatpush1.msra.mxu0 %v2321
        %2467 = vmatprep.subr.mxu0 %v2324
        %2468 = vmatpush1.msra.mxu0 %v2323
        %2469 = vmatprep.subr.mxu0 %v2326
        %2470 = vmatpush1.msra.mxu0 %v2325
        %2471 = vmatprep.subr.mxu0 %v2328
        %2472 = vmatpush1.msra.mxu0 %v2327
        %2473 = vmatprep.subr.mxu0 %v2330
        %2474 = vmatpush1.msra.mxu0 %v2329
        %2475 = vmatprep.subr.mxu0 %v2332
        %2476 = vmatpush1.msra.mxu0 %v2331
        %2477 = vmatprep.subr.mxu0 %v2334
        %2478 = vmatpush1.msra.mxu0 %v2333
        %2479 = vmatprep.subr.mxu0 %v2336
        %2480 = vmatpush1.msra.mxu0 %v2335
        %2481 = vmatprep.subr.mxu0 %v2338
        %2482 = vmatpush1.msra.mxu0 %v2337
        %2483 = vmatprep.subr.mxu0 %v2340
        %2484 = vmatpush1.msra.mxu0 %v2339
        %2485 = vmatprep.subr.mxu0 %v2342
        %2486 = vmatpush1.msra.mxu0 %v2341
        %2487 = vmatprep.subr.mxu0 %v2344
        %2488 = vmatpush1.msra.mxu0 %v2343
        %2489 = vmatprep.subr.mxu0 %v2346
        %2490 = vmatpush1.msra.mxu0 %v2345
        %2491 = vmatprep.subr.mxu0 %v2348
        %2492 = vmatpush1.msra.mxu0 %v2347
        %2493 = vmatprep.subr.mxu0 %v2350
        %2494 = vmatpush1.msra.mxu0 %v2349
        %2495 = vmatprep.subr.mxu0 %v2352
        %2496 = vmatpush1.msra.mxu0 %v2351
        %2497 = vmatprep.subr.mxu0 %v2354
        %2498 = vmatpush1.msra.mxu0 %v2353
        %2499 = vmatprep.subr.mxu0 %v2356
        %2500 = vmatpush1.msra.mxu0 %v2355
        %2501 = vmatprep.subr.mxu0 %v2358
        %2502 = vmatpush1.msra.mxu0 %v2357
        %2503 = vmatprep.subr.mxu0 %v2360
        %2504 = vmatpush1.msra.mxu0 %v2359
        %2505 = vmatprep.subr.mxu0 %v2362
        %2506 = vmatpush1.msra.mxu0 %v2361
        %2507 = vmatprep.subr.mxu0 %v2364
        %2508 = vmatpush1.msra.mxu0 %v2363
        %2509 = vmatprep.subr.mxu0 %v2366
        %2510 = vmatpush1.msra.mxu0 %v2365
        %2511 = vmatprep.subr.mxu0 %v2368
        %2512 = vmatpush1.msra.mxu0 %v2367
        %2513 = vmatprep.subr.mxu0 %v2370
        %2514 = vmatpush1.msra.mxu0 %v2369
        %2515 = vmatprep.subr.mxu0 %v2372
        %2516 = vmatpush1.msra.mxu0 %v2371
        %2517 = vmatprep.subr.mxu0 %v2374
        %2518 = vmatpush1.msra.mxu0 %v2373
        %2519 = vmatprep.subr.mxu0 %v2376
        %2520 = vmatpush1.msra.mxu0 %v2375
        %2521 = vmatprep.mubr.f32.mxu0 %v2262
        %2522 = vmatmul.mubr.f32.gmra.mrb[0].mxu0 %v2261
        %v2523 = vpop.f32.mrb[0].mxu0
        %v2524 = vadd.f32 0.0, %v2523
        %v2525 = vpop.f32.mrb[0].mxu0
        %v2526 = vadd.f32 0.0, %v2525
        %2527 = vmatprep.mubr.f32.mxu0 %v2266
        %2528 = vmatmul.mubr.f32.gmra.mrb[0].mxu0 %v2265
        %v2529 = vpop.f32.mrb[0].mxu0
        %v2530 = vadd.f32 0.0, %v2529
        %v2531 = vpop.f32.mrb[0].mxu0
        %v2532 = vadd.f32 0.0, %v2531
        %2533 = vmatprep.mubr.f32.mxu0 %v2270
        %2534 = vmatmul.mubr.f32.gmra.mrb[0].mxu0 %v2269
        %v2535 = vpop.f32.mrb[0].mxu0
        %v2536 = vadd.f32 0.0, %v2535
        %v2537 = vpop.f32.mrb[0].mxu0
        %v2538 = vadd.f32 0.0, %v2537
        %2539 = vmatprep.mubr.f32.mxu0 %v2274
        %2540 = vmatmul.mubr.f32.gmra.mrb[0].mxu0 %v2273
        %v2541 = vpop.f32.mrb[0].mxu0
        %v2542 = vadd.f32 0.0, %v2541
        %v2543 = vpop.f32.mrb[0].mxu0
        %v2544 = vadd.f32 0.0, %v2543
        %2545 = vmatprep.mubr.f32.mxu0 %v2278
        %2546 = vmatmul.mubr.f32.gmra.mrb[0].mxu0 %v2277
        %v2547 = vpop.f32.mrb[0].mxu0
        %v2548 = vadd.f32 0.0, %v2547
        %v2549 = vpop.f32.mrb[0].mxu0
        %v2550 = vadd.f32 0.0, %v2549
        %2551 = vmatprep.mubr.f32.mxu0 %v2282
        %2552 = vmatmul.mubr.f32.gmra.mrb[0].mxu0 %v2281
        %v2553 = vpop.f32.mrb[0].mxu0
        %v2554 = vadd.f32 0.0, %v2553
        %v2555 = vpop.f32.mrb[0].mxu0
        %v2556 = vadd.f32 0.0, %v2555
        %2557 = vmatprep.mubr.f32.mxu0 %v2286
        %2558 = vmatmul.mubr.f32.gmra.mrb[0].mxu0 %v2285
        %v2559 = vpop.f32.mrb[0].mxu0
        %v2560 = vadd.f32 0.0, %v2559
        %v2561 = vpop.f32.mrb[0].mxu0
        %v2562 = vadd.f32 0.0, %v2561
        %2563 = vmatprep.mubr.f32.mxu0 %v2290
        %2564 = vmatmul.mubr.f32.gmra.mrb[0].mxu0 %v2289
        %v2565 = vpop.f32.mrb[0].mxu0
        %v2566 = vadd.f32 0.0, %v2565
        %v2567 = vpop.f32.mrb[0].mxu0
        %v2568 = vadd.f32 0.0, %v2567
        %2569 = vmatprep.mubr.f32.mxu0 %v2294
        %2570 = vmatmul.mubr.f32.gmra.mrb[0].mxu0 %v2293
        %v2571 = vpop.f32.mrb[0].mxu0
        %v2572 = vadd.f32 0.0, %v2571
        %v2573 = vpop.f32.mrb[0].mxu0
        %v2574 = vadd.f32 0.0, %v2573
        %2575 = vmatprep.mubr.f32.mxu0 %v2298
        %2576 = vmatmul.mubr.f32.gmra.mrb[0].mxu0 %v2297
        %v2577 = vpop.f32.mrb[0].mxu0
        %v2578 = vadd.f32 0.0, %v2577
        %v2579 = vpop.f32.mrb[0].mxu0
        %v2580 = vadd.f32 0.0, %v2579
        %2581 = vmatprep.mubr.f32.mxu0 %v2302
        %2582 = vmatmul.mubr.f32.gmra.mrb[0].mxu0 %v2301
        %v2583 = vpop.f32.mrb[0].mxu0
        %v2584 = vadd.f32 0.0, %v2583
        %v2585 = vpop.f32.mrb[0].mxu0
        %v2586 = vadd.f32 0.0, %v2585
        %2587 = vmatprep.mubr.f32.mxu0 %v2306
        %2588 = vmatmul.mubr.f32.gmra.mrb[0].mxu0 %v2305
        %v2589 = vpop.f32.mrb[0].mxu0
        %v2590 = vadd.f32 0.0, %v2589
        %v2591 = vpop.f32.mrb[0].mxu0
        %v2592 = vadd.f32 0.0, %v2591
        %2593 = vmatprep.mubr.f32.mxu0 %v2310
        %2594 = vmatmul.mubr.f32.gmra.mrb[0].mxu0 %v2309
        %v2595 = vpop.f32.mrb[0].mxu0
        %v2596 = vadd.f32 0.0, %v2595
        %v2597 = vpop.f32.mrb[0].mxu0
        %v2598 = vadd.f32 0.0, %v2597
        %2599 = vdwg.mxu0
        %2600 = vmatprep.subr.mxu0 %v2378
        %2601 = vmatpush1.msra.mxu0 %v2377
        %2602 = vmatprep.subr.mxu0 %v2380
        %2603 = vmatpush1.msra.mxu0 %v2379
        %2604 = vmatprep.subr.mxu0 %v2382
        %2605 = vmatpush1.msra.mxu0 %v2381
        %2606 = vmatprep.subr.mxu0 %v2384
        %2607 = vmatpush1.msra.mxu0 %v2383
        %2608 = vmatprep.subr.mxu0 %v2386
        %2609 = vmatpush1.msra.mxu0 %v2385
        %2610 = vmatprep.subr.mxu0 %v2388
        %2611 = vmatpush1.msra.mxu0 %v2387
        %2612 = vmatprep.subr.mxu0 %v2390
        %2613 = vmatpush1.msra.mxu0 %v2389
        %2614 = vmatprep.subr.mxu0 %v2392
        %2615 = vmatpush1.msra.mxu0 %v2391
        %2616 = vmatprep.subr.mxu0 %v2394
        %2617 = vmatpush1.msra.mxu0 %v2393
        %2618 = vmatprep.subr.mxu0 %v2396
        %2619 = vmatpush1.msra.mxu0 %v2395
        %2620 = vmatprep.subr.mxu0 %v2398
        %2621 = vmatpush1.msra.mxu0 %v2397
        %2622 = vmatprep.subr.mxu0 %v2400
        %2623 = vmatpush1.msra.mxu0 %v2399
        %2624 = vmatprep.subr.mxu0 %v2402
        %2625 = vmatpush1.msra.mxu0 %v2401
        %2626 = vmatprep.subr.mxu0 %v2404
        %2627 = vmatpush1.msra.mxu0 %v2403
        %2628 = vmatprep.subr.mxu0 %v2406
        %2629 = vmatpush1.msra.mxu0 %v2405
        %2630 = vmatprep.subr.mxu0 %v2408
        %2631 = vmatpush1.msra.mxu0 %v2407
        %2632 = vmatprep.subr.mxu0 %v2410
        %2633 = vmatpush1.msra.mxu0 %v2409
        %2634 = vmatprep.subr.mxu0 %v2412
        %2635 = vmatpush1.msra.mxu0 %v2411
        %2636 = vmatprep.subr.mxu0 %v2414
        %2637 = vmatpush1.msra.mxu0 %v2413
        %2638 = vmatprep.subr.mxu0 %v2416
        %2639 = vmatpush1.msra.mxu0 %v2415
        %2640 = vmatprep.subr.mxu0 0.0
        %2641 = vmatpush1.msra.mxu0 0.0
        %2642 = vmatprep.subr.mxu0 0.0
        %2643 = vmatpush1.msra.mxu0 0.0
        %2644 = vmatprep.subr.mxu0 0.0
        %2645 = vmatpush1.msra.mxu0 0.0
        %2646 = vmatprep.subr.mxu0 0.0
        %2647 = vmatpush1.msra.mxu0 0.0
        %2648 = vmatprep.subr.mxu0 0.0
        %2649 = vmatpush1.msra.mxu0 0.0
        %2650 = vmatprep.subr.mxu0 0.0
        %2651 = vmatpush1.msra.mxu0 0.0
        %2652 = vmatprep.subr.mxu0 0.0
        %2653 = vmatpush1.msra.mxu0 0.0
        %2654 = vmatprep.subr.mxu0 0.0
        %2655 = vmatpush1.msra.mxu0 0.0
        %2656 = vmatprep.subr.mxu0 0.0
        %2657 = vmatpush1.msra.mxu0 0.0
        %2658 = vmatprep.subr.mxu0 0.0
        %2659 = vmatpush1.msra.mxu0 0.0
        %2660 = vmatprep.subr.mxu0 0.0
        %2661 = vmatpush1.msra.mxu0 0.0
        %2662 = vmatprep.subr.mxu0 0.0
        %2663 = vmatpush1.msra.mxu0 0.0
        %2664 = vmatprep.mubr.f32.mxu0 %v2419
        %2665 = vmatmul.mubr.f32.gmra.mrb[0].mxu0 %v2263
        %v2666 = vpop.f32.mrb[0].mxu0
        %v2667 = vadd.f32 %v2524, %v2666
        %v2668 = vpop.f32.mrb[0].mxu0
        %v2669 = vadd.f32 %v2526, %v2668
        %2670 = vmatprep.mubr.f32.mxu0 %v2422
        %2671 = vmatmul.mubr.f32.gmra.mrb[0].mxu0 %v2267
        %v2672 = vpop.f32.mrb[0].mxu0
        %v2673 = vadd.f32 %v2530, %v2672
        %v2674 = vpop.f32.mrb[0].mxu0
        %v2675 = vadd.f32 %v2532, %v2674
        %2676 = vmatprep.mubr.f32.mxu0 %v2425
        %2677 = vmatmul.mubr.f32.gmra.mrb[0].mxu0 %v2271
        %v2678 = vpop.f32.mrb[0].mxu0
        %v2679 = vadd.f32 %v2536, %v2678
        %v2680 = vpop.f32.mrb[0].mxu0
        %v2681 = vadd.f32 %v2538, %v2680
        %2682 = vmatprep.mubr.f32.mxu0 %v2428
        %2683 = vmatmul.mubr.f32.gmra.mrb[0].mxu0 %v2275
        %v2684 = vpop.f32.mrb[0].mxu0
        %v2685 = vadd.f32 %v2542, %v2684
        %v2686 = vpop.f32.mrb[0].mxu0
        %v2687 = vadd.f32 %v2544, %v2686
        %2688 = vmatprep.mubr.f32.mxu0 %v2431
        %2689 = vmatmul.mubr.f32.gmra.mrb[0].mxu0 %v2279
        %v2690 = vpop.f32.mrb[0].mxu0
        %v2691 = vadd.f32 %v2548, %v2690
        %v2692 = vpop.f32.mrb[0].mxu0
        %v2693 = vadd.f32 %v2550, %v2692
        %2694 = vmatprep.mubr.f32.mxu0 %v2434
        %2695 = vmatmul.mubr.f32.gmra.mrb[0].mxu0 %v2283
        %v2696 = vpop.f32.mrb[0].mxu0
        %v2697 = vadd.f32 %v2554, %v2696
        %v2698 = vpop.f32.mrb[0].mxu0
        %v2699 = vadd.f32 %v2556, %v2698
        %2700 = vmatprep.mubr.f32.mxu0 %v2437
        %2701 = vmatmul.mubr.f32.gmra.mrb[0].mxu0 %v2287
        %v2702 = vpop.f32.mrb[0].mxu0
        %v2703 = vadd.f32 %v2560, %v2702
        %v2704 = vpop.f32.mrb[0].mxu0
        %v2705 = vadd.f32 %v2562, %v2704
        %2706 = vmatprep.mubr.f32.mxu0 %v2440
        %2707 = vmatmul.mubr.f32.gmra.mrb[0].mxu0 %v2291
        %v2708 = vpop.f32.mrb[0].mxu0
        %v2709 = vadd.f32 %v2566, %v2708
        %v2710 = vpop.f32.mrb[0].mxu0
        %v2711 = vadd.f32 %v2568, %v2710
        %2712 = vmatprep.mubr.f32.mxu0 %v2443
        %2713 = vmatmul.mubr.f32.gmra.mrb[0].mxu0 %v2295
        %v2714 = vpop.f32.mrb[0].mxu0
        %v2715 = vadd.f32 %v2572, %v2714
        %v2716 = vpop.f32.mrb[0].mxu0
        %v2717 = vadd.f32 %v2574, %v2716
        %2718 = vmatprep.mubr.f32.mxu0 %v2446
        %2719 = vmatmul.mubr.f32.gmra.mrb[0].mxu0 %v2299
        %v2720 = vpop.f32.mrb[0].mxu0
        %v2721 = vadd.f32 %v2578, %v2720
        %v2722 = vpop.f32.mrb[0].mxu0
        %v2723 = vadd.f32 %v2580, %v2722
        %2724 = vmatprep.mubr.f32.mxu0 %v2449
        %2725 = vmatmul.mubr.f32.gmra.mrb[0].mxu0 %v2303
        %v2726 = vpop.f32.mrb[0].mxu0
        %v2727 = vadd.f32 %v2584, %v2726
        %v2728 = vpop.f32.mrb[0].mxu0
        %v2729 = vadd.f32 %v2586, %v2728
        %2730 = vmatprep.mubr.f32.mxu0 %v2452
        %2731 = vmatmul.mubr.f32.gmra.mrb[0].mxu0 %v2307
        %v2732 = vpop.f32.mrb[0].mxu0
        %v2733 = vadd.f32 %v2590, %v2732
        %v2734 = vpop.f32.mrb[0].mxu0
        %v2735 = vadd.f32 %v2592, %v2734
        %2736 = vmatprep.mubr.f32.mxu0 %v2455
        %2737 = vmatmul.mubr.f32.gmra.mrb[0].mxu0 %v2311
        %v2738 = vpop.f32.mrb[0].mxu0
        %v2739 = vadd.f32 %v2596, %v2738
        %v2740 = vpop.f32.mrb[0].mxu0
        %v2741 = vadd.f32 %v2598, %v2740
        %2742 = vdwg.mxu0
        %v2743 = vld [vmem:[%s3] sm:$0xff]
        %v2744 = vld [vmem:[%s3 + $0x8] sm:$0xff]
        %v2745 = vld [vmem:[%s3 + $0x10] sm:$0xff]
        %v2746 = vld [vmem:[%s3 + $0x18] sm:$0xff]
        %v2747 = vld [vmem:[%s3 + $0x20] sm:$0xff]
        %v2748 = vld [vmem:[%s3 + $0x28] sm:$0xff]
        %v2749 = vld [vmem:[%s3 + $0x30] sm:$0xff]
        %v2750 = vld [vmem:[%s3 + $0x38] sm:$0xff]
        %v2751 = vld [vmem:[%s3 + $0x40] sm:$0xff]
        %v2752 = vld [vmem:[%s3 + $0x48] sm:$0xff]
        %v2753 = vld [vmem:[%s3 + $0x50] sm:$0xff]
        %v2754 = vld [vmem:[%s3 + $0x58] sm:$0xff]
        %v2755 = vld [vmem:[%s3 + $0x60] sm:$0xff]
        %v2756 = vld [vmem:[%s3 + $0x68] sm:$0xff]
        %v2757 = vld [vmem:[%s3 + $0x70] sm:$0xff]
        %v2758 = vld [vmem:[%s3 + $0x78] sm:$0xff]
        %v2759 = vld [vmem:[%s3 + $0x80] sm:$0xff]
        %v2760 = vld [vmem:[%s3 + $0x88] sm:$0xff]
        %v2761 = vld [vmem:[%s3 + $0x90] sm:$0xff]
        %v2762 = vld [vmem:[%s3 + $0x98] sm:$0xff]
        %v2763 = vld [vmem:[%s3 + $0xa0] sm:$0xff]
        %v2764 = vld [vmem:[%s3 + $0xa8] sm:$0xff]
        %v2765 = vld [vmem:[%s3 + $0xb0] sm:$0xff]
        %v2766 = vld [vmem:[%s3 + $0xb8] sm:$0xff]
        %v2767 = vld [vmem:[%s3 + $0xc0] sm:$0xff]
        %v2768 = vld [vmem:[%s3 + $0xc8] sm:$0xff]
        %v2769 = vld [vmem:[%s3 + $0xd0] sm:$0xff]
        %v2770 = vld [vmem:[%s3 + $0xd8] sm:$0xff]
        %v2771 = vld [vmem:[%s3 + $0xe0] sm:$0xff]
        %v2772 = vld [vmem:[%s3 + $0xe8] sm:$0xff]
        %v2773 = vld [vmem:[%s3 + $0xf0] sm:$0xff]
        %v2774 = vld [vmem:[%s3 + $0xf8] sm:$0xff]
        %v2775 = vld [vmem:[%s3 + $0x100] sm:$0xff]
        %v2776 = vld [vmem:[%s3 + $0x108] sm:$0xff]
        %v2777 = vld [vmem:[%s3 + $0x110] sm:$0xff]
        %v2778 = vld [vmem:[%s3 + $0x118] sm:$0xff]
        %v2779 = vld [vmem:[%s3 + $0x120] sm:$0xff]
        %v2780 = vld [vmem:[%s3 + $0x128] sm:$0xff]
        %v2781 = vld [vmem:[%s3 + $0x130] sm:$0xff]
        %v2782 = vld [vmem:[%s3 + $0x138] sm:$0xff]
        %v2783 = vld [vmem:[%s3 + $0x140] sm:$0xff]
        %v2784 = vld [vmem:[%s3 + $0x148] sm:$0xff]
        %v2785 = vld [vmem:[%s3 + $0x150] sm:$0xff]
        %v2786 = vld [vmem:[%s3 + $0x158] sm:$0xff]
        %v2787 = vld [vmem:[%s3 + $0x160] sm:$0xff]
        %v2788 = vld [vmem:[%s3 + $0x168] sm:$0xff]
        %v2789 = vld [vmem:[%s3 + $0x170] sm:$0xff]
        %v2790 = vld [vmem:[%s3 + $0x178] sm:$0xff]
        %v2791 = vld [vmem:[%s3 + $0x180] sm:$0xff]
        %v2792 = vld [vmem:[%s3 + $0x188] sm:$0xff]
        %v2793 = vld [vmem:[%s3 + $0x190] sm:$0xff]
        %v2794 = vld [vmem:[%s3 + $0x198] sm:$0xff]
        %v2795 = vld [vmem:[%s3 + $0x1a0] sm:$0xff]
        %v2796 = vld [vmem:[%s3 + $0x1a8] sm:$0xff]
        %v2797 = vld [vmem:[%s3 + $0x1b0] sm:$0xff]
        %v2798 = vld [vmem:[%s3 + $0x1b8] sm:$0xff]
        %v2799 = vld [vmem:[%s3 + $0x1c0] sm:$0xff]
        %v2800 = vld [vmem:[%s3 + $0x1c8] sm:$0xff]
        %v2801 = vld [vmem:[%s3 + $0x1d0] sm:$0xff]
        %v2802 = vld [vmem:[%s3 + $0x1d8] sm:$0xff]
        %v2803 = vld [vmem:[%s3 + $0x1e0] sm:$0xff]
        %v2804 = vld [vmem:[%s3 + $0x1e8] sm:$0xff]
        %v2805 = vld [vmem:[%s3 + $0x1f0] sm:$0xff]
        %v2806 = vld [vmem:[%s3 + $0x1f8] sm:$0xff]
        %v2807 = vld [vmem:[%s3 + $0x200] sm:$0xff]
        %v2808 = vld [vmem:[%s3 + $0x208] sm:$0xff]
        %v2809 = vld [vmem:[%s3 + $0x210] sm:$0xff]
        %v2810 = vld [vmem:[%s3 + $0x218] sm:$0xff]
        %v2811 = vld [vmem:[%s3 + $0x220] sm:$0xff]
        %v2812 = vld [vmem:[%s3 + $0x228] sm:$0xff]
        %v2813 = vld [vmem:[%s3 + $0x230] sm:$0xff]
        %v2814 = vld [vmem:[%s3 + $0x238] sm:$0xff]
        %v2815 = vld [vmem:[%s3 + $0x240] sm:$0xff]
        %v2816 = vld [vmem:[%s3 + $0x248] sm:$0xff]
        %v2817 = vld [vmem:[%s3 + $0x250] sm:$0xff]
        %v2818 = vld [vmem:[%s3 + $0x258] sm:$0xff]
        %v2819 = vld [vmem:[%s3 + $0x260] sm:$0xff]
        %v2820 = vld [vmem:[%s3 + $0x268] sm:$0xff]
        %v2821 = vld [vmem:[%s3 + $0x270] sm:$0xff]
        %v2822 = vld [vmem:[%s3 + $0x278] sm:$0xff]
        %v2823 = vld [vmem:[%s3 + $0x280] sm:$0xff]
        %v2824 = vld [vmem:[%s3 + $0x288] sm:$0xff]
        %v2825 = vld [vmem:[%s3 + $0x290] sm:$0xff]
        %v2826 = vld [vmem:[%s3 + $0x298] sm:$0xff]
        %v2827 = vld [vmem:[%s3 + $0x2a0] sm:$0xff]
        %v2828 = vld [vmem:[%s3 + $0x2a8] sm:$0xff]
        %v2829 = vld [vmem:[%s3 + $0x2b0] sm:$0xff]
        %v2830 = vld [vmem:[%s3 + $0x2b8] sm:$0xff]
        %v2831 = vld [vmem:[%s3 + $0x2c0] sm:$0xff]
        %v2832 = vld [vmem:[%s3 + $0x2c8] sm:$0xff]
        %v2833 = vld [vmem:[%s3 + $0x2d0] sm:$0xff]
        %v2834 = vld [vmem:[%s3 + $0x2d8] sm:$0xff]
        %v2835 = vld [vmem:[%s3 + $0x2e0] sm:$0xff]
        %v2836 = vld [vmem:[%s3 + $0x2e8] sm:$0xff]
        %v2837 = vld [vmem:[%s3 + $0x2f0] sm:$0xff]
        %v2838 = vld [vmem:[%s3 + $0x2f8] sm:$0xff]
        %v2839 = vld [vmem:[%s3 + $0x300] sm:$0xff]
        %v2840 = vld [vmem:[%s3 + $0x308] sm:$0xff]
        %v2841 = vld [vmem:[%s3 + $0x310] sm:$0xff]
        %v2842 = vld [vmem:[%s3 + $0x318] sm:$0xff]
        %v2843 = vld [vmem:[%s3 + $0x320] sm:$0xff]
        %v2844 = vld [vmem:[%s3 + $0x328] sm:$0xff]
        %v2845 = vld [vmem:[%s3 + $0x330] sm:$0xff]
        %v2846 = vld [vmem:[%s3 + $0x338] sm:$0xff]
        %2847 = vmatprep.subr.mxu0 %v2744
        %2848 = vmatpush1.msra.mxu0 %v2743
        %2849 = vmatprep.subr.mxu0 %v2746
        %2850 = vmatpush1.msra.mxu0 %v2745
        %2851 = vmatprep.subr.mxu0 %v2748
        %2852 = vmatpush1.msra.mxu0 %v2747
        %2853 = vmatprep.subr.mxu0 %v2750
        %2854 = vmatpush1.msra.mxu0 %v2749
        %2855 = vmatprep.subr.mxu0 %v2752
        %2856 = vmatpush1.msra.mxu0 %v2751
        %2857 = vmatprep.subr.mxu0 %v2754
        %2858 = vmatpush1.msra.mxu0 %v2753
        %2859 = vmatprep.subr.mxu0 %v2756
        %2860 = vmatpush1.msra.mxu0 %v2755
        %2861 = vmatprep.subr.mxu0 %v2758
        %2862 = vmatpush1.msra.mxu0 %v2757
        %2863 = vmatprep.subr.mxu0 %v2760
        %2864 = vmatpush1.msra.mxu0 %v2759
        %2865 = vmatprep.subr.mxu0 %v2762
        %2866 = vmatpush1.msra.mxu0 %v2761
        %2867 = vmatprep.subr.mxu0 %v2764
        %2868 = vmatpush1.msra.mxu0 %v2763
        %2869 = vmatprep.subr.mxu0 %v2766
        %2870 = vmatpush1.msra.mxu0 %v2765
        %2871 = vmatprep.subr.mxu0 %v2768
        %2872 = vmatpush1.msra.mxu0 %v2767
        %2873 = vmatprep.subr.mxu0 %v2770
        %2874 = vmatpush1.msra.mxu0 %v2769
        %2875 = vmatprep.subr.mxu0 %v2772
        %2876 = vmatpush1.msra.mxu0 %v2771
        %2877 = vmatprep.subr.mxu0 %v2774
        %2878 = vmatpush1.msra.mxu0 %v2773
        %2879 = vmatprep.subr.mxu0 %v2776
        %2880 = vmatpush1.msra.mxu0 %v2775
        %2881 = vmatprep.subr.mxu0 %v2778
        %2882 = vmatpush1.msra.mxu0 %v2777
        %2883 = vmatprep.subr.mxu0 %v2780
        %2884 = vmatpush1.msra.mxu0 %v2779
        %2885 = vmatprep.subr.mxu0 %v2782
        %2886 = vmatpush1.msra.mxu0 %v2781
        %2887 = vmatprep.subr.mxu0 %v2784
        %2888 = vmatpush1.msra.mxu0 %v2783
        %2889 = vmatprep.subr.mxu0 %v2786
        %2890 = vmatpush1.msra.mxu0 %v2785
        %2891 = vmatprep.subr.mxu0 %v2788
        %2892 = vmatpush1.msra.mxu0 %v2787
        %2893 = vmatprep.subr.mxu0 %v2790
        %2894 = vmatpush1.msra.mxu0 %v2789
        %2895 = vmatprep.subr.mxu0 %v2792
        %2896 = vmatpush1.msra.mxu0 %v2791
        %2897 = vmatprep.subr.mxu0 %v2794
        %2898 = vmatpush1.msra.mxu0 %v2793
        %2899 = vmatprep.subr.mxu0 %v2796
        %2900 = vmatpush1.msra.mxu0 %v2795
        %2901 = vmatprep.subr.mxu0 %v2798
        %2902 = vmatpush1.msra.mxu0 %v2797
        %2903 = vmatprep.subr.mxu0 %v2800
        %2904 = vmatpush1.msra.mxu0 %v2799
        %2905 = vmatprep.subr.mxu0 %v2802
        %2906 = vmatpush1.msra.mxu0 %v2801
        %2907 = vmatprep.subr.mxu0 %v2804
        %2908 = vmatpush1.msra.mxu0 %v2803
        %2909 = vmatprep.subr.mxu0 %v2806
        %2910 = vmatpush1.msra.mxu0 %v2805
        %2911 = vmatprep.mubr.f32.mxu0 %v2262
        %2912 = vmatmul.mubr.f32.gmra.mrb[0].mxu0 %v2261
        %v2913 = vpop.f32.mrb[0].mxu0
        %v2914 = vadd.f32 0.0, %v2913
        %v2915 = vpop.f32.mrb[0].mxu0
        %v2916 = vadd.f32 0.0, %v2915
        %2917 = vmatprep.mubr.f32.mxu0 %v2266
        %2918 = vmatmul.mubr.f32.gmra.mrb[0].mxu0 %v2265
        %v2919 = vpop.f32.mrb[0].mxu0
        %v2920 = vadd.f32 0.0, %v2919
        %v2921 = vpop.f32.mrb[0].mxu0
        %v2922 = vadd.f32 0.0, %v2921
        %2923 = vmatprep.mubr.f32.mxu0 %v2270
        %2924 = vmatmul.mubr.f32.gmra.mrb[0].mxu0 %v2269
        %v2925 = vpop.f32.mrb[0].mxu0
        %v2926 = vadd.f32 0.0, %v2925
        %v2927 = vpop.f32.mrb[0].mxu0
        %v2928 = vadd.f32 0.0, %v2927
        %2929 = vmatprep.mubr.f32.mxu0 %v2274
        %2930 = vmatmul.mubr.f32.gmra.mrb[0].mxu0 %v2273
        %v2931 = vpop.f32.mrb[0].mxu0
        %v2932 = vadd.f32 0.0, %v2931
        %v2933 = vpop.f32.mrb[0].mxu0
        %v2934 = vadd.f32 0.0, %v2933
        %2935 = vmatprep.mubr.f32.mxu0 %v2278
        %2936 = vmatmul.mubr.f32.gmra.mrb[0].mxu0 %v2277
        %v2937 = vpop.f32.mrb[0].mxu0
        %v2938 = vadd.f32 0.0, %v2937
        %v2939 = vpop.f32.mrb[0].mxu0
        %v2940 = vadd.f32 0.0, %v2939
        %2941 = vmatprep.mubr.f32.mxu0 %v2282
        %2942 = vmatmul.mubr.f32.gmra.mrb[0].mxu0 %v2281
        %v2943 = vpop.f32.mrb[0].mxu0
        %v2944 = vadd.f32 0.0, %v2943
        %v2945 = vpop.f32.mrb[0].mxu0
        %v2946 = vadd.f32 0.0, %v2945
        %2947 = vmatprep.mubr.f32.mxu0 %v2286
        %2948 = vmatmul.mubr.f32.gmra.mrb[0].mxu0 %v2285
        %v2949 = vpop.f32.mrb[0].mxu0
        %v2950 = vadd.f32 0.0, %v2949
        %v2951 = vpop.f32.mrb[0].mxu0
        %v2952 = vadd.f32 0.0, %v2951
        %2953 = vmatprep.mubr.f32.mxu0 %v2290
        %2954 = vmatmul.mubr.f32.gmra.mrb[0].mxu0 %v2289
        %v2955 = vpop.f32.mrb[0].mxu0
        %v2956 = vadd.f32 0.0, %v2955
        %v2957 = vpop.f32.mrb[0].mxu0
        %v2958 = vadd.f32 0.0, %v2957
        %2959 = vmatprep.mubr.f32.mxu0 %v2294
        %2960 = vmatmul.mubr.f32.gmra.mrb[0].mxu0 %v2293
        %v2961 = vpop.f32.mrb[0].mxu0
        %v2962 = vadd.f32 0.0, %v2961
        %v2963 = vpop.f32.mrb[0].mxu0
        %v2964 = vadd.f32 0.0, %v2963
        %2965 = vmatprep.mubr.f32.mxu0 %v2298
        %2966 = vmatmul.mubr.f32.gmra.mrb[0].mxu0 %v2297
        %v2967 = vpop.f32.mrb[0].mxu0
        %v2968 = vadd.f32 0.0, %v2967
        %v2969 = vpop.f32.mrb[0].mxu0
        %v2970 = vadd.f32 0.0, %v2969
        %2971 = vmatprep.mubr.f32.mxu0 %v2302
        %2972 = vmatmul.mubr.f32.gmra.mrb[0].mxu0 %v2301
        %v2973 = vpop.f32.mrb[0].mxu0
        %v2974 = vadd.f32 0.0, %v2973
        %v2975 = vpop.f32.mrb[0].mxu0
        %v2976 = vadd.f32 0.0, %v2975
        %2977 = vmatprep.mubr.f32.mxu0 %v2306
        %2978 = vmatmul.mubr.f32.gmra.mrb[0].mxu0 %v2305
        %v2979 = vpop.f32.mrb[0].mxu0
        %v2980 = vadd.f32 0.0, %v2979
        %v2981 = vpop.f32.mrb[0].mxu0
        %v2982 = vadd.f32 0.0, %v2981
        %2983 = vmatprep.mubr.f32.mxu0 %v2310
        %2984 = vmatmul.mubr.f32.gmra.mrb[0].mxu0 %v2309
        %v2985 = vpop.f32.mrb[0].mxu0
        %v2986 = vadd.f32 0.0, %v2985
        %v2987 = vpop.f32.mrb[0].mxu0
        %v2988 = vadd.f32 0.0, %v2987
        %2989 = vdwg.mxu0
        %2990 = vmatprep.subr.mxu0 %v2808
        %2991 = vmatpush1.msra.mxu0 %v2807
        %2992 = vmatprep.subr.mxu0 %v2810
        %2993 = vmatpush1.msra.mxu0 %v2809
        %2994 = vmatprep.subr.mxu0 %v2812
        %2995 = vmatpush1.msra.mxu0 %v2811
        %2996 = vmatprep.subr.mxu0 %v2814
        %2997 = vmatpush1.msra.mxu0 %v2813
        %2998 = vmatprep.subr.mxu0 %v2816
        %2999 = vmatpush1.msra.mxu0 %v2815
        %3000 = vmatprep.subr.mxu0 %v2818
        %3001 = vmatpush1.msra.mxu0 %v2817
        %3002 = vmatprep.subr.mxu0 %v2820
        %3003 = vmatpush1.msra.mxu0 %v2819
        %3004 = vmatprep.subr.mxu0 %v2822
        %3005 = vmatpush1.msra.mxu0 %v2821
        %3006 = vmatprep.subr.mxu0 %v2824
        %3007 = vmatpush1.msra.mxu0 %v2823
        %3008 = vmatprep.subr.mxu0 %v2826
        %3009 = vmatpush1.msra.mxu0 %v2825
        %3010 = vmatprep.subr.mxu0 %v2828
        %3011 = vmatpush1.msra.mxu0 %v2827
        %3012 = vmatprep.subr.mxu0 %v2830
        %3013 = vmatpush1.msra.mxu0 %v2829
        %3014 = vmatprep.subr.mxu0 %v2832
        %3015 = vmatpush1.msra.mxu0 %v2831
        %3016 = vmatprep.subr.mxu0 %v2834
        %3017 = vmatpush1.msra.mxu0 %v2833
        %3018 = vmatprep.subr.mxu0 %v2836
        %3019 = vmatpush1.msra.mxu0 %v2835
        %3020 = vmatprep.subr.mxu0 %v2838
        %3021 = vmatpush1.msra.mxu0 %v2837
        %3022 = vmatprep.subr.mxu0 %v2840
        %3023 = vmatpush1.msra.mxu0 %v2839
        %3024 = vmatprep.subr.mxu0 %v2842
        %3025 = vmatpush1.msra.mxu0 %v2841
        %3026 = vmatprep.subr.mxu0 %v2844
        %3027 = vmatpush1.msra.mxu0 %v2843
        %3028 = vmatprep.subr.mxu0 %v2846
        %3029 = vmatpush1.msra.mxu0 %v2845
        %3030 = vmatprep.subr.mxu0 0.0
        %3031 = vmatpush1.msra.mxu0 0.0
        %3032 = vmatprep.subr.mxu0 0.0
        %3033 = vmatpush1.msra.mxu0 0.0
        %3034 = vmatprep.subr.mxu0 0.0
        %3035 = vmatpush1.msra.mxu0 0.0
        %3036 = vmatprep.subr.mxu0 0.0
        %3037 = vmatpush1.msra.mxu0 0.0
        %3038 = vmatprep.subr.mxu0 0.0
        %3039 = vmatpush1.msra.mxu0 0.0
        %3040 = vmatprep.subr.mxu0 0.0
        %3041 = vmatpush1.msra.mxu0 0.0
        %3042 = vmatprep.subr.mxu0 0.0
        %3043 = vmatpush1.msra.mxu0 0.0
        %3044 = vmatprep.subr.mxu0 0.0
        %3045 = vmatpush1.msra.mxu0 0.0
        %3046 = vmatprep.subr.mxu0 0.0
        %3047 = vmatpush1.msra.mxu0 0.0
        %3048 = vmatprep.subr.mxu0 0.0
        %3049 = vmatpush1.msra.mxu0 0.0
        %3050 = vmatprep.subr.mxu0 0.0
        %3051 = vmatpush1.msra.mxu0 0.0
        %3052 = vmatprep.subr.mxu0 0.0
        %3053 = vmatpush1.msra.mxu0 0.0
        %3054 = vmatprep.mubr.f32.mxu0 %v2419
        %3055 = vmatmul.mubr.f32.gmra.mrb[0].mxu0 %v2263
        %v3056 = vpop.f32.mrb[0].mxu0
        %v3057 = vadd.f32 %v2914, %v3056
        %v3058 = vpop.f32.mrb[0].mxu0
        %v3059 = vadd.f32 %v2916, %v3058
        %3060 = vmatprep.mubr.f32.mxu0 %v2422
        %3061 = vmatmul.mubr.f32.gmra.mrb[0].mxu0 %v2267
        %v3062 = vpop.f32.mrb[0].mxu0
        %v3063 = vadd.f32 %v2920, %v3062
        %v3064 = vpop.f32.mrb[0].mxu0
        %v3065 = vadd.f32 %v2922, %v3064
        %3066 = vmatprep.mubr.f32.mxu0 %v2425
        %3067 = vmatmul.mubr.f32.gmra.mrb[0].mxu0 %v2271
        %v3068 = vpop.f32.mrb[0].mxu0
        %v3069 = vadd.f32 %v2926, %v3068
        %v3070 = vpop.f32.mrb[0].mxu0
        %v3071 = vadd.f32 %v2928, %v3070
        %3072 = vmatprep.mubr.f32.mxu0 %v2428
        %3073 = vmatmul.mubr.f32.gmra.mrb[0].mxu0 %v2275
        %v3074 = vpop.f32.mrb[0].mxu0
        %v3075 = vadd.f32 %v2932, %v3074
        %v3076 = vpop.f32.mrb[0].mxu0
        %v3077 = vadd.f32 %v2934, %v3076
        %3078 = vmatprep.mubr.f32.mxu0 %v2431
        %3079 = vmatmul.mubr.f32.gmra.mrb[0].mxu0 %v2279
        %v3080 = vpop.f32.mrb[0].mxu0
        %v3081 = vadd.f32 %v2938, %v3080
        %v3082 = vpop.f32.mrb[0].mxu0
        %v3083 = vadd.f32 %v2940, %v3082
        %3084 = vmatprep.mubr.f32.mxu0 %v2434
        %3085 = vmatmul.mubr.f32.gmra.mrb[0].mxu0 %v2283
        %v3086 = vpop.f32.mrb[0].mxu0
        %v3087 = vadd.f32 %v2944, %v3086
        %v3088 = vpop.f32.mrb[0].mxu0
        %v3089 = vadd.f32 %v2946, %v3088
        %3090 = vmatprep.mubr.f32.mxu0 %v2437
        %3091 = vmatmul.mubr.f32.gmra.mrb[0].mxu0 %v2287
        %v3092 = vpop.f32.mrb[0].mxu0
        %v3093 = vadd.f32 %v2950, %v3092
        %v3094 = vpop.f32.mrb[0].mxu0
        %v3095 = vadd.f32 %v2952, %v3094
        %3096 = vmatprep.mubr.f32.mxu0 %v2440
        %3097 = vmatmul.mubr.f32.gmra.mrb[0].mxu0 %v2291
        %v3098 = vpop.f32.mrb[0].mxu0
        %v3099 = vadd.f32 %v2956, %v3098
        %v3100 = vpop.f32.mrb[0].mxu0
        %v3101 = vadd.f32 %v2958, %v3100
        %3102 = vmatprep.mubr.f32.mxu0 %v2443
        %3103 = vmatmul.mubr.f32.gmra.mrb[0].mxu0 %v2295
        %v3104 = vpop.f32.mrb[0].mxu0
        %v3105 = vadd.f32 %v2962, %v3104
        %v3106 = vpop.f32.mrb[0].mxu0
        %v3107 = vadd.f32 %v2964, %v3106
        %3108 = vmatprep.mubr.f32.mxu0 %v2446
        %3109 = vmatmul.mubr.f32.gmra.mrb[0].mxu0 %v2299
        %v3110 = vpop.f32.mrb[0].mxu0
        %v3111 = vadd.f32 %v2968, %v3110
        %v3112 = vpop.f32.mrb[0].mxu0
        %v3113 = vadd.f32 %v2970, %v3112
        %3114 = vmatprep.mubr.f32.mxu0 %v2449
        %3115 = vmatmul.mubr.f32.gmra.mrb[0].mxu0 %v2303
        %v3116 = vpop.f32.mrb[0].mxu0
        %v3117 = vadd.f32 %v2974, %v3116
        %v3118 = vpop.f32.mrb[0].mxu0
        %v3119 = vadd.f32 %v2976, %v3118
        %3120 = vmatprep.mubr.f32.mxu0 %v2452
        %3121 = vmatmul.mubr.f32.gmra.mrb[0].mxu0 %v2307
        %v3122 = vpop.f32.mrb[0].mxu0
        %v3123 = vadd.f32 %v2980, %v3122
        %v3124 = vpop.f32.mrb[0].mxu0
        %v3125 = vadd.f32 %v2982, %v3124
        %3126 = vmatprep.mubr.f32.mxu0 %v2455
        %3127 = vmatmul.mubr.f32.gmra.mrb[0].mxu0 %v2311
        %v3128 = vpop.f32.mrb[0].mxu0
        %v3129 = vadd.f32 %v2986, %v3128
        %v3130 = vpop.f32.mrb[0].mxu0
        %v3131 = vadd.f32 %v2988, %v3130
        %3132 = vdwg.mxu0
        %v3133 = vmax.f32 %v2667, %v3057
        %v3134 = vmax.f32 %v2669, %v3059
        %v3135 = vmax.f32 %v2673, %v3063
        %v3136 = vmax.f32 %v2675, %v3065
        %v3137 = vmax.f32 %v2679, %v3069
        %v3138 = vmax.f32 %v2681, %v3071
        %v3139 = vmax.f32 %v2685, %v3075
        %v3140 = vmax.f32 %v2687, %v3077
        %v3141 = vmax.f32 %v2691, %v3081
        %v3142 = vmax.f32 %v2693, %v3083
        %v3143 = vmax.f32 %v2697, %v3087
        %v3144 = vmax.f32 %v2699, %v3089
        %v3145 = vmax.f32 %v2703, %v3093
        %v3146 = vmax.f32 %v2705, %v3095
        %v3147 = vmax.f32 %v2709, %v3099
        %v3148 = vmax.f32 %v2711, %v3101
        %v3149 = vmax.f32 %v2715, %v3105
        %v3150 = vmax.f32 %v2717, %v3107
        %v3151 = vmax.f32 %v2721, %v3111
        %v3152 = vmax.f32 %v2723, %v3113
        %v3153 = vmax.f32 %v2727, %v3117
        %v3154 = vmax.f32 %v2729, %v3119
        %v3155 = vmax.f32 %v2733, %v3123
        %v3156 = vmax.f32 %v2735, %v3125
        %v3157 = vmax.f32 %v2739, %v3129
        %v3158 = vmax.f32 %v2741, %v3131
        %v3159 = vld [vmem:[%s4] sm:$0xff]
        %v3160 = vld [vmem:[%s4 + $0x8] sm:$0xff]
        %v3161 = vld [vmem:[%s4 + $0x10] sm:$0xff]
        %v3162 = vld [vmem:[%s4 + $0x18] sm:$0xff]
        %v3163 = vld [vmem:[%s4 + $0x20] sm:$0xff]
        %v3164 = vld [vmem:[%s4 + $0x28] sm:$0xff]
        %v3165 = vld [vmem:[%s4 + $0x30] sm:$0xff]
        %v3166 = vld [vmem:[%s4 + $0x38] sm:$0xff]
        %v3167 = vld [vmem:[%s4 + $0x40] sm:$0xff]
        %v3168 = vld [vmem:[%s4 + $0x48] sm:$0xff]
        %v3169 = vld [vmem:[%s4 + $0x50] sm:$0xff]
        %v3170 = vld [vmem:[%s4 + $0x58] sm:$0xff]
        %v3171 = vld [vmem:[%s4 + $0x60] sm:$0xff]
        %v3172 = vld [vmem:[%s4 + $0x68] sm:$0xff]
        %v3173 = vld [vmem:[%s4 + $0x70] sm:$0xff]
        %v3174 = vld [vmem:[%s4 + $0x78] sm:$0xff]
        %v3175 = vld [vmem:[%s4 + $0x80] sm:$0xff]
        %v3176 = vld [vmem:[%s4 + $0x88] sm:$0xff]
        %v3177 = vld [vmem:[%s4 + $0x90] sm:$0xff]
        %v3178 = vld [vmem:[%s4 + $0x98] sm:$0xff]
        %v3179 = vld [vmem:[%s4 + $0xa0] sm:$0xff]
        %v3180 = vld [vmem:[%s4 + $0xa8] sm:$0xff]
        %v3181 = vld [vmem:[%s4 + $0xb0] sm:$0xff]
        %v3182 = vld [vmem:[%s4 + $0xb8] sm:$0xff]
        %v3183 = vld [vmem:[%s4 + $0xc0] sm:$0xff]
        %v3184 = vld [vmem:[%s4 + $0xc8] sm:$0xff]
        %v3185 = vld [vmem:[%s4 + $0xd0] sm:$0xff]
        %v3186 = vld [vmem:[%s4 + $0xd8] sm:$0xff]
        %v3187 = vld [vmem:[%s4 + $0xe0] sm:$0xff]
        %v3188 = vld [vmem:[%s4 + $0xe8] sm:$0xff]
        %v3189 = vld [vmem:[%s4 + $0xf0] sm:$0xff]
        %v3190 = vld [vmem:[%s4 + $0xf8] sm:$0xff]
        %v3191 = vld [vmem:[%s4 + $0x100] sm:$0xff]
        %v3192 = vld [vmem:[%s4 + $0x108] sm:$0xff]
        %v3193 = vld [vmem:[%s4 + $0x110] sm:$0xff]
        %v3194 = vld [vmem:[%s4 + $0x118] sm:$0xff]
        %v3195 = vld [vmem:[%s4 + $0x120] sm:$0xff]
        %v3196 = vld [vmem:[%s4 + $0x128] sm:$0xff]
        %v3197 = vld [vmem:[%s4 + $0x130] sm:$0xff]
        %v3198 = vld [vmem:[%s4 + $0x138] sm:$0xff]
        %v3199 = vld [vmem:[%s4 + $0x140] sm:$0xff]
        %v3200 = vld [vmem:[%s4 + $0x148] sm:$0xff]
        %v3201 = vld [vmem:[%s4 + $0x150] sm:$0xff]
        %v3202 = vld [vmem:[%s4 + $0x158] sm:$0xff]
        %v3203 = vld [vmem:[%s4 + $0x160] sm:$0xff]
        %v3204 = vld [vmem:[%s4 + $0x168] sm:$0xff]
        %v3205 = vld [vmem:[%s4 + $0x170] sm:$0xff]
        %v3206 = vld [vmem:[%s4 + $0x178] sm:$0xff]
        %v3207 = vld [vmem:[%s4 + $0x180] sm:$0xff]
        %v3208 = vld [vmem:[%s4 + $0x188] sm:$0xff]
        %v3209 = vld [vmem:[%s4 + $0x190] sm:$0xff]
        %v3210 = vld [vmem:[%s4 + $0x198] sm:$0xff]
        %s3211 = scalar_lea.vmem %s4, 416
        %v3212 = vld [vmem:[%s3211] sm:$0xff]
        %v3213 = vld [vmem:[%s3211 + $0x8] sm:$0xff]
        %v3214 = vld [vmem:[%s3211 + $0x10] sm:$0xff]
        %v3215 = vld [vmem:[%s3211 + $0x18] sm:$0xff]
        %v3216 = vld [vmem:[%s3211 + $0x20] sm:$0xff]
        %v3217 = vld [vmem:[%s3211 + $0x28] sm:$0xff]
        %v3218 = vld [vmem:[%s3211 + $0x30] sm:$0xff]
        %v3219 = vld [vmem:[%s3211 + $0x38] sm:$0xff]
        %v3220 = vld [vmem:[%s3211 + $0x40] sm:$0xff]
        %v3221 = vld [vmem:[%s3211 + $0x48] sm:$0xff]
        %v3222 = vld [vmem:[%s3211 + $0x50] sm:$0xff]
        %v3223 = vld [vmem:[%s3211 + $0x58] sm:$0xff]
        %v3224 = vld [vmem:[%s3211 + $0x60] sm:$0xff]
        %v3225 = vld [vmem:[%s3211 + $0x68] sm:$0xff]
        %v3226 = vld [vmem:[%s3211 + $0x70] sm:$0xff]
        %v3227 = vld [vmem:[%s3211 + $0x78] sm:$0xff]
        %v3228 = vld [vmem:[%s3211 + $0x80] sm:$0xff]
        %v3229 = vld [vmem:[%s3211 + $0x88] sm:$0xff]
        %v3230 = vld [vmem:[%s3211 + $0x90] sm:$0xff]
        %v3231 = vld [vmem:[%s3211 + $0x98] sm:$0xff]
        %v3232 = vld [vmem:[%s3211 + $0xa0] sm:$0xff]
        %v3233 = vld [vmem:[%s3211 + $0xa8] sm:$0xff]
        %v3234 = vld [vmem:[%s3211 + $0xb0] sm:$0xff]
        %v3235 = vld [vmem:[%s3211 + $0xb8] sm:$0xff]
        %v3236 = vld [vmem:[%s3211 + $0xc0] sm:$0xff]
        %v3237 = vld [vmem:[%s3211 + $0xc8] sm:$0xff]
        %v3238 = vld [vmem:[%s3211 + $0xd0] sm:$0xff]
        %v3239 = vld [vmem:[%s3211 + $0xd8] sm:$0xff]
        %v3240 = vld [vmem:[%s3211 + $0xe0] sm:$0xff]
        %v3241 = vld [vmem:[%s3211 + $0xe8] sm:$0xff]
        %v3242 = vld [vmem:[%s3211 + $0xf0] sm:$0xff]
        %v3243 = vld [vmem:[%s3211 + $0xf8] sm:$0xff]
        %v3244 = vld [vmem:[%s3211 + $0x100] sm:$0xff]
        %v3245 = vld [vmem:[%s3211 + $0x108] sm:$0xff]
        %v3246 = vld [vmem:[%s3211 + $0x110] sm:$0xff]
        %v3247 = vld [vmem:[%s3211 + $0x118] sm:$0xff]
        %v3248 = vld [vmem:[%s3211 + $0x120] sm:$0xff]
        %v3249 = vld [vmem:[%s3211 + $0x128] sm:$0xff]
        %v3250 = vld [vmem:[%s3211 + $0x130] sm:$0xff]
        %v3251 = vld [vmem:[%s3211 + $0x138] sm:$0xff]
        %v3252 = vld [vmem:[%s3211 + $0x140] sm:$0xff]
        %v3253 = vld [vmem:[%s3211 + $0x148] sm:$0xff]
        %v3254 = vld [vmem:[%s3211 + $0x150] sm:$0xff]
        %v3255 = vld [vmem:[%s3211 + $0x158] sm:$0xff]
        %v3256 = vld [vmem:[%s3211 + $0x160] sm:$0xff]
        %v3257 = vld [vmem:[%s3211 + $0x168] sm:$0xff]
        %v3258 = vld [vmem:[%s3211 + $0x170] sm:$0xff]
        %v3259 = vld [vmem:[%s3211 + $0x178] sm:$0xff]
        %v3260 = vld [vmem:[%s3211 + $0x180] sm:$0xff]
        %v3261 = vld [vmem:[%s3211 + $0x188] sm:$0xff]
        %v3262 = vld [vmem:[%s3211 + $0x190] sm:$0xff]
        %v3263 = vld [vmem:[%s3211 + $0x198] sm:$0xff]
        %vm3264 = vcmask 654336
        %v3266 = vsel %vm3264, %v3136, 0
        %v3269 = vsel %vm3264, %v3138, 0
        %v3272 = vsel %vm3264, %v3140, 0
        %v3275 = vsel %vm3264, %v3142, 0
        %v3278 = vsel %vm3264, %v3144, 0
        %v3281 = vsel %vm3264, %v3146, 0
        %v3284 = vsel %vm3264, %v3148, 0
        %v3287 = vsel %vm3264, %v3150, 0
        %v3290 = vsel %vm3264, %v3152, 0
        %v3293 = vsel %vm3264, %v3154, 0
        %v3296 = vsel %vm3264, %v3156, 0
        %3298 = vmatprep.subr.mxu0 %v3213
        %3299 = vmatpush1.msra.mxu0 %v3212
        %3300 = vmatprep.subr.mxu0 %v3215
        %3301 = vmatpush1.msra.mxu0 %v3214
        %3302 = vmatprep.subr.mxu0 %v3217
        %3303 = vmatpush1.msra.mxu0 %v3216
        %3304 = vmatprep.subr.mxu0 %v3219
        %3305 = vmatpush1.msra.mxu0 %v3218
        %3306 = vmatprep.subr.mxu0 %v3221
        %3307 = vmatpush1.msra.mxu0 %v3220
        %3308 = vmatprep.subr.mxu0 %v3223
        %3309 = vmatpush1.msra.mxu0 %v3222
        %3310 = vmatprep.subr.mxu0 %v3225
        %3311 = vmatpush1.msra.mxu0 %v3224
        %3312 = vmatprep.subr.mxu0 %v3227
        %3313 = vmatpush1.msra.mxu0 %v3226
        %3314 = vmatprep.subr.mxu0 %v3229
        %3315 = vmatpush1.msra.mxu0 %v3228
        %3316 = vmatprep.subr.mxu0 %v3231
        %3317 = vmatpush1.msra.mxu0 %v3230
        %3318 = vmatprep.subr.mxu0 %v3233
        %3319 = vmatpush1.msra.mxu0 %v3232
        %3320 = vmatprep.subr.mxu0 %v3235
        %3321 = vmatpush1.msra.mxu0 %v3234
        %3322 = vmatprep.subr.mxu0 %v3237
        %3323 = vmatpush1.msra.mxu0 %v3236
        %3324 = vmatprep.subr.mxu0 %v3239
        %3325 = vmatpush1.msra.mxu0 %v3238
        %3326 = vmatprep.subr.mxu0 %v3241
        %3327 = vmatpush1.msra.mxu0 %v3240
        %3328 = vmatprep.subr.mxu0 %v3243
        %3329 = vmatpush1.msra.mxu0 %v3242
        %3330 = vmatprep.subr.mxu0 %v3245
        %3331 = vmatpush1.msra.mxu0 %v3244
        %3332 = vmatprep.subr.mxu0 %v3247
        %3333 = vmatpush1.msra.mxu0 %v3246
        %3334 = vmatprep.subr.mxu0 %v3249
        %3335 = vmatpush1.msra.mxu0 %v3248
        %3336 = vmatprep.subr.mxu0 %v3251
        %3337 = vmatpush1.msra.mxu0 %v3250
        %3338 = vmatprep.subr.mxu0 %v3253
        %3339 = vmatpush1.msra.mxu0 %v3252
        %3340 = vmatprep.subr.mxu0 %v3255
        %3341 = vmatpush1.msra.mxu0 %v3254
        %3342 = vmatprep.subr.mxu0 %v3257
        %3343 = vmatpush1.msra.mxu0 %v3256
        %3344 = vmatprep.subr.mxu0 %v3259
        %3345 = vmatpush1.msra.mxu0 %v3258
        %3346 = vmatprep.subr.mxu0 %v3261
        %3347 = vmatpush1.msra.mxu0 %v3260
        %3348 = vmatprep.subr.mxu0 %v3263
        %3349 = vmatpush1.msra.mxu0 %v3262
        %3350 = vmatprep.subr.mxu0 0.0
        %3351 = vmatpush1.msra.mxu0 0.0
        %3352 = vmatprep.subr.mxu0 0.0
        %3353 = vmatpush1.msra.mxu0 0.0
        %3354 = vmatprep.subr.mxu0 0.0
        %3355 = vmatpush1.msra.mxu0 0.0
        %3356 = vmatprep.subr.mxu0 0.0
        %3357 = vmatpush1.msra.mxu0 0.0
        %3358 = vmatprep.subr.mxu0 0.0
        %3359 = vmatpush1.msra.mxu0 0.0
        %3360 = vmatprep.subr.mxu0 0.0
        %3361 = vmatpush1.msra.mxu0 0.0
        %3362 = vmatprep.mubr.f32.mxu0 %v3266
        %3363 = vmatmul.mubr.f32.gmra.mrb[0].mxu0 %v3135
        %v3364 = vpop.f32.mrb[0].mxu0
        %v3365 = vadd.f32 0.0, %v3364
        %v3366 = vpop.f32.mrb[0].mxu0
        %v3367 = vadd.f32 0.0, %v3366
        %3368 = vmatprep.mubr.f32.mxu0 %v3269
        %3369 = vmatmul.mubr.f32.gmra.mrb[0].mxu0 %v3137
        %v3370 = vpop.f32.mrb[0].mxu0
        %v3371 = vadd.f32 0.0, %v3370
        %v3372 = vpop.f32.mrb[0].mxu0
        %v3373 = vadd.f32 0.0, %v3372
        %3374 = vmatprep.mubr.f32.mxu0 %v3272
        %3375 = vmatmul.mubr.f32.gmra.mrb[0].mxu0 %v3139
        %v3376 = vpop.f32.mrb[0].mxu0
        %v3377 = vadd.f32 0.0, %v3376
        %v3378 = vpop.f32.mrb[0].mxu0
        %v3379 = vadd.f32 0.0, %v3378
        %3380 = vmatprep.mubr.f32.mxu0 %v3275
        %3381 = vmatmul.mubr.f32.gmra.mrb[0].mxu0 %v3141
        %v3382 = vpop.f32.mrb[0].mxu0
        %v3383 = vadd.f32 0.0, %v3382
        %v3384 = vpop.f32.mrb[0].mxu0
        %v3385 = vadd.f32 0.0, %v3384
        %3386 = vmatprep.mubr.f32.mxu0 %v3278
        %3387 = vmatmul.mubr.f32.gmra.mrb[0].mxu0 %v3143
        %v3388 = vpop.f32.mrb[0].mxu0
        %v3389 = vadd.f32 0.0, %v3388
        %v3390 = vpop.f32.mrb[0].mxu0
        %v3391 = vadd.f32 0.0, %v3390
        %3392 = vmatprep.mubr.f32.mxu0 %v3281
        %3393 = vmatmul.mubr.f32.gmra.mrb[0].mxu0 %v3145
        %v3394 = vpop.f32.mrb[0].mxu0
        %v3395 = vadd.f32 0.0, %v3394
        %v3396 = vpop.f32.mrb[0].mxu0
        %v3397 = vadd.f32 0.0, %v3396
        %3398 = vmatprep.mubr.f32.mxu0 %v3284
        %3399 = vmatmul.mubr.f32.gmra.mrb[0].mxu0 %v3147
        %v3400 = vpop.f32.mrb[0].mxu0
        %v3401 = vadd.f32 0.0, %v3400
        %v3402 = vpop.f32.mrb[0].mxu0
        %v3403 = vadd.f32 0.0, %v3402
        %3404 = vmatprep.mubr.f32.mxu0 %v3287
        %3405 = vmatmul.mubr.f32.gmra.mrb[0].mxu0 %v3149
        %v3406 = vpop.f32.mrb[0].mxu0
        %v3407 = vadd.f32 0.0, %v3406
        %v3408 = vpop.f32.mrb[0].mxu0
        %v3409 = vadd.f32 0.0, %v3408
        %3410 = vmatprep.mubr.f32.mxu0 %v3290
        %3411 = vmatmul.mubr.f32.gmra.mrb[0].mxu0 %v3151
        %v3412 = vpop.f32.mrb[0].mxu0
        %v3413 = vadd.f32 0.0, %v3412
        %v3414 = vpop.f32.mrb[0].mxu0
        %v3415 = vadd.f32 0.0, %v3414
        %3416 = vmatprep.mubr.f32.mxu0 %v3293
        %3417 = vmatmul.mubr.f32.gmra.mrb[0].mxu0 %v3153
        %v3418 = vpop.f32.mrb[0].mxu0
        %v3419 = vadd.f32 0.0, %v3418
        %v3420 = vpop.f32.mrb[0].mxu0
        %v3421 = vadd.f32 0.0, %v3420
        %3422 = vmatprep.mubr.f32.mxu0 %v3296
        %3423 = vmatmul.mubr.f32.gmra.mrb[0].mxu0 %v3155
        %v3424 = vpop.f32.mrb[0].mxu0
        %v3425 = vpop.f32.mrb[0].mxu0
        %3426 = vdwg.mxu0
        %v3428 = vsel %vm3264, %v3134, 0
        %3430 = vmatprep.subr.mxu0 %v3160
        %3431 = vmatpush1.msra.mxu0 %v3159
        %3432 = vmatprep.subr.mxu0 %v3162
        %3433 = vmatpush1.msra.mxu0 %v3161
        %3434 = vmatprep.subr.mxu0 %v3164
        %3435 = vmatpush1.msra.mxu0 %v3163
        %3436 = vmatprep.subr.mxu0 %v3166
        %3437 = vmatpush1.msra.mxu0 %v3165
        %3438 = vmatprep.subr.mxu0 %v3168
        %3439 = vmatpush1.msra.mxu0 %v3167
        %3440 = vmatprep.subr.mxu0 %v3170
        %3441 = vmatpush1.msra.mxu0 %v3169
        %3442 = vmatprep.subr.mxu0 %v3172
        %3443 = vmatpush1.msra.mxu0 %v3171
        %3444 = vmatprep.subr.mxu0 %v3174
        %3445 = vmatpush1.msra.mxu0 %v3173
        %3446 = vmatprep.subr.mxu0 %v3176
        %3447 = vmatpush1.msra.mxu0 %v3175
        %3448 = vmatprep.subr.mxu0 %v3178
        %3449 = vmatpush1.msra.mxu0 %v3177
        %3450 = vmatprep.subr.mxu0 %v3180
        %3451 = vmatpush1.msra.mxu0 %v3179
        %3452 = vmatprep.subr.mxu0 %v3182
        %3453 = vmatpush1.msra.mxu0 %v3181
        %3454 = vmatprep.subr.mxu0 %v3184
        %3455 = vmatpush1.msra.mxu0 %v3183
        %3456 = vmatprep.subr.mxu0 %v3186
        %3457 = vmatpush1.msra.mxu0 %v3185
        %3458 = vmatprep.subr.mxu0 %v3188
        %3459 = vmatpush1.msra.mxu0 %v3187
        %3460 = vmatprep.subr.mxu0 %v3190
        %3461 = vmatpush1.msra.mxu0 %v3189
        %3462 = vmatprep.subr.mxu0 %v3192
        %3463 = vmatpush1.msra.mxu0 %v3191
        %3464 = vmatprep.subr.mxu0 %v3194
        %3465 = vmatpush1.msra.mxu0 %v3193
        %3466 = vmatprep.subr.mxu0 %v3196
        %3467 = vmatpush1.msra.mxu0 %v3195
        %3468 = vmatprep.subr.mxu0 %v3198
        %3469 = vmatpush1.msra.mxu0 %v3197
        %3470 = vmatprep.subr.mxu0 %v3200
        %3471 = vmatpush1.msra.mxu0 %v3199
        %3472 = vmatprep.subr.mxu0 %v3202
        %3473 = vmatpush1.msra.mxu0 %v3201
        %3474 = vmatprep.subr.mxu0 %v3204
        %3475 = vmatpush1.msra.mxu0 %v3203
        %3476 = vmatprep.subr.mxu0 %v3206
        %3477 = vmatpush1.msra.mxu0 %v3205
        %3478 = vmatprep.subr.mxu0 %v3208
        %3479 = vmatpush1.msra.mxu0 %v3207
        %3480 = vmatprep.subr.mxu0 %v3210
        %3481 = vmatpush1.msra.mxu0 %v3209
        %3482 = vmatprep.subr.mxu0 0.0
        %3483 = vmatpush1.msra.mxu0 0.0
        %3484 = vmatprep.subr.mxu0 0.0
        %3485 = vmatpush1.msra.mxu0 0.0
        %3486 = vmatprep.subr.mxu0 0.0
        %3487 = vmatpush1.msra.mxu0 0.0
        %3488 = vmatprep.subr.mxu0 0.0
        %3489 = vmatpush1.msra.mxu0 0.0
        %3490 = vmatprep.subr.mxu0 0.0
        %3491 = vmatpush1.msra.mxu0 0.0
        %3492 = vmatprep.subr.mxu0 0.0
        %3493 = vmatpush1.msra.mxu0 0.0
        %3494 = vmatprep.mubr.f32.mxu0 %v3428
        %3495 = vmatmul.mubr.f32.gmra.mrb[0].mxu0 %v3133
        %v3496 = vpop.f32.mrb[0].mxu0
        %v3497 = vadd.f32 %v3365, %v3496
        %v3498 = vpop.f32.mrb[0].mxu0
        %v3499 = vadd.f32 %v3367, %v3498
        %3500 = vmatprep.mubr.f32.mxu0 %v3266
        %3501 = vmatmul.mubr.f32.gmra.mrb[0].mxu0 %v3135
        %v3502 = vpop.f32.mrb[0].mxu0
        %v3503 = vadd.f32 %v3371, %v3502
        %v3504 = vpop.f32.mrb[0].mxu0
        %v3505 = vadd.f32 %v3373, %v3504
        %3506 = vmatprep.mubr.f32.mxu0 %v3269
        %3507 = vmatmul.mubr.f32.gmra.mrb[0].mxu0 %v3137
        %v3508 = vpop.f32.mrb[0].mxu0
        %v3509 = vadd.f32 %v3377, %v3508
        %v3510 = vpop.f32.mrb[0].mxu0
        %v3511 = vadd.f32 %v3379, %v3510
        %3512 = vmatprep.mubr.f32.mxu0 %v3272
        %3513 = vmatmul.mubr.f32.gmra.mrb[0].mxu0 %v3139
        %v3514 = vpop.f32.mrb[0].mxu0
        %v3515 = vadd.f32 %v3383, %v3514
        %v3516 = vpop.f32.mrb[0].mxu0
        %v3517 = vadd.f32 %v3385, %v3516
        %3518 = vmatprep.mubr.f32.mxu0 %v3275
        %3519 = vmatmul.mubr.f32.gmra.mrb[0].mxu0 %v3141
        %v3520 = vpop.f32.mrb[0].mxu0
        %v3521 = vadd.f32 %v3389, %v3520
        %v3522 = vpop.f32.mrb[0].mxu0
        %v3523 = vadd.f32 %v3391, %v3522
        %3524 = vmatprep.mubr.f32.mxu0 %v3278
        %3525 = vmatmul.mubr.f32.gmra.mrb[0].mxu0 %v3143
        %v3526 = vpop.f32.mrb[0].mxu0
        %v3527 = vadd.f32 %v3395, %v3526
        %v3528 = vpop.f32.mrb[0].mxu0
        %v3529 = vadd.f32 %v3397, %v3528
        %3530 = vmatprep.mubr.f32.mxu0 %v3281
        %3531 = vmatmul.mubr.f32.gmra.mrb[0].mxu0 %v3145
        %v3532 = vpop.f32.mrb[0].mxu0
        %v3533 = vadd.f32 %v3401, %v3532
        %v3534 = vpop.f32.mrb[0].mxu0
        %v3535 = vadd.f32 %v3403, %v3534
        %3536 = vmatprep.mubr.f32.mxu0 %v3284
        %3537 = vmatmul.mubr.f32.gmra.mrb[0].mxu0 %v3147
        %v3538 = vpop.f32.mrb[0].mxu0
        %v3539 = vadd.f32 %v3407, %v3538
        %v3540 = vpop.f32.mrb[0].mxu0
        %v3541 = vadd.f32 %v3409, %v3540
        %3542 = vmatprep.mubr.f32.mxu0 %v3287
        %3543 = vmatmul.mubr.f32.gmra.mrb[0].mxu0 %v3149
        %v3544 = vpop.f32.mrb[0].mxu0
        %v3545 = vadd.f32 %v3413, %v3544
        %v3546 = vpop.f32.mrb[0].mxu0
        %v3547 = vadd.f32 %v3415, %v3546
        %3548 = vmatprep.mubr.f32.mxu0 %v3290
        %3549 = vmatmul.mubr.f32.gmra.mrb[0].mxu0 %v3151
        %v3550 = vpop.f32.mrb[0].mxu0
        %v3551 = vadd.f32 %v3419, %v3550
        %v3552 = vpop.f32.mrb[0].mxu0
        %v3553 = vadd.f32 %v3421, %v3552
        %3554 = vmatprep.mubr.f32.mxu0 %v3293
        %3555 = vmatmul.mubr.f32.gmra.mrb[0].mxu0 %v3153
        %v3556 = vpop.f32.mrb[0].mxu0
        %v3557 = vpop.f32.mrb[0].mxu0
        %3558 = vdwg.mxu0
        %s3559 = scalar_lea.vmem %s4, 832
        %v3560 = vld [vmem:[%s3559] sm:$0xff]
        %v3561 = vld [vmem:[%s3559 + $0x8] sm:$0xff]
        %v3562 = vld [vmem:[%s3559 + $0x10] sm:$0xff]
        %v3563 = vld [vmem:[%s3559 + $0x18] sm:$0xff]
        %v3564 = vld [vmem:[%s3559 + $0x20] sm:$0xff]
        %v3565 = vld [vmem:[%s3559 + $0x28] sm:$0xff]
        %v3566 = vld [vmem:[%s3559 + $0x30] sm:$0xff]
        %v3567 = vld [vmem:[%s3559 + $0x38] sm:$0xff]
        %v3568 = vld [vmem:[%s3559 + $0x40] sm:$0xff]
        %v3569 = vld [vmem:[%s3559 + $0x48] sm:$0xff]
        %v3570 = vld [vmem:[%s3559 + $0x50] sm:$0xff]
        %v3571 = vld [vmem:[%s3559 + $0x58] sm:$0xff]
        %v3572 = vld [vmem:[%s3559 + $0x60] sm:$0xff]
        %v3573 = vld [vmem:[%s3559 + $0x68] sm:$0xff]
        %v3574 = vld [vmem:[%s3559 + $0x70] sm:$0xff]
        %v3575 = vld [vmem:[%s3559 + $0x78] sm:$0xff]
        %v3576 = vld [vmem:[%s3559 + $0x80] sm:$0xff]
        %v3577 = vld [vmem:[%s3559 + $0x88] sm:$0xff]
        %v3578 = vld [vmem:[%s3559 + $0x90] sm:$0xff]
        %v3579 = vld [vmem:[%s3559 + $0x98] sm:$0xff]
        %v3580 = vld [vmem:[%s3559 + $0xa0] sm:$0xff]
        %v3581 = vld [vmem:[%s3559 + $0xa8] sm:$0xff]
        %v3582 = vld [vmem:[%s3559 + $0xb0] sm:$0xff]
        %v3583 = vld [vmem:[%s3559 + $0xb8] sm:$0xff]
        %v3584 = vld [vmem:[%s3559 + $0xc0] sm:$0xff]
        %v3585 = vld [vmem:[%s3559 + $0xc8] sm:$0xff]
        %v3586 = vld [vmem:[%s3559 + $0xd0] sm:$0xff]
        %v3587 = vld [vmem:[%s3559 + $0xd8] sm:$0xff]
        %v3588 = vld [vmem:[%s3559 + $0xe0] sm:$0xff]
        %v3589 = vld [vmem:[%s3559 + $0xe8] sm:$0xff]
        %v3590 = vld [vmem:[%s3559 + $0xf0] sm:$0xff]
        %v3591 = vld [vmem:[%s3559 + $0xf8] sm:$0xff]
        %v3592 = vld [vmem:[%s3559 + $0x100] sm:$0xff]
        %v3593 = vld [vmem:[%s3559 + $0x108] sm:$0xff]
        %v3594 = vld [vmem:[%s3559 + $0x110] sm:$0xff]
        %v3595 = vld [vmem:[%s3559 + $0x118] sm:$0xff]
        %v3596 = vld [vmem:[%s3559 + $0x120] sm:$0xff]
        %v3597 = vld [vmem:[%s3559 + $0x128] sm:$0xff]
        %v3598 = vld [vmem:[%s3559 + $0x130] sm:$0xff]
        %v3599 = vld [vmem:[%s3559 + $0x138] sm:$0xff]
        %v3600 = vld [vmem:[%s3559 + $0x140] sm:$0xff]
        %v3601 = vld [vmem:[%s3559 + $0x148] sm:$0xff]
        %v3602 = vld [vmem:[%s3559 + $0x150] sm:$0xff]
        %v3603 = vld [vmem:[%s3559 + $0x158] sm:$0xff]
        %v3604 = vld [vmem:[%s3559 + $0x160] sm:$0xff]
        %v3605 = vld [vmem:[%s3559 + $0x168] sm:$0xff]
        %v3606 = vld [vmem:[%s3559 + $0x170] sm:$0xff]
        %v3607 = vld [vmem:[%s3559 + $0x178] sm:$0xff]
        %v3608 = vld [vmem:[%s3559 + $0x180] sm:$0xff]
        %v3609 = vld [vmem:[%s3559 + $0x188] sm:$0xff]
        %v3610 = vld [vmem:[%s3559 + $0x190] sm:$0xff]
        %v3611 = vld [vmem:[%s3559 + $0x198] sm:$0xff]
        %v3613 = vsel %vm3264, %v3158, 0
        %3615 = vmatprep.subr.mxu0 %v3561
        %3616 = vmatpush1.msra.mxu0 %v3560
        %3617 = vmatprep.subr.mxu0 %v3563
        %3618 = vmatpush1.msra.mxu0 %v3562
        %3619 = vmatprep.subr.mxu0 %v3565
        %3620 = vmatpush1.msra.mxu0 %v3564
        %3621 = vmatprep.subr.mxu0 %v3567
        %3622 = vmatpush1.msra.mxu0 %v3566
        %3623 = vmatprep.subr.mxu0 %v3569
        %3624 = vmatpush1.msra.mxu0 %v3568
        %3625 = vmatprep.subr.mxu0 %v3571
        %3626 = vmatpush1.msra.mxu0 %v3570
        %3627 = vmatprep.subr.mxu0 %v3573
        %3628 = vmatpush1.msra.mxu0 %v3572
        %3629 = vmatprep.subr.mxu0 %v3575
        %3630 = vmatpush1.msra.mxu0 %v3574
        %3631 = vmatprep.subr.mxu0 %v3577
        %3632 = vmatpush1.msra.mxu0 %v3576
        %3633 = vmatprep.subr.mxu0 %v3579
        %3634 = vmatpush1.msra.mxu0 %v3578
        %3635 = vmatprep.subr.mxu0 %v3581
        %3636 = vmatpush1.msra.mxu0 %v3580
        %3637 = vmatprep.subr.mxu0 %v3583
        %3638 = vmatpush1.msra.mxu0 %v3582
        %3639 = vmatprep.subr.mxu0 %v3585
        %3640 = vmatpush1.msra.mxu0 %v3584
        %3641 = vmatprep.subr.mxu0 %v3587
        %3642 = vmatpush1.msra.mxu0 %v3586
        %3643 = vmatprep.subr.mxu0 %v3589
        %3644 = vmatpush1.msra.mxu0 %v3588
        %3645 = vmatprep.subr.mxu0 %v3591
        %3646 = vmatpush1.msra.mxu0 %v3590
        %3647 = vmatprep.subr.mxu0 %v3593
        %3648 = vmatpush1.msra.mxu0 %v3592
        %3649 = vmatprep.subr.mxu0 %v3595
        %3650 = vmatpush1.msra.mxu0 %v3594
        %3651 = vmatprep.subr.mxu0 %v3597
        %3652 = vmatpush1.msra.mxu0 %v3596
        %3653 = vmatprep.subr.mxu0 %v3599
        %3654 = vmatpush1.msra.mxu0 %v3598
        %3655 = vmatprep.subr.mxu0 %v3601
        %3656 = vmatpush1.msra.mxu0 %v3600
        %3657 = vmatprep.subr.mxu0 %v3603
        %3658 = vmatpush1.msra.mxu0 %v3602
        %3659 = vmatprep.subr.mxu0 %v3605
        %3660 = vmatpush1.msra.mxu0 %v3604
        %3661 = vmatprep.subr.mxu0 %v3607
        %3662 = vmatpush1.msra.mxu0 %v3606
        %3663 = vmatprep.subr.mxu0 %v3609
        %3664 = vmatpush1.msra.mxu0 %v3608
        %3665 = vmatprep.subr.mxu0 %v3611
        %3666 = vmatpush1.msra.mxu0 %v3610
        %3667 = vmatprep.subr.mxu0 0.0
        %3668 = vmatpush1.msra.mxu0 0.0
        %3669 = vmatprep.subr.mxu0 0.0
        %3670 = vmatpush1.msra.mxu0 0.0
        %3671 = vmatprep.subr.mxu0 0.0
        %3672 = vmatpush1.msra.mxu0 0.0
        %3673 = vmatprep.subr.mxu0 0.0
        %3674 = vmatpush1.msra.mxu0 0.0
        %3675 = vmatprep.subr.mxu0 0.0
        %3676 = vmatpush1.msra.mxu0 0.0
        %3677 = vmatprep.subr.mxu0 0.0
        %3678 = vmatpush1.msra.mxu0 0.0
        %3679 = vmatprep.mubr.f32.mxu0 %v3269
        %3680 = vmatmul.mubr.f32.gmra.mrb[0].mxu0 %v3137
        %v3681 = vpop.f32.mrb[0].mxu0
        %v3682 = vadd.f32 0.0, %v3681
        %v3683 = vpop.f32.mrb[0].mxu0
        %v3684 = vadd.f32 0.0, %v3683
        %3685 = vmatprep.mubr.f32.mxu0 %v3272
        %3686 = vmatmul.mubr.f32.gmra.mrb[0].mxu0 %v3139
        %v3687 = vpop.f32.mrb[0].mxu0
        %v3688 = vadd.f32 0.0, %v3687
        %v3689 = vpop.f32.mrb[0].mxu0
        %v3690 = vadd.f32 0.0, %v3689
        %3691 = vmatprep.mubr.f32.mxu0 %v3275
        %3692 = vmatmul.mubr.f32.gmra.mrb[0].mxu0 %v3141
        %v3693 = vpop.f32.mrb[0].mxu0
        %v3694 = vadd.f32 0.0, %v3693
        %v3695 = vpop.f32.mrb[0].mxu0
        %v3696 = vadd.f32 0.0, %v3695
        %3697 = vmatprep.mubr.f32.mxu0 %v3278
        %3698 = vmatmul.mubr.f32.gmra.mrb[0].mxu0 %v3143
        %v3699 = vpop.f32.mrb[0].mxu0
        %v3700 = vadd.f32 0.0, %v3699
        %v3701 = vpop.f32.mrb[0].mxu0
        %v3702 = vadd.f32 0.0, %v3701
        %3703 = vmatprep.mubr.f32.mxu0 %v3281
        %3704 = vmatmul.mubr.f32.gmra.mrb[0].mxu0 %v3145
        %v3705 = vpop.f32.mrb[0].mxu0
        %v3706 = vadd.f32 0.0, %v3705
        %v3707 = vpop.f32.mrb[0].mxu0
        %v3708 = vadd.f32 0.0, %v3707
        %3709 = vmatprep.mubr.f32.mxu0 %v3284
        %3710 = vmatmul.mubr.f32.gmra.mrb[0].mxu0 %v3147
        %v3711 = vpop.f32.mrb[0].mxu0
        %v3712 = vadd.f32 0.0, %v3711
        %v3713 = vpop.f32.mrb[0].mxu0
        %v3714 = vadd.f32 0.0, %v3713
        %3715 = vmatprep.mubr.f32.mxu0 %v3287
        %3716 = vmatmul.mubr.f32.gmra.mrb[0].mxu0 %v3149
        %v3717 = vpop.f32.mrb[0].mxu0
        %v3718 = vadd.f32 0.0, %v3717
        %v3719 = vpop.f32.mrb[0].mxu0
        %v3720 = vadd.f32 0.0, %v3719
        %3721 = vmatprep.mubr.f32.mxu0 %v3290
        %3722 = vmatmul.mubr.f32.gmra.mrb[0].mxu0 %v3151
        %v3723 = vpop.f32.mrb[0].mxu0
        %v3724 = vadd.f32 0.0, %v3723
        %v3725 = vpop.f32.mrb[0].mxu0
        %v3726 = vadd.f32 0.0, %v3725
        %3727 = vmatprep.mubr.f32.mxu0 %v3293
        %3728 = vmatmul.mubr.f32.gmra.mrb[0].mxu0 %v3153
        %v3729 = vpop.f32.mrb[0].mxu0
        %v3730 = vadd.f32 0.0, %v3729
        %v3731 = vpop.f32.mrb[0].mxu0
        %v3732 = vadd.f32 0.0, %v3731
        %3733 = vmatprep.mubr.f32.mxu0 %v3296
        %3734 = vmatmul.mubr.f32.gmra.mrb[0].mxu0 %v3155
        %v3735 = vpop.f32.mrb[0].mxu0
        %v3736 = vadd.f32 0.0, %v3735
        %v3737 = vpop.f32.mrb[0].mxu0
        %v3738 = vadd.f32 0.0, %v3737
        %3739 = vmatprep.mubr.f32.mxu0 %v3613
        %3740 = vmatmul.mubr.f32.gmra.mrb[0].mxu0 %v3157
        %v3741 = vpop.f32.mrb[0].mxu0
        %v3742 = vpop.f32.mrb[0].mxu0
        %3743 = vdwg.mxu0
        %v3744 = vadd.f32 %v3497, %v3682
        %v3745 = vadd.f32 %v3499, %v3684
        %v3746 = vadd.f32 %v3503, %v3688
        %v3747 = vadd.f32 %v3505, %v3690
        %v3748 = vadd.f32 %v3509, %v3694
        %v3749 = vadd.f32 %v3511, %v3696
        %v3750 = vadd.f32 %v3515, %v3700
        %v3751 = vadd.f32 %v3517, %v3702
        %v3752 = vadd.f32 %v3521, %v3706
        %v3753 = vadd.f32 %v3523, %v3708
        %v3754 = vadd.f32 %v3527, %v3712
        %v3755 = vadd.f32 %v3529, %v3714
        %v3756 = vadd.f32 %v3533, %v3718
        %v3757 = vadd.f32 %v3535, %v3720
        %v3758 = vadd.f32 %v3539, %v3724
        %v3759 = vadd.f32 %v3541, %v3726
        %v3760 = vadd.f32 %v3545, %v3730
        %v3761 = vadd.f32 %v3547, %v3732
        %v3762 = vadd.f32 %v3551, %v3736
        %v3763 = vadd.f32 %v3553, %v3738
        %v3764 = vmax.f32 %v3744, 0.0
        %v3765 = vmax.f32 %v3745, 0.0
        %v3766 = vmax.f32 %v3746, 0.0
        %v3767 = vmax.f32 %v3747, 0.0
        %v3768 = vmax.f32 %v3748, 0.0
        %v3769 = vmax.f32 %v3749, 0.0
        %v3770 = vmax.f32 %v3750, 0.0
        %v3771 = vmax.f32 %v3751, 0.0
        %v3772 = vmax.f32 %v3752, 0.0
        %v3773 = vmax.f32 %v3753, 0.0
        %v3774 = vmax.f32 %v3754, 0.0
        %v3775 = vmax.f32 %v3755, 0.0
        %v3776 = vmax.f32 %v3756, 0.0
        %v3777 = vmax.f32 %v3757, 0.0
        %v3778 = vmax.f32 %v3758, 0.0
        %v3779 = vmax.f32 %v3759, 0.0
        %v3780 = vmax.f32 %v3760, 0.0
        %v3781 = vmax.f32 %v3761, 0.0
        %v3782 = vmax.f32 %v3762, 0.0
        %v3783 = vmax.f32 %v3763, 0.0
        %v3784 = vmax.f32 %v3764, %v3766
        %v3785 = vmax.f32 %v3765, %v3767
        %v3786 = vmax.f32 %v3768, %v3770
        %v3787 = vmax.f32 %v3769, %v3771
        %v3788 = vmax.f32 %v3772, %v3774
        %v3789 = vmax.f32 %v3773, %v3775
        %v3790 = vmax.f32 %v3776, %v3778
        %v3791 = vmax.f32 %v3777, %v3779
        %v3792 = vmax.f32 %v3780, %v3782
        %v3793 = vmax.f32 %v3781, %v3783
        %v3794 = vld [vmem:[%s5] sm:$0xff]
        %v3795 = vld [vmem:[%s5 + $0x8] sm:$0xff]
        %v3796 = vld [vmem:[%s5 + $0x10] sm:$0xff]
        %v3797 = vld [vmem:[%s5 + $0x18] sm:$0xff]
        %v3798 = vld [vmem:[%s5 + $0x20] sm:$0xff]
        %v3799 = vld [vmem:[%s5 + $0x28] sm:$0xff]
        %v3800 = vld [vmem:[%s5 + $0x30] sm:$0xff]
        %v3801 = vld [vmem:[%s5 + $0x38] sm:$0xff]
        %v3802 = vld [vmem:[%s5 + $0x40] sm:$0xff]
        %v3803 = vld [vmem:[%s5 + $0x48] sm:$0xff]
        %v3804 = vld [vmem:[%s5 + $0x50] sm:$0xff]
        %v3805 = vld [vmem:[%s5 + $0x58] sm:$0xff]
        %v3806 = vld [vmem:[%s5 + $0x60] sm:$0xff]
        %v3807 = vld [vmem:[%s5 + $0x68] sm:$0xff]
        %v3808 = vld [vmem:[%s5 + $0x70] sm:$0xff]
        %v3809 = vld [vmem:[%s5 + $0x78] sm:$0xff]
        %v3810 = vld [vmem:[%s5 + $0x80] sm:$0xff]
        %v3811 = vld [vmem:[%s5 + $0x88] sm:$0xff]
        %v3812 = vld [vmem:[%s5 + $0x90] sm:$0xff]
        %v3813 = vld [vmem:[%s5 + $0x98] sm:$0xff]
        %v3814 = vld [vmem:[%s5 + $0xa0] sm:$0xff]
        %v3815 = vld [vmem:[%s5 + $0xa8] sm:$0xff]
        %vm3816 = vcmask 392192
        %v3818 = vsel %vm3816, %v3785, 0
        %v3821 = vsel %vm3816, %v3787, 0
        %v3824 = vsel %vm3816, %v3789, 0
        %v3827 = vsel %vm3816, %v3791, 0
        %v3830 = vsel %vm3816, %v3793, 0
        %3832 = vmatprep.subr.mxu0 0.0
        %3833 = vmatpush1.msra.mxu0 %v3794
        %3834 = vmatprep.subr.mxu0 0.0
        %3835 = vmatpush1.msra.mxu0 %v3795
        %3836 = vmatprep.subr.mxu0 0.0
        %3837 = vmatpush1.msra.mxu0 %v3796
        %3838 = vmatprep.subr.mxu0 0.0
        %3839 = vmatpush1.msra.mxu0 %v3797
        %3840 = vmatprep.subr.mxu0 0.0
        %3841 = vmatpush1.msra.mxu0 %v3798
        %3842 = vmatprep.subr.mxu0 0.0
        %3843 = vmatpush1.msra.mxu0 %v3799
        %3844 = vmatprep.subr.mxu0 0.0
        %3845 = vmatpush1.msra.mxu0 %v3800
        %3846 = vmatprep.subr.mxu0 0.0
        %3847 = vmatpush1.msra.mxu0 %v3801
        %3848 = vmatprep.subr.mxu0 0.0
        %3849 = vmatpush1.msra.mxu0 %v3802
        %3850 = vmatprep.subr.mxu0 0.0
        %3851 = vmatpush1.msra.mxu0 %v3803
        %3852 = vmatprep.subr.mxu0 0.0
        %3853 = vmatpush1.msra.mxu0 %v3804
        %3854 = vmatprep.subr.mxu0 0.0
        %3855 = vmatpush1.msra.mxu0 %v3805
        %3856 = vmatprep.subr.mxu0 0.0
        %3857 = vmatpush1.msra.mxu0 %v3806
        %3858 = vmatprep.subr.mxu0 0.0
        %3859 = vmatpush1.msra.mxu0 %v3807
        %3860 = vmatprep.subr.mxu0 0.0
        %3861 = vmatpush1.msra.mxu0 %v3808
        %3862 = vmatprep.subr.mxu0 0.0
        %3863 = vmatpush1.msra.mxu0 %v3809
        %3864 = vmatprep.subr.mxu0 0.0
        %3865 = vmatpush1.msra.mxu0 %v3810
        %3866 = vmatprep.subr.mxu0 0.0
        %3867 = vmatpush1.msra.mxu0 %v3811
        %3868 = vmatprep.subr.mxu0 0.0
        %3869 = vmatpush1.msra.mxu0 %v3812
        %3870 = vmatprep.subr.mxu0 0.0
        %3871 = vmatpush1.msra.mxu0 %v3813
        %3872 = vmatprep.subr.mxu0 0.0
        %3873 = vmatpush1.msra.mxu0 %v3814
        %3874 = vmatprep.subr.mxu0 0.0
        %3875 = vmatpush1.msra.mxu0 %v3815
        %3876 = vmatprep.subr.mxu0 0.0
        %3877 = vmatpush1.msra.mxu0 0.0
        %3878 = vmatprep.subr.mxu0 0.0
        %3879 = vmatpush1.msra.mxu0 0.0
        %3880 = vmatprep.subr.mxu0 0.0
        %3881 = vmatpush1.msra.mxu0 0.0
        %3882 = vmatprep.subr.mxu0 0.0
        %3883 = vmatpush1.msra.mxu0 0.0
        %3884 = vmatprep.subr.mxu0 0.0
        %3885 = vmatpush1.msra.mxu0 0.0
        %3886 = vmatprep.subr.mxu0 0.0
        %3887 = vmatpush1.msra.mxu0 0.0
        %3888 = vmatprep.subr.mxu0 0.0
        %3889 = vmatpush1.msra.mxu0 0.0
        %3890 = vmatprep.subr.mxu0 0.0
        %3891 = vmatpush1.msra.mxu0 0.0
        %3892 = vmatprep.subr.mxu0 0.0
        %3893 = vmatpush1.msra.mxu0 0.0
        %3894 = vmatprep.subr.mxu0 0.0
        %3895 = vmatpush1.msra.mxu0 0.0
        %3896 = vmatprep.mubr.f32.mxu0 %v3818
        %3897 = vmatmul.mubr.f32.gmra.mrb[0].mxu0 %v3784
        %v3898 = vpop.f32.mrb[0].mxu0
        %v3899 = vadd.f32 0.0, %v3898
        %v3900 = vpop.f32.mrb[0].mxu0
        %3901 = vmatprep.mubr.f32.mxu0 %v3821
        %3902 = vmatmul.mubr.f32.gmra.mrb[0].mxu0 %v3786
        %v3903 = vpop.f32.mrb[0].mxu0
        %v3904 = vadd.f32 0.0, %v3903
        %v3905 = vpop.f32.mrb[0].mxu0
        %3906 = vmatprep.mubr.f32.mxu0 %v3824
        %3907 = vmatmul.mubr.f32.gmra.mrb[0].mxu0 %v3788
        %v3908 = vpop.f32.mrb[0].mxu0
        %v3909 = vadd.f32 0.0, %v3908
        %v3910 = vpop.f32.mrb[0].mxu0
        %3911 = vmatprep.mubr.f32.mxu0 %v3827
        %3912 = vmatmul.mubr.f32.gmra.mrb[0].mxu0 %v3790
        %v3913 = vpop.f32.mrb[0].mxu0
        %v3914 = vadd.f32 0.0, %v3913
        %v3915 = vpop.f32.mrb[0].mxu0
        %3916 = vmatprep.mubr.f32.mxu0 %v3830
        %3917 = vmatmul.mubr.f32.gmra.mrb[0].mxu0 %v3792
        %v3918 = vpop.f32.mrb[0].mxu0
        %v3919 = vadd.f32 0.0, %v3918
        %v3920 = vpop.f32.mrb[0].mxu0
        %3921 = vdwg.mxu0
        %v3922 = vld [vmem:[%s6] sm:$0xff]
        %v3923 = vld [vmem:[%s6 + $0x8] sm:$0xff]
        %v3924 = vld [vmem:[%s6 + $0x10] sm:$0xff]
        %v3925 = vld [vmem:[%s6 + $0x18] sm:$0xff]
        %v3926 = vld [vmem:[%s6 + $0x20] sm:$0xff]
        %v3927 = vld [vmem:[%s6 + $0x28] sm:$0xff]
        %v3928 = vld [vmem:[%s6 + $0x30] sm:$0xff]
        %v3929 = vld [vmem:[%s6 + $0x38] sm:$0xff]
        %v3930 = vld [vmem:[%s6 + $0x40] sm:$0xff]
        %v3931 = vld [vmem:[%s6 + $0x48] sm:$0xff]
        %v3932 = vld [vmem:[%s6 + $0x50] sm:$0xff]
        %v3933 = vld [vmem:[%s6 + $0x58] sm:$0xff]
        %v3934 = vld [vmem:[%s6 + $0x60] sm:$0xff]
        %v3935 = vld [vmem:[%s6 + $0x68] sm:$0xff]
        %v3936 = vld [vmem:[%s6 + $0x70] sm:$0xff]
        %v3937 = vld [vmem:[%s6 + $0x78] sm:$0xff]
        %v3938 = vld [vmem:[%s6 + $0x80] sm:$0xff]
        %v3939 = vld [vmem:[%s6 + $0x88] sm:$0xff]
        %v3940 = vld [vmem:[%s6 + $0x90] sm:$0xff]
        %v3941 = vld [vmem:[%s6 + $0x98] sm:$0xff]
        %v3942 = vld [vmem:[%s6 + $0xa0] sm:$0xff]
        %v3943 = vld [vmem:[%s6 + $0xa8] sm:$0xff]
        %3944 = vmatprep.subr.mxu0 0.0
        %3945 = vmatpush1.msra.mxu0 %v3922
        %3946 = vmatprep.subr.mxu0 0.0
        %3947 = vmatpush1.msra.mxu0 %v3923
        %3948 = vmatprep.subr.mxu0 0.0
        %3949 = vmatpush1.msra.mxu0 %v3924
        %3950 = vmatprep.subr.mxu0 0.0
        %3951 = vmatpush1.msra.mxu0 %v3925
        %3952 = vmatprep.subr.mxu0 0.0
        %3953 = vmatpush1.msra.mxu0 %v3926
        %3954 = vmatprep.subr.mxu0 0.0
        %3955 = vmatpush1.msra.mxu0 %v3927
        %3956 = vmatprep.subr.mxu0 0.0
        %3957 = vmatpush1.msra.mxu0 %v3928
        %3958 = vmatprep.subr.mxu0 0.0
        %3959 = vmatpush1.msra.mxu0 %v3929
        %3960 = vmatprep.subr.mxu0 0.0
        %3961 = vmatpush1.msra.mxu0 %v3930
        %3962 = vmatprep.subr.mxu0 0.0
        %3963 = vmatpush1.msra.mxu0 %v3931
        %3964 = vmatprep.subr.mxu0 0.0
        %3965 = vmatpush1.msra.mxu0 %v3932
        %3966 = vmatprep.subr.mxu0 0.0
        %3967 = vmatpush1.msra.mxu0 %v3933
        %3968 = vmatprep.subr.mxu0 0.0
        %3969 = vmatpush1.msra.mxu0 %v3934
        %3970 = vmatprep.subr.mxu0 0.0
        %3971 = vmatpush1.msra.mxu0 %v3935
        %3972 = vmatprep.subr.mxu0 0.0
        %3973 = vmatpush1.msra.mxu0 %v3936
        %3974 = vmatprep.subr.mxu0 0.0
        %3975 = vmatpush1.msra.mxu0 %v3937
        %3976 = vmatprep.subr.mxu0 0.0
        %3977 = vmatpush1.msra.mxu0 %v3938
        %3978 = vmatprep.subr.mxu0 0.0
        %3979 = vmatpush1.msra.mxu0 %v3939
        %3980 = vmatprep.subr.mxu0 0.0
        %3981 = vmatpush1.msra.mxu0 %v3940
        %3982 = vmatprep.subr.mxu0 0.0
        %3983 = vmatpush1.msra.mxu0 %v3941
        %3984 = vmatprep.subr.mxu0 0.0
        %3985 = vmatpush1.msra.mxu0 %v3942
        %3986 = vmatprep.subr.mxu0 0.0
        %3987 = vmatpush1.msra.mxu0 %v3943
        %3988 = vmatprep.subr.mxu0 0.0
        %3989 = vmatpush1.msra.mxu0 0.0
        %3990 = vmatprep.subr.mxu0 0.0
        %3991 = vmatpush1.msra.mxu0 0.0
        %3992 = vmatprep.subr.mxu0 0.0
        %3993 = vmatpush1.msra.mxu0 0.0
        %3994 = vmatprep.subr.mxu0 0.0
        %3995 = vmatpush1.msra.mxu0 0.0
        %3996 = vmatprep.subr.mxu0 0.0
        %3997 = vmatpush1.msra.mxu0 0.0
        %3998 = vmatprep.subr.mxu0 0.0
        %3999 = vmatpush1.msra.mxu0 0.0
        %4000 = vmatprep.subr.mxu0 0.0
        %4001 = vmatpush1.msra.mxu0 0.0
        %4002 = vmatprep.subr.mxu0 0.0
        %4003 = vmatpush1.msra.mxu0 0.0
        %4004 = vmatprep.subr.mxu0 0.0
        %4005 = vmatpush1.msra.mxu0 0.0
        %4006 = vmatprep.subr.mxu0 0.0
        %4007 = vmatpush1.msra.mxu0 0.0
        %4008 = vmatprep.mubr.f32.mxu0 %v3818
        %4009 = vmatmul.mubr.f32.gmra.mrb[0].mxu0 %v3784
        %v4010 = vpop.f32.mrb[0].mxu0
        %v4011 = vadd.f32 0.0, %v4010
        %v4012 = vpop.f32.mrb[0].mxu0
        %4013 = vmatprep.mubr.f32.mxu0 %v3821
        %4014 = vmatmul.mubr.f32.gmra.mrb[0].mxu0 %v3786
        %v4015 = vpop.f32.mrb[0].mxu0
        %v4016 = vadd.f32 0.0, %v4015
        %v4017 = vpop.f32.mrb[0].mxu0
        %4018 = vmatprep.mubr.f32.mxu0 %v3824
        %4019 = vmatmul.mubr.f32.gmra.mrb[0].mxu0 %v3788
        %v4020 = vpop.f32.mrb[0].mxu0
        %v4021 = vadd.f32 0.0, %v4020
        %v4022 = vpop.f32.mrb[0].mxu0
        %4023 = vmatprep.mubr.f32.mxu0 %v3827
        %4024 = vmatmul.mubr.f32.gmra.mrb[0].mxu0 %v3790
        %v4025 = vpop.f32.mrb[0].mxu0
        %v4026 = vadd.f32 0.0, %v4025
        %v4027 = vpop.f32.mrb[0].mxu0
        %4028 = vmatprep.mubr.f32.mxu0 %v3830
        %4029 = vmatmul.mubr.f32.gmra.mrb[0].mxu0 %v3792
        %v4030 = vpop.f32.mrb[0].mxu0
        %v4031 = vadd.f32 0.0, %v4030
        %v4032 = vpop.f32.mrb[0].mxu0
        %4033 = vdwg.mxu0
        %v4034 = vmax.f32 %v3899, %v4011
        %v4035 = vmax.f32 %v3904, %v4016
        %v4036 = vmax.f32 %v3909, %v4021
        %v4037 = vmax.f32 %v3914, %v4026
        %v4038 = vmax.f32 %v3919, %v4031
        %v4039 = vld [vmem:[%s7] sm:$0xff]
        %v4040 = vld [vmem:[%s7 + $0x8] sm:$0xff]
        %v4041 = vld [vmem:[%s7 + $0x10] sm:$0xff]
        %v4042 = vld [vmem:[%s7 + $0x18] sm:$0xff]
        %v4043 = vld [vmem:[%s7 + $0x20] sm:$0xff]
        %v4044 = vld [vmem:[%s7 + $0x28] sm:$0xff]
        %v4045 = vld [vmem:[%s7 + $0x30] sm:$0xff]
        %v4046 = vld [vmem:[%s7 + $0x38] sm:$0xff]
        %v4047 = vld [vmem:[%s7 + $0x40] sm:$0xff]
        %v4048 = vld [vmem:[%s7 + $0x48] sm:$0xff]
        %s4049 = scalar_lea.vmem %s7, 80
        %v4050 = vld [vmem:[%s4049] sm:$0xff]
        %v4051 = vld [vmem:[%s4049 + $0x8] sm:$0xff]
        %v4052 = vld [vmem:[%s4049 + $0x10] sm:$0xff]
        %v4053 = vld [vmem:[%s4049 + $0x18] sm:$0xff]
        %v4054 = vld [vmem:[%s4049 + $0x20] sm:$0xff]
        %v4055 = vld [vmem:[%s4049 + $0x28] sm:$0xff]
        %v4056 = vld [vmem:[%s4049 + $0x30] sm:$0xff]
        %v4057 = vld [vmem:[%s4049 + $0x38] sm:$0xff]
        %v4058 = vld [vmem:[%s4049 + $0x40] sm:$0xff]
        %v4059 = vld [vmem:[%s4049 + $0x48] sm:$0xff]
        %v4061 = vsel %vm3264, %v4035, 0
        %v4064 = vsel %vm3264, %v4036, 0
        %v4067 = vsel %vm3264, %v4037, 0
        %4069 = vmatprep.subr.mxu0 0.0
        %4070 = vmatpush1.msra.mxu0 %v4050
        %4071 = vmatprep.subr.mxu0 0.0
        %4072 = vmatpush1.msra.mxu0 %v4051
        %4073 = vmatprep.subr.mxu0 0.0
        %4074 = vmatpush1.msra.mxu0 %v4052
        %4075 = vmatprep.subr.mxu0 0.0
        %4076 = vmatpush1.msra.mxu0 %v4053
        %4077 = vmatprep.subr.mxu0 0.0
        %4078 = vmatpush1.msra.mxu0 %v4054
        %4079 = vmatprep.subr.mxu0 0.0
        %4080 = vmatpush1.msra.mxu0 %v4055
        %4081 = vmatprep.subr.mxu0 0.0
        %4082 = vmatpush1.msra.mxu0 %v4056
        %4083 = vmatprep.subr.mxu0 0.0
        %4084 = vmatpush1.msra.mxu0 %v4057
        %4085 = vmatprep.subr.mxu0 0.0
        %4086 = vmatpush1.msra.mxu0 %v4058
        %4087 = vmatprep.subr.mxu0 0.0
        %4088 = vmatpush1.msra.mxu0 %v4059
        %4089 = vmatprep.subr.mxu0 0.0
        %4090 = vmatpush1.msra.mxu0 0.0
        %4091 = vmatprep.subr.mxu0 0.0
        %4092 = vmatpush1.msra.mxu0 0.0
        %4093 = vmatprep.subr.mxu0 0.0
        %4094 = vmatpush1.msra.mxu0 0.0
        %4095 = vmatprep.subr.mxu0 0.0
        %4096 = vmatpush1.msra.mxu0 0.0
        %4097 = vmatprep.subr.mxu0 0.0
        %4098 = vmatpush1.msra.mxu0 0.0
        %4099 = vmatprep.subr.mxu0 0.0
        %4100 = vmatpush1.msra.mxu0 0.0
        %4101 = vmatprep.subr.mxu0 0.0
        %4102 = vmatpush1.msra.mxu0 0.0
        %4103 = vmatprep.subr.mxu0 0.0
        %4104 = vmatpush1.msra.mxu0 0.0
        %4105 = vmatprep.subr.mxu0 0.0
        %4106 = vmatpush1.msra.mxu0 0.0
        %4107 = vmatprep.subr.mxu0 0.0
        %4108 = vmatpush1.msra.mxu0 0.0
        %4109 = vmatprep.subr.mxu0 0.0
        %4110 = vmatpush1.msra.mxu0 0.0
        %4111 = vmatprep.subr.mxu0 0.0
        %4112 = vmatpush1.msra.mxu0 0.0
        %4113 = vmatprep.subr.mxu0 0.0
        %4114 = vmatpush1.msra.mxu0 0.0
        %4115 = vmatprep.subr.mxu0 0.0
        %4116 = vmatpush1.msra.mxu0 0.0
        %4117 = vmatprep.subr.mxu0 0.0
        %4118 = vmatpush1.msra.mxu0 0.0
        %4119 = vmatprep.subr.mxu0 0.0
        %4120 = vmatpush1.msra.mxu0 0.0
        %4121 = vmatprep.subr.mxu0 0.0
        %4122 = vmatpush1.msra.mxu0 0.0
        %4123 = vmatprep.subr.mxu0 0.0
        %4124 = vmatpush1.msra.mxu0 0.0
        %4125 = vmatprep.subr.mxu0 0.0
        %4126 = vmatpush1.msra.mxu0 0.0
        %4127 = vmatprep.subr.mxu0 0.0
        %4128 = vmatpush1.msra.mxu0 0.0
        %4129 = vmatprep.subr.mxu0 0.0
        %4130 = vmatpush1.msra.mxu0 0.0
        %4131 = vmatprep.subr.mxu0 0.0
        %4132 = vmatpush1.msra.mxu0 0.0
        %4133 = vmatprep.mubr.f32.mxu0 0.0
        %4134 = vmatmul.mubr.f32.gmra.mrb[0].mxu0 %v4061
        %v4135 = vpop.f32.mrb[0].mxu0
        %v4136 = vadd.f32 0.0, %v4135
        %v4137 = vpop.f32.mrb[0].mxu0
        %4138 = vmatprep.mubr.f32.mxu0 0.0
        %4139 = vmatmul.mubr.f32.gmra.mrb[0].mxu0 %v4064
        %v4140 = vpop.f32.mrb[0].mxu0
        %v4141 = vadd.f32 0.0, %v4140
        %v4142 = vpop.f32.mrb[0].mxu0
        %4143 = vmatprep.mubr.f32.mxu0 0.0
        %4144 = vmatmul.mubr.f32.gmra.mrb[0].mxu0 %v4067
        %v4145 = vpop.f32.mrb[0].mxu0
        %v4146 = vadd.f32 0.0, %v4145
        %v4147 = vpop.f32.mrb[0].mxu0
        %4148 = vdwg.mxu0
        %v4150 = vsel %vm3264, %v4034, 0
        %4152 = vmatprep.subr.mxu0 0.0
        %4153 = vmatpush1.msra.mxu0 %v4039
        %4154 = vmatprep.subr.mxu0 0.0
        %4155 = vmatpush1.msra.mxu0 %v4040
        %4156 = vmatprep.subr.mxu0 0.0
        %4157 = vmatpush1.msra.mxu0 %v4041
        %4158 = vmatprep.subr.mxu0 0.0
        %4159 = vmatpush1.msra.mxu0 %v4042
        %4160 = vmatprep.subr.mxu0 0.0
        %4161 = vmatpush1.msra.mxu0 %v4043
        %4162 = vmatprep.subr.mxu0 0.0
        %4163 = vmatpush1.msra.mxu0 %v4044
        %4164 = vmatprep.subr.mxu0 0.0
        %4165 = vmatpush1.msra.mxu0 %v4045
        %4166 = vmatprep.subr.mxu0 0.0
        %4167 = vmatpush1.msra.mxu0 %v4046
        %4168 = vmatprep.subr.mxu0 0.0
        %4169 = vmatpush1.msra.mxu0 %v4047
        %4170 = vmatprep.subr.mxu0 0.0
        %4171 = vmatpush1.msra.mxu0 %v4048
        %4172 = vmatprep.subr.mxu0 0.0
        %4173 = vmatpush1.msra.mxu0 0.0
        %4174 = vmatprep.subr.mxu0 0.0
        %4175 = vmatpush1.msra.mxu0 0.0
        %4176 = vmatprep.subr.mxu0 0.0
        %4177 = vmatpush1.msra.mxu0 0.0
        %4178 = vmatprep.subr.mxu0 0.0
        %4179 = vmatpush1.msra.mxu0 0.0
        %4180 = vmatprep.subr.mxu0 0.0
        %4181 = vmatpush1.msra.mxu0 0.0
        %4182 = vmatprep.subr.mxu0 0.0
        %4183 = vmatpush1.msra.mxu0 0.0
        %4184 = vmatprep.subr.mxu0 0.0
        %4185 = vmatpush1.msra.mxu0 0.0
        %4186 = vmatprep.subr.mxu0 0.0
        %4187 = vmatpush1.msra.mxu0 0.0
        %4188 = vmatprep.subr.mxu0 0.0
        %4189 = vmatpush1.msra.mxu0 0.0
        %4190 = vmatprep.subr.mxu0 0.0
        %4191 = vmatpush1.msra.mxu0 0.0
        %4192 = vmatprep.subr.mxu0 0.0
        %4193 = vmatpush1.msra.mxu0 0.0
        %4194 = vmatprep.subr.mxu0 0.0
        %4195 = vmatpush1.msra.mxu0 0.0
        %4196 = vmatprep.subr.mxu0 0.0
        %4197 = vmatpush1.msra.mxu0 0.0
        %4198 = vmatprep.subr.mxu0 0.0
        %4199 = vmatpush1.msra.mxu0 0.0
        %4200 = vmatprep.subr.mxu0 0.0
        %4201 = vmatpush1.msra.mxu0 0.0
        %4202 = vmatprep.subr.mxu0 0.0
        %4203 = vmatpush1.msra.mxu0 0.0
        %4204 = vmatprep.subr.mxu0 0.0
        %4205 = vmatpush1.msra.mxu0 0.0
        %4206 = vmatprep.subr.mxu0 0.0
        %4207 = vmatpush1.msra.mxu0 0.0
        %4208 = vmatprep.subr.mxu0 0.0
        %4209 = vmatpush1.msra.mxu0 0.0
        %4210 = vmatprep.subr.mxu0 0.0
        %4211 = vmatpush1.msra.mxu0 0.0
        %4212 = vmatprep.subr.mxu0 0.0
        %4213 = vmatpush1.msra.mxu0 0.0
        %4214 = vmatprep.subr.mxu0 0.0
        %4215 = vmatpush1.msra.mxu0 0.0
        %4216 = vmatprep.mubr.f32.mxu0 0.0
        %4217 = vmatmul.mubr.f32.gmra.mrb[0].mxu0 %v4150
        %v4218 = vpop.f32.mrb[0].mxu0
        %v4219 = vadd.f32 %v4136, %v4218
        %v4220 = vpop.f32.mrb[0].mxu0
        %4221 = vmatprep.mubr.f32.mxu0 0.0
        %4222 = vmatmul.mubr.f32.gmra.mrb[0].mxu0 %v4061
        %v4223 = vpop.f32.mrb[0].mxu0
        %v4224 = vadd.f32 %v4141, %v4223
        %v4225 = vpop.f32.mrb[0].mxu0
        %4226 = vmatprep.mubr.f32.mxu0 0.0
        %4227 = vmatmul.mubr.f32.gmra.mrb[0].mxu0 %v4064
        %v4228 = vpop.f32.mrb[0].mxu0
        %v4229 = vadd.f32 %v4146, %v4228
        %v4230 = vpop.f32.mrb[0].mxu0
        %4231 = vdwg.mxu0
        %s4232 = scalar_lea.vmem %s7, 160
        %v4233 = vld [vmem:[%s4232] sm:$0xff]
        %v4234 = vld [vmem:[%s4232 + $0x8] sm:$0xff]
        %v4235 = vld [vmem:[%s4232 + $0x10] sm:$0xff]
        %v4236 = vld [vmem:[%s4232 + $0x18] sm:$0xff]
        %v4237 = vld [vmem:[%s4232 + $0x20] sm:$0xff]
        %v4238 = vld [vmem:[%s4232 + $0x28] sm:$0xff]
        %v4239 = vld [vmem:[%s4232 + $0x30] sm:$0xff]
        %v4240 = vld [vmem:[%s4232 + $0x38] sm:$0xff]
        %v4241 = vld [vmem:[%s4232 + $0x40] sm:$0xff]
        %v4242 = vld [vmem:[%s4232 + $0x48] sm:$0xff]
        %v4244 = vsel %vm3264, %v4038, 0
        %4246 = vmatprep.subr.mxu0 0.0
        %4247 = vmatpush1.msra.mxu0 %v4233
        %4248 = vmatprep.subr.mxu0 0.0
        %4249 = vmatpush1.msra.mxu0 %v4234
        %4250 = vmatprep.subr.mxu0 0.0
        %4251 = vmatpush1.msra.mxu0 %v4235
        %4252 = vmatprep.subr.mxu0 0.0
        %4253 = vmatpush1.msra.mxu0 %v4236
        %4254 = vmatprep.subr.mxu0 0.0
        %4255 = vmatpush1.msra.mxu0 %v4237
        %4256 = vmatprep.subr.mxu0 0.0
        %4257 = vmatpush1.msra.mxu0 %v4238
        %4258 = vmatprep.subr.mxu0 0.0
        %4259 = vmatpush1.msra.mxu0 %v4239
        %4260 = vmatprep.subr.mxu0 0.0
        %4261 = vmatpush1.msra.mxu0 %v4240
        %4262 = vmatprep.subr.mxu0 0.0
        %4263 = vmatpush1.msra.mxu0 %v4241
        %4264 = vmatprep.subr.mxu0 0.0
        %4265 = vmatpush1.msra.mxu0 %v4242
        %4266 = vmatprep.subr.mxu0 0.0
        %4267 = vmatpush1.msra.mxu0 0.0
        %4268 = vmatprep.subr.mxu0 0.0
        %4269 = vmatpush1.msra.mxu0 0.0
        %4270 = vmatprep.subr.mxu0 0.0
        %4271 = vmatpush1.msra.mxu0 0.0
        %4272 = vmatprep.subr.mxu0 0.0
        %4273 = vmatpush1.msra.mxu0 0.0
        %4274 = vmatprep.subr.mxu0 0.0
        %4275 = vmatpush1.msra.mxu0 0.0
        %4276 = vmatprep.subr.mxu0 0.0
        %4277 = vmatpush1.msra.mxu0 0.0
        %4278 = vmatprep.subr.mxu0 0.0
        %4279 = vmatpush1.msra.mxu0 0.0
        %4280 = vmatprep.subr.mxu0 0.0
        %4281 = vmatpush1.msra.mxu0 0.0
        %4282 = vmatprep.subr.mxu0 0.0
        %4283 = vmatpush1.msra.mxu0 0.0
        %4284 = vmatprep.subr.mxu0 0.0
        %4285 = vmatpush1.msra.mxu0 0.0
        %4286 = vmatprep.subr.mxu0 0.0
        %4287 = vmatpush1.msra.mxu0 0.0
        %4288 = vmatprep.subr.mxu0 0.0
        %4289 = vmatpush1.msra.mxu0 0.0
        %4290 = vmatprep.subr.mxu0 0.0
        %4291 = vmatpush1.msra.mxu0 0.0
        %4292 = vmatprep.subr.mxu0 0.0
        %4293 = vmatpush1.msra.mxu0 0.0
        %4294 = vmatprep.subr.mxu0 0.0
        %4295 = vmatpush1.msra.mxu0 0.0
        %4296 = vmatprep.subr.mxu0 0.0
        %4297 = vmatpush1.msra.mxu0 0.0
        %4298 = vmatprep.subr.mxu0 0.0
        %4299 = vmatpush1.msra.mxu0 0.0
        %4300 = vmatprep.subr.mxu0 0.0
        %4301 = vmatpush1.msra.mxu0 0.0
        %4302 = vmatprep.subr.mxu0 0.0
        %4303 = vmatpush1.msra.mxu0 0.0
        %4304 = vmatprep.subr.mxu0 0.0
        %4305 = vmatpush1.msra.mxu0 0.0
        %4306 = vmatprep.subr.mxu0 0.0
        %4307 = vmatpush1.msra.mxu0 0.0
        %4308 = vmatprep.subr.mxu0 0.0
        %4309 = vmatpush1.msra.mxu0 0.0
        %4310 = vmatprep.mubr.f32.mxu0 0.0
        %4311 = vmatmul.mubr.f32.gmra.mrb[0].mxu0 %v4064
        %v4312 = vpop.f32.mrb[0].mxu0
        %v4313 = vadd.f32 0.0, %v4312
        %v4314 = vpop.f32.mrb[0].mxu0
        %4315 = vmatprep.mubr.f32.mxu0 0.0
        %4316 = vmatmul.mubr.f32.gmra.mrb[0].mxu0 %v4067
        %v4317 = vpop.f32.mrb[0].mxu0
        %v4318 = vadd.f32 0.0, %v4317
        %v4319 = vpop.f32.mrb[0].mxu0
        %4320 = vmatprep.mubr.f32.mxu0 0.0
        %4321 = vmatmul.mubr.f32.gmra.mrb[0].mxu0 %v4244
        %v4322 = vpop.f32.mrb[0].mxu0
        %v4323 = vadd.f32 0.0, %v4322
        %v4324 = vpop.f32.mrb[0].mxu0
        %4325 = vdwg.mxu0
        %v4326 = vadd.f32 %v4219, %v4313
        %v4327 = vadd.f32 %v4224, %v4318
        %v4328 = vadd.f32 %v4229, %v4323
        %v4329 = vmax.f32 %v4326, 0.0
        %v4330 = vmax.f32 %v4327, 0.0
        %v4331 = vmax.f32 %v4328, 0.0
        %v4332 = vld [vmem:[%s8] sm:$0xff]
        %v4333 = vld [vmem:[%s8 + $0x8] sm:$0xff]
        %v4334 = vld [vmem:[%s8 + $0x10] sm:$0xff]
        %v4335 = vld [vmem:[%s8 + $0x18] sm:$0xff]
        %v4336 = vld [vmem:[%s8 + $0x20] sm:$0xff]
        %v4337 = vld [vmem:[%s8 + $0x28] sm:$0xff]
        %s4338 = scalar_lea.vmem %s8, 48
        %v4339 = vld [vmem:[%s4338] sm:$0xff]
        %v4340 = vld [vmem:[%s4338 + $0x8] sm:$0xff]
        %v4341 = vld [vmem:[%s4338 + $0x10] sm:$0xff]
        %v4342 = vld [vmem:[%s4338 + $0x18] sm:$0xff]
        %v4343 = vld [vmem:[%s4338 + $0x20] sm:$0xff]
        %v4344 = vld [vmem:[%s4338 + $0x28] sm:$0xff]
        %v4346 = vsel %vm3816, %v4330, 0
        %4348 = vmatprep.subr.mxu0 0.0
        %4349 = vmatpush1.msra.mxu0 %v4339
        %4350 = vmatprep.subr.mxu0 0.0
        %4351 = vmatpush1.msra.mxu0 %v4340
        %4352 = vmatprep.subr.mxu0 0.0
        %4353 = vmatpush1.msra.mxu0 %v4341
        %4354 = vmatprep.subr.mxu0 0.0
        %4355 = vmatpush1.msra.mxu0 %v4342
        %4356 = vmatprep.subr.mxu0 0.0
        %4357 = vmatpush1.msra.mxu0 %v4343
        %4358 = vmatprep.subr.mxu0 0.0
        %4359 = vmatpush1.msra.mxu0 %v4344
        %4360 = vmatprep.subr.mxu0 0.0
        %4361 = vmatpush1.msra.mxu0 0.0
        %4362 = vmatprep.subr.mxu0 0.0
        %4363 = vmatpush1.msra.mxu0 0.0
        %4364 = vmatprep.subr.mxu0 0.0
        %4365 = vmatpush1.msra.mxu0 0.0
        %4366 = vmatprep.subr.mxu0 0.0
        %4367 = vmatpush1.msra.mxu0 0.0
        %4368 = vmatprep.subr.mxu0 0.0
        %4369 = vmatpush1.msra.mxu0 0.0
        %4370 = vmatprep.subr.mxu0 0.0
        %4371 = vmatpush1.msra.mxu0 0.0
        %4372 = vmatprep.subr.mxu0 0.0
        %4373 = vmatpush1.msra.mxu0 0.0
        %4374 = vmatprep.subr.mxu0 0.0
        %4375 = vmatpush1.msra.mxu0 0.0
        %4376 = vmatprep.subr.mxu0 0.0
        %4377 = vmatpush1.msra.mxu0 0.0
        %4378 = vmatprep.subr.mxu0 0.0
        %4379 = vmatpush1.msra.mxu0 0.0
        %4380 = vmatprep.subr.mxu0 0.0
        %4381 = vmatpush1.msra.mxu0 0.0
        %4382 = vmatprep.subr.mxu0 0.0
        %4383 = vmatpush1.msra.mxu0 0.0
        %4384 = vmatprep.subr.mxu0 0.0
        %4385 = vmatpush1.msra.mxu0 0.0
        %4386 = vmatprep.subr.mxu0 0.0
        %4387 = vmatpush1.msra.mxu0 0.0
        %4388 = vmatprep.subr.mxu0 0.0
        %4389 = vmatpush1.msra.mxu0 0.0
        %4390 = vmatprep.subr.mxu0 0.0
        %4391 = vmatpush1.msra.mxu0 0.0
        %4392 = vmatprep.subr.mxu0 0.0
        %4393 = vmatpush1.msra.mxu0 0.0
        %4394 = vmatprep.subr.mxu0 0.0
        %4395 = vmatpush1.msra.mxu0 0.0
        %4396 = vmatprep.subr.mxu0 0.0
        %4397 = vmatpush1.msra.mxu0 0.0
        %4398 = vmatprep.subr.mxu0 0.0
        %4399 = vmatpush1.msra.mxu0 0.0
        %4400 = vmatprep.subr.mxu0 0.0
        %4401 = vmatpush1.msra.mxu0 0.0
        %4402 = vmatprep.subr.mxu0 0.0
        %4403 = vmatpush1.msra.mxu0 0.0
        %4404 = vmatprep.subr.mxu0 0.0
        %4405 = vmatpush1.msra.mxu0 0.0
        %4406 = vmatprep.subr.mxu0 0.0
        %4407 = vmatpush1.msra.mxu0 0.0
        %4408 = vmatprep.subr.mxu0 0.0
        %4409 = vmatpush1.msra.mxu0 0.0
        %4410 = vmatprep.subr.mxu0 0.0
        %4411 = vmatpush1.msra.mxu0 0.0
        %4412 = vmatprep.mubr.f32.mxu0 0.0
        %4413 = vmatmul.mubr.f32.gmra.mrb[0].mxu0 %v4346
        %v4414 = vpop.f32.mrb[0].mxu0
        %v4415 = vadd.f32 0.0, %v4414
        %v4416 = vpop.f32.mrb[0].mxu0
        %4417 = vdwg.mxu0
        %v4419 = vsel %vm3816, %v4329, 0
        %4421 = vmatprep.subr.mxu0 0.0
        %4422 = vmatpush1.msra.mxu0 %v4332
        %4423 = vmatprep.subr.mxu0 0.0
        %4424 = vmatpush1.msra.mxu0 %v4333
        %4425 = vmatprep.subr.mxu0 0.0
        %4426 = vmatpush1.msra.mxu0 %v4334
        %4427 = vmatprep.subr.mxu0 0.0
        %4428 = vmatpush1.msra.mxu0 %v4335
        %4429 = vmatprep.subr.mxu0 0.0
        %4430 = vmatpush1.msra.mxu0 %v4336
        %4431 = vmatprep.subr.mxu0 0.0
        %4432 = vmatpush1.msra.mxu0 %v4337
        %4433 = vmatprep.subr.mxu0 0.0
        %4434 = vmatpush1.msra.mxu0 0.0
        %4435 = vmatprep.subr.mxu0 0.0
        %4436 = vmatpush1.msra.mxu0 0.0
        %4437 = vmatprep.subr.mxu0 0.0
        %4438 = vmatpush1.msra.mxu0 0.0
        %4439 = vmatprep.subr.mxu0 0.0
        %4440 = vmatpush1.msra.mxu0 0.0
        %4441 = vmatprep.subr.mxu0 0.0
        %4442 = vmatpush1.msra.mxu0 0.0
        %4443 = vmatprep.subr.mxu0 0.0
        %4444 = vmatpush1.msra.mxu0 0.0
        %4445 = vmatprep.subr.mxu0 0.0
        %4446 = vmatpush1.msra.mxu0 0.0
        %4447 = vmatprep.subr.mxu0 0.0
        %4448 = vmatpush1.msra.mxu0 0.0
        %4449 = vmatprep.subr.mxu0 0.0
        %4450 = vmatpush1.msra.mxu0 0.0
        %4451 = vmatprep.subr.mxu0 0.0
        %4452 = vmatpush1.msra.mxu0 0.0
        %4453 = vmatprep.subr.mxu0 0.0
        %4454 = vmatpush1.msra.mxu0 0.0
        %4455 = vmatprep.subr.mxu0 0.0
        %4456 = vmatpush1.msra.mxu0 0.0
        %4457 = vmatprep.subr.mxu0 0.0
        %4458 = vmatpush1.msra.mxu0 0.0
        %4459 = vmatprep.subr.mxu0 0.0
        %4460 = vmatpush1.msra.mxu0 0.0
        %4461 = vmatprep.subr.mxu0 0.0
        %4462 = vmatpush1.msra.mxu0 0.0
        %4463 = vmatprep.subr.mxu0 0.0
        %4464 = vmatpush1.msra.mxu0 0.0
        %4465 = vmatprep.subr.mxu0 0.0
        %4466 = vmatpush1.msra.mxu0 0.0
        %4467 = vmatprep.subr.mxu0 0.0
        %4468 = vmatpush1.msra.mxu0 0.0
        %4469 = vmatprep.subr.mxu0 0.0
        %4470 = vmatpush1.msra.mxu0 0.0
        %4471 = vmatprep.subr.mxu0 0.0
        %4472 = vmatpush1.msra.mxu0 0.0
        %4473 = vmatprep.subr.mxu0 0.0
        %4474 = vmatpush1.msra.mxu0 0.0
        %4475 = vmatprep.subr.mxu0 0.0
        %4476 = vmatpush1.msra.mxu0 0.0
        %4477 = vmatprep.subr.mxu0 0.0
        %4478 = vmatpush1.msra.mxu0 0.0
        %4479 = vmatprep.subr.mxu0 0.0
        %4480 = vmatpush1.msra.mxu0 0.0
        %4481 = vmatprep.subr.mxu0 0.0
        %4482 = vmatpush1.msra.mxu0 0.0
        %4483 = vmatprep.subr.mxu0 0.0
        %4484 = vmatpush1.msra.mxu0 0.0
        %4485 = vmatprep.mubr.f32.mxu0 0.0
        %4486 = vmatmul.mubr.f32.gmra.mrb[0].mxu0 %v4419
        %v4487 = vpop.f32.mrb[0].mxu0
        %v4488 = vadd.f32 %v4415, %v4487
        %v4489 = vpop.f32.mrb[0].mxu0
        %4490 = vdwg.mxu0
        %s4491 = scalar_lea.vmem %s8, 96
        %v4492 = vld [vmem:[%s4491] sm:$0xff]
        %v4493 = vld [vmem:[%s4491 + $0x8] sm:$0xff]
        %v4494 = vld [vmem:[%s4491 + $0x10] sm:$0xff]
        %v4495 = vld [vmem:[%s4491 + $0x18] sm:$0xff]
        %v4496 = vld [vmem:[%s4491 + $0x20] sm:$0xff]
        %v4497 = vld [vmem:[%s4491 + $0x28] sm:$0xff]
        %v4499 = vsel %vm3816, %v4331, 0
        %4501 = vmatprep.subr.mxu0 0.0
        %4502 = vmatpush1.msra.mxu0 %v4492
        %4503 = vmatprep.subr.mxu0 0.0
        %4504 = vmatpush1.msra.mxu0 %v4493
        %4505 = vmatprep.subr.mxu0 0.0
        %4506 = vmatpush1.msra.mxu0 %v4494
        %4507 = vmatprep.subr.mxu0 0.0
        %4508 = vmatpush1.msra.mxu0 %v4495
        %4509 = vmatprep.subr.mxu0 0.0
        %4510 = vmatpush1.msra.mxu0 %v4496
        %4511 = vmatprep.subr.mxu0 0.0
        %4512 = vmatpush1.msra.mxu0 %v4497
        %4513 = vmatprep.subr.mxu0 0.0
        %4514 = vmatpush1.msra.mxu0 0.0
        %4515 = vmatprep.subr.mxu0 0.0
        %4516 = vmatpush1.msra.mxu0 0.0
        %4517 = vmatprep.subr.mxu0 0.0
        %4518 = vmatpush1.msra.mxu0 0.0
        %4519 = vmatprep.subr.mxu0 0.0
        %4520 = vmatpush1.msra.mxu0 0.0
        %4521 = vmatprep.subr.mxu0 0.0
        %4522 = vmatpush1.msra.mxu0 0.0
        %4523 = vmatprep.subr.mxu0 0.0
        %4524 = vmatpush1.msra.mxu0 0.0
        %4525 = vmatprep.subr.mxu0 0.0
        %4526 = vmatpush1.msra.mxu0 0.0
        %4527 = vmatprep.subr.mxu0 0.0
        %4528 = vmatpush1.msra.mxu0 0.0
        %4529 = vmatprep.subr.mxu0 0.0
        %4530 = vmatpush1.msra.mxu0 0.0
        %4531 = vmatprep.subr.mxu0 0.0
        %4532 = vmatpush1.msra.mxu0 0.0
        %4533 = vmatprep.subr.mxu0 0.0
        %4534 = vmatpush1.msra.mxu0 0.0
        %4535 = vmatprep.subr.mxu0 0.0
        %4536 = vmatpush1.msra.mxu0 0.0
        %4537 = vmatprep.subr.mxu0 0.0
        %4538 = vmatpush1.msra.mxu0 0.0
        %4539 = vmatprep.subr.mxu0 0.0
        %4540 = vmatpush1.msra.mxu0 0.0
        %4541 = vmatprep.subr.mxu0 0.0
        %4542 = vmatpush1.msra.mxu0 0.0
        %4543 = vmatprep.subr.mxu0 0.0
        %4544 = vmatpush1.msra.mxu0 0.0
        %4545 = vmatprep.subr.mxu0 0.0
        %4546 = vmatpush1.msra.mxu0 0.0
        %4547 = vmatprep.subr.mxu0 0.0
        %4548 = vmatpush1.msra.mxu0 0.0
        %4549 = vmatprep.subr.mxu0 0.0
        %4550 = vmatpush1.msra.mxu0 0.0
        %4551 = vmatprep.subr.mxu0 0.0
        %4552 = vmatpush1.msra.mxu0 0.0
        %4553 = vmatprep.subr.mxu0 0.0
        %4554 = vmatpush1.msra.mxu0 0.0
        %4555 = vmatprep.subr.mxu0 0.0
        %4556 = vmatpush1.msra.mxu0 0.0
        %4557 = vmatprep.subr.mxu0 0.0
        %4558 = vmatpush1.msra.mxu0 0.0
        %4559 = vmatprep.subr.mxu0 0.0
        %4560 = vmatpush1.msra.mxu0 0.0
        %4561 = vmatprep.subr.mxu0 0.0
        %4562 = vmatpush1.msra.mxu0 0.0
        %4563 = vmatprep.subr.mxu0 0.0
        %4564 = vmatpush1.msra.mxu0 0.0
        %4565 = vmatprep.mubr.f32.mxu0 0.0
        %4566 = vmatmul.mubr.f32.gmra.mrb[0].mxu0 %v4499
        %v4567 = vpop.f32.mrb[0].mxu0
        %v4568 = vadd.f32 0.0, %v4567
        %v4569 = vpop.f32.mrb[0].mxu0
        %4570 = vdwg.mxu0
        %v4571 = vadd.f32 %v4488, %v4568
        %v4572 = vmax.f32 %v4571, 0.0
        %v4573 = vld [vmem:[%s9] sm:$0xff]
        %v4574 = vld [vmem:[%s9 + $0x8] sm:$0xff]
        %v4575 = vld [vmem:[%s10] sm:$0x1]
        %v4577 = vlaneseq
        %v4578 = vshrl.u32 %v4577, 7
        %v4579 = vsub.s32 0, %v4578
        %v4580 = vrot.slane %v4575, %v4579
        %vm4582 = vcmask 130048
        %v4584 = vsel %vm4582, %v4572, 0
        %4586 = vmatprep.subr.mxu0 0.0
        %4587 = vmatpush1.msra.mxu0 %v4573
        %4588 = vmatprep.subr.mxu0 0.0
        %4589 = vmatpush1.msra.mxu0 %v4574
        %4590 = vmatprep.subr.mxu0 0.0
        %4591 = vmatpush1.msra.mxu0 0.0
        %4592 = vmatprep.subr.mxu0 0.0
        %4593 = vmatpush1.msra.mxu0 0.0
        %4594 = vmatprep.subr.mxu0 0.0
        %4595 = vmatpush1.msra.mxu0 0.0
        %4596 = vmatprep.subr.mxu0 0.0
        %4597 = vmatpush1.msra.mxu0 0.0
        %4598 = vmatprep.subr.mxu0 0.0
        %4599 = vmatpush1.msra.mxu0 0.0
        %4600 = vmatprep.subr.mxu0 0.0
        %4601 = vmatpush1.msra.mxu0 0.0
        %4602 = vmatprep.subr.mxu0 0.0
        %4603 = vmatpush1.msra.mxu0 0.0
        %4604 = vmatprep.subr.mxu0 0.0
        %4605 = vmatpush1.msra.mxu0 0.0
        %4606 = vmatprep.subr.mxu0 0.0
        %4607 = vmatpush1.msra.mxu0 0.0
        %4608 = vmatprep.subr.mxu0 0.0
        %4609 = vmatpush1.msra.mxu0 0.0
        %4610 = vmatprep.subr.mxu0 0.0
        %4611 = vmatpush1.msra.mxu0 0.0
        %4612 = vmatprep.subr.mxu0 0.0
        %4613 = vmatpush1.msra.mxu0 0.0
        %4614 = vmatprep.subr.mxu0 0.0
        %4615 = vmatpush1.msra.mxu0 0.0
        %4616 = vmatprep.subr.mxu0 0.0
        %4617 = vmatpush1.msra.mxu0 0.0
        %4618 = vmatprep.subr.mxu0 0.0
        %4619 = vmatpush1.msra.mxu0 0.0
        %4620 = vmatprep.subr.mxu0 0.0
        %4621 = vmatpush1.msra.mxu0 0.0
        %4622 = vmatprep.subr.mxu0 0.0
        %4623 = vmatpush1.msra.mxu0 0.0
        %4624 = vmatprep.subr.mxu0 0.0
        %4625 = vmatpush1.msra.mxu0 0.0
        %4626 = vmatprep.subr.mxu0 0.0
        %4627 = vmatpush1.msra.mxu0 0.0
        %4628 = vmatprep.subr.mxu0 0.0
        %4629 = vmatpush1.msra.mxu0 0.0
        %4630 = vmatprep.subr.mxu0 0.0
        %4631 = vmatpush1.msra.mxu0 0.0
        %4632 = vmatprep.subr.mxu0 0.0
        %4633 = vmatpush1.msra.mxu0 0.0
        %4634 = vmatprep.subr.mxu0 0.0
        %4635 = vmatpush1.msra.mxu0 0.0
        %4636 = vmatprep.subr.mxu0 0.0
        %4637 = vmatpush1.msra.mxu0 0.0
        %4638 = vmatprep.subr.mxu0 0.0
        %4639 = vmatpush1.msra.mxu0 0.0
        %4640 = vmatprep.subr.mxu0 0.0
        %4641 = vmatpush1.msra.mxu0 0.0
        %4642 = vmatprep.subr.mxu0 0.0
        %4643 = vmatpush1.msra.mxu0 0.0
        %4644 = vmatprep.subr.mxu0 0.0
        %4645 = vmatpush1.msra.mxu0 0.0
        %4646 = vmatprep.subr.mxu0 0.0
        %4647 = vmatpush1.msra.mxu0 0.0
        %4648 = vmatprep.subr.mxu0 0.0
        %4649 = vmatpush1.msra.mxu0 0.0
        %4650 = vmatprep.mubr.f32.mxu0 0.0
        %4651 = vmatmul.mubr.f32.gmra.mrb[0].mxu0 %v4584
        %v4652 = vpop.f32.mrb[0].mxu0
        %v4653 = vadd.f32 %v4580, %v4652
        %v4654 = vpop.f32.mrb[0].mxu0
        %4655 = vdwg.mxu0
        %v4656 = vmax.f32 %v4653, 0.0
        %vm4657 = vcmask 80896
        %v4658 = vsel %vm4657, %v4656, -inf
        %4659 = vmax.xlane.f32.xlu0 %v4658
        %v4660 = vpop.xlane.xlu0 %4659
        %v4661 = vsub.f32 %v4656, %v4660
        %v4662 = vmul.f32 %v4661, 1.442695
        %v4663 = vpow.pop %v4662
        %v4664 = vsel %vm4657, %v4663, 0.0
        %4665 = vadd.xlane.f32.xlu0 %v4664
        %v4666 = vpop.xlane.xlu0 %4665
        %v4667 = vlog2.pop %v4666
        %v4668 = vmul.f32 %v4667, 0.6931472
        %v4669 = vsub.f32 %v4661, %v4668
        %4670 = vst.msk [vmem:[%s526] sm:$0xff] %vm4657, %v4669
        %s4671 = sand.u32 %s269, 1
        %s4672 = scalar_lea.sflag [#allocation4], %s4671
        %s4673 = sand.u32 %s269, 1
        %s4674 = smul.addr %s4673, 8
        %s4675 = scalar_lea.vmem [#allocation3], %s4674
        // Predicated region
        $region103: #{model_forward.1} parent=97 // pred_check
          %p4676 = pneg %p279
        $region104: #{model_forward.1} parent=97 // pred_check_branch
          %4678 = sbr.rel (%p4676) target = $region106
        $region105: #{model_forward.1} parent=97 // pred_region
          %s4680 = ssub.s32 128, 128
          %4681 = vsyncadd %s4672, %s4680
          %s4682 = smul.addr %s25, 128
          %s4683 = scalar_lea.hbm %s11, %s4682
          %s4685 = sshll.u32 %s4675, 4
          %s4686 = int_to_ptr.vmem [resolvable:$true] %s4685
          %4688 = dma.vmem_to_hbm [thread:$0]  %s4686, 128, %s4683, %s4672
        $region106: #{model_forward.1} parent=97 // pred_fallthru
          _
      $region98: #{model_forward.1} parent=5 // pred_fallthru
        _
      %p4689 = scmp.le.s32.totalorder 2, %s20
      // Predicated region
      $region107: #{model_forward.1} parent=5 // pred_check
        %p4690 = pneg %p4689
      $region108: #{model_forward.1} parent=5 // pred_check_branch
        %4692 = sbr.rel (%p4690) target = $region110
      $region109: #{model_forward.1} parent=5 // pred_region
        %s4693 = ssub.s32 %s20, 2
        // Predicated region
        $region111: #{model_forward.1} parent=109 // pred_check
          %p4694 = pneg %p285
        $region112: #{model_forward.1} parent=109 // pred_check_branch
          %4696 = sbr.rel (%p4694) target = $region114
        $region113: #{model_forward.1} parent=109 // pred_region
          %s4697 = sand.u32 %s270, 1
          %s4698 = scalar_lea.sflag [#allocation4], %s4697
          %s4699 = sand.u32 %s270, 1
          %s4700 = smul.addr %s4699, 8
          %s4701 = scalar_lea.vmem [#allocation3], %s4700
          %4702 = dma.done %s4698, 128
        $region114: #{model_forward.1} parent=109 // pred_fallthru
          _
      $region110: #{model_forward.1} parent=5 // pred_fallthru
        _
    $region6: #{model_forward.1} parent=1 // loop_footer
      %s24 = sadd.s32 1, %s20
    $region7: #{model_forward.1} parent=1 // loop_footer_branch
      %19 = sbr.rel target = $region3
    $region8: #{model_forward.1} parent=1 // loop_exit
      _
    %4703 = vsyncpa [#allocation4], 1
    %s4704 = scalar_lea.sflag [#allocation4], 1
    %4705 = vsyncpa %s4704, 1

</llo_original>
